<compile_context>
chip_gen: v7x
topology: tpu7x:2x2x1
jax: 0.10.0
libtpu: 0.0.40
codegen_flags: <defaults>
</compile_context>

<pallas_src>
import jax
import jax.numpy as jnp
from jax import lax
from jax.experimental import pallas as pl
from jax.experimental.pallas import tpu as pltpu


# ------------------------------- small helpers -------------------------------

def _round_up(x, m):
    return (x + m - 1) // m * m


def _pad_cols(mat, nc):
    k, n = mat.shape
    return mat if n == nc else jnp.pad(mat, ((0, 0), (0, nc - n)))


def _vmem_capacity_bytes():
    try:
        return int(pltpu.get_tpu_info().vmem_capacity_bytes)
    except Exception:
        return 64 << 20                      # conservative fallback (v7x per-core)


_VMEM_CAP = _vmem_capacity_bytes()
# v7x (64 MiB physical VMEM) -> 48 MiB scoped limit; v5e/v6e (128 MiB) -> 96 MiB.
_VMEM_LIMIT = min(_VMEM_CAP * 3 // 4, 96 << 20)
_TILE_BUDGET = _VMEM_LIMIT // 3              # working-set target per pipelined kernel
_COMPILER_PARAMS = pltpu.CompilerParams(
    dimension_semantics=("parallel",), vmem_limit_bytes=_VMEM_LIMIT)


def _pick_row_tile(m, kdim, nc, cap_rows=2048):
    """Row tile sized from the *real* pipeline footprint: 2x bf16 A, 2x bf16 O,
    f32 dot temp, double-buffered bf16 weights (grid-invariant operands are not
    explicitly single-buffered, so budget them at 2x)."""
    per_row = 4 * kdim + 8 * nc              # A(db,bf16) + O(db,bf16) + f32 dot temp
    fixed = 4 * kdim * nc + 64 * nc          # W(db,bf16) + stats / scale / shift rows
    tm = (_TILE_BUDGET - fixed) // per_row
    tm = max(8, min(tm, cap_rows))
    if m > 1024:                             # keep >=2 row blocks for v7x megacore
        tm = min(tm, _round_up(-(-m // 2), 8))
    tm = min(tm, _round_up(m, 8))
    return max(8, tm // 8 * 8)


def _pad_rows(a, m_pad):
    m = a.shape[0]
    return a if m == m_pad else jnp.pad(a, ((0, m_pad - m), (0, 0)))


# ----------------------------- Pallas kernels --------------------------------

def _matmul_stats_kernel(a_ref, w_ref, o_ref, stats_ref):
    """One matmul per row block: store bf16 pre-activation + per-block column
    sum / sum-of-squares (rows 0 and 1 of an (8, nc) stats tile)."""
    y = jnp.dot(a_ref[...], w_ref[...], preferred_element_type=jnp.float32)
    o_ref[...] = y.astype(o_ref.dtype)
    s = jnp.sum(y, axis=0, keepdims=True)
    q = jnp.sum(y * y, axis=0, keepdims=True)
    pad = jnp.zeros((6, s.shape[1]), jnp.float32)
    stats_ref[...] = jnp.concatenate([s, q, pad], axis=0)[None]


def _affine_relu_kernel(x_ref, sc_ref, sh_ref, o_ref):
    """Per-column scale/shift (precomputed BN affine) + ReLU."""
    x = x_ref[...].astype(jnp.float32)
    o_ref[...] = jnp.maximum(x * sc_ref[...] + sh_ref[...], 0.0).astype(o_ref.dtype)


def _matmul_tanh_kernel(a_ref, w_ref, o_ref):
    """Final layer: matmul with tanh fused into the epilogue, bf16 output."""
    y = jnp.dot(a_ref[...], w_ref[...], preferred_element_type=jnp.float32)
    o_ref[...] = jnp.tanh(y).astype(o_ref.dtype)


# ----------------------------- pallas_call wrappers ---------------------------

def _matmul_stats(a, wmat, tm):
    m, kdim = a.shape
    nc = wmat.shape[1]
    n_r = m // tm
    return pl.pallas_call(
        _matmul_stats_kernel,
        out_shape=(jax.ShapeDtypeStruct((m, nc), jnp.bfloat16),
                   jax.ShapeDtypeStruct((n_r, 8, nc), jnp.float32)),
        grid=(n_r,),
        in_specs=[pl.BlockSpec((tm, kdim), lambda r: (r, 0)),
                  pl.BlockSpec((kdim, nc), lambda r: (0, 0))],
        out_specs=(pl.BlockSpec((tm, nc), lambda r: (r, 0)),
                   pl.BlockSpec((1, 8, nc), lambda r: (r, 0, 0))),
        compiler_params=_COMPILER_PARAMS,
    )(a, wmat)


def _affine_relu(pre, scale, shift, tm):
    m, nc = pre.shape
    return pl.pallas_call(
        _affine_relu_kernel,
        out_shape=jax.ShapeDtypeStruct((m, nc), jnp.bfloat16),
        grid=(m // tm,),
        in_specs=[pl.BlockSpec((tm, nc), lambda r: (r, 0)),
                  pl.BlockSpec((1, nc), lambda r: (0, 0)),
                  pl.BlockSpec((1, nc), lambda r: (0, 0))],
        out_specs=pl.BlockSpec((tm, nc), lambda r: (r, 0)),
        compiler_params=_COMPILER_PARAMS,
    )(pre, scale, shift)


def _matmul_tanh(a, wmat, tm):
    m, kdim = a.shape
    nc = wmat.shape[1]
    return pl.pallas_call(
        _matmul_tanh_kernel,
        out_shape=jax.ShapeDtypeStruct((m, nc), jnp.bfloat16),
        grid=(m // tm,),
        in_specs=[pl.BlockSpec((tm, kdim), lambda r: (r, 0)),
                  pl.BlockSpec((kdim, nc), lambda r: (0, 0))],
        out_specs=pl.BlockSpec((tm, nc), lambda r: (r, 0)),
        compiler_params=_COMPILER_PARAMS,
    )(a, wmat)


def _conv_bn_relu_cols(a, wmat, gamma, beta, cout, groups, count, eps=1e-5):
    """a: (M, K) bf16 patches, wmat: (K, nc) bf16 with column layout
    group*cout + co (padded columns beyond groups*cout are zero).
    Returns the post-BN/ReLU activation (M, nc) bf16 (padded cols are garbage-free
    zeros since their scale/shift are zero)."""
    m, kdim = a.shape
    nc = wmat.shape[1]

    tm = _pick_row_tile(m, kdim, nc)
    m_pad = _round_up(m, tm)
    a = _pad_rows(a, m_pad)                  # zero rows: contribute 0 to sums

    pre, stats = _matmul_stats(a, wmat, tm)

    # Tiny per-channel stats finalize in XLA (O(nc) work): sum over row blocks,
    # reduce over column groups sharing a BN channel, compute affine.
    # NOTE: E[x^2]-E[x]^2 in f32 is fine at these activation scales (clamped >=0).
    tot = stats.sum(axis=0)                                   # (8, nc)
    s = tot[0, :groups * cout].reshape(groups, cout).sum(axis=0)
    q = tot[1, :groups * cout].reshape(groups, cout).sum(axis=0)
    inv_n = 1.0 / count
    mean = s * inv_n
    var = jnp.maximum(q * inv_n - mean * mean, 0.0)
    scale = gamma.astype(jnp.float32) * lax.rsqrt(var + eps)
    shift = beta.astype(jnp.float32) - mean * scale
    scale_full = jnp.pad(jnp.tile(scale, groups),
                         (0, nc - groups * cout)).reshape(1, nc)
    shift_full = jnp.pad(jnp.tile(shift, groups),
                         (0, nc - groups * cout)).reshape(1, nc)

    out = _affine_relu(pre, scale_full, shift_full, tm)
    return out[:m]


# ----------------------- ConvTranspose lowering (glue) -----------------------

def _subpixel_patches(x):
    """Shared 3x3 patches for the sub-pixel decomposition of a stride-2, k=4,
    p=1 ConvTranspose.  x: (N, H, W, C) -> (N*H*W, 9*C)."""
    # TODO(synk): im2col is still materialized in HBM; fusing the 3x3 tap gathers
    # into the matmul kernel (shifted-window BlockSpecs) would cut A traffic ~9x.
    n, h, wsp, c = x.shape
    xp = jnp.pad(x, ((0, 0), (1, 1), (1, 1), (0, 0)))
    cols = [xp[:, ph:ph + h, pw:pw + wsp, :] for ph in range(3) for pw in range(3)]
    patches = jnp.stack(cols, axis=3)                    # (N, H, W, 9, C)
    return patches.reshape(n * h * wsp, 9 * c)


def _subpixel_weight_matrix(w, nc_pad):
    """w: (Cin, Cout, 4, 4) PyTorch ConvTranspose2d weight (stride 2, pad 1).
    Returns (9*Cin, nc_pad); column (2r+c)*Cout + co holds the 2x2 sub-kernel for
    output parity (r, c) embedded in the shared 3x3 patch (other taps zero)."""
    cin, cout, k, _ = w.shape
    assert k == 4
    wbig = jnp.zeros((3, 3, cin, 4, cout), w.dtype)
    for r in range(2):
        for c in range(2):
            for dh in range(2):
                for dw in range(2):
                    kh = 3 - 2 * dh - r
                    kw = 3 - 2 * dw - c
                    wbig = wbig.at[r + dh, c + dw, :, 2 * r + c, :].set(
                        w[:, :, kh, kw])
    return _pad_cols(wbig.reshape(9 * cin, 4 * cout), nc_pad)


def _pixel_shuffle(y, n, h, wsp, cout):
    """(N*H*W, 4*Cout) with columns (r, c, co) -> (N, 2H, 2W, Cout)."""
    y = y.reshape(n, h, wsp, 2, 2, cout)
    return y.transpose(0, 1, 3, 2, 4, 5).reshape(n, 2 * h, 2 * wsp, cout)


def conv_t1_bn_relu(x2d, w, gamma, beta):
    """Layer 1: ConvT(k=4, s=1, p=0) on a 1x1 input is a plain matmul."""
    n, zc = x2d.shape
    cin, cout, k, _ = w.shape
    assert cin == zc
    groups = k * k
    nc = _round_up(groups * cout, 128)
    wmat = _pad_cols(w.transpose(0, 2, 3, 1).reshape(cin, groups * cout), nc)
    y = _conv_bn_relu_cols(x2d.astype(jnp.bfloat16), wmat.astype(jnp.bfloat16),
                           gamma, beta, cout, groups, count=float(n * groups))
    return y[:, :groups * cout].reshape(n, k, k, cout)


def conv_t2_bn_relu(x, w, gamma, beta):
    """ConvT(k=4, s=2, p=1) + BatchNorm + ReLU via sub-pixel decomposition."""
    n, h, wsp, _ = x.shape
    cout = w.shape[1]
    nc = _round_up(4 * cout, 128)
    a = _subpixel_patches(x).astype(jnp.bfloat16)
    wmat = _subpixel_weight_matrix(w, nc).astype(jnp.bfloat16)
    y = _conv_bn_relu_cols(a, wmat, gamma, beta, cout, 4,
                           count=float(n * h * wsp * 4))
    return _pixel_shuffle(y[:, :4 * cout], n, h, wsp, cout)


def conv_t2_tanh(x, w):
    """Final ConvT(k=4, s=2, p=1) with tanh fused into the matmul epilogue."""
    n, h, wsp, _ = x.shape
    cout = w.shape[1]
    nc = _round_up(4 * cout, 128)
    a = _subpixel_patches(x).astype(jnp.bfloat16)
    wmat = _subpixel_weight_matrix(w, nc).astype(jnp.bfloat16)
    m, kdim = a.shape
    tm = _pick_row_tile(m, kdim, nc)
    a = _pad_rows(a, _round_up(m, tm))
    y = _matmul_tanh(a, wmat, tm)            # bf16, lane-dense padded columns
    return _pixel_shuffle(y[:m, :4 * cout], n, h, wsp, cout)


# --------------------------------- forward -----------------------------------

def generator_forward(params, z_nchw, labels=None):
    """Matches Generator.forward: NCHW in, NCHW out."""
    n = z_nchw.shape[0]
    x = z_nchw.reshape(n, -1)                          # (N, z_dim), spatial is 1x1
    if labels is not None:
        # TODO(synk): embedding gather + concat stay as XLA glue (N is tiny).
        emb = params["embed"][labels]
        x = jnp.concatenate([x, emb], axis=1)

    x = conv_t1_bn_relu(x, params["w1"], params["g1"], params["b1"])   # (N,4,4,·)
    for i in (2, 3, 4):
        x = conv_t2_bn_relu(x, params[f"w{i}"], params[f"g{i}"], params[f"b{i}"])
    x = conv_t2_tanh(x, params["w5"])                                  # (N,64,64,C)
    return jnp.transpose(x, (0, 3, 1, 2)).astype(jnp.float32)          # -> NCHW


# ----------------------- deterministic parameter init ------------------------

def init_params(key, ngf, z_dim, channels_dim, num_classes, embed_length,
                conditional):
    zc = z_dim + (embed_length if conditional else 0)
    ks = jax.random.split(key, 6)
    chans = [zc, ngf * 8, ngf * 4, ngf * 2, ngf, channels_dim]
    p = {}
    for i in range(5):
        p[f"w{i + 1}"] = 0.05 * jax.random.normal(
            ks[i], (chans[i], chans[i + 1], 4, 4), jnp.float32)
        if i < 4:  # BN params (PyTorch default init: weight=1, bias=0)
            p[f"g{i + 1}"] = jnp.ones((chans[i + 1],), jnp.float32)
            p[f"b{i + 1}"] = jnp.zeros((chans[i + 1],), jnp.float32)
    if conditional:
        p["embed"] = jax.random.normal(
            ks[5], (num_classes, embed_length), jnp.float32)
    return p


# ------------------------------ pure-JAX reference ---------------------------

def _ref_conv_transpose_nchw(x, w, stride, padding):
    k = w.shape[2]
    w_conv = jnp.flip(w, (2, 3)).transpose(1, 0, 2, 3)   # (Cout, Cin, k, k)
    return lax.conv_general_dilated(
        x, w_conv, window_strides=(1, 1),
        padding=[(k - 1 - padding, k - 1 - padding)] * 2,
        lhs_dilation=(stride, stride),
        dimension_numbers=("NCHW", "OIHW", "NCHW"),
        precision=lax.Precision.HIGHEST)


def ref_forward(params, z, labels=None):
    x = z
    if labels is not None:
        emb = params["embed"][labels][:, :, None, None]
        x = jnp.concatenate([x, emb], axis=1)

    def bn(v, g, b):
        mean = v.mean(axis=(0, 2, 3), keepdims=True)
        var = v.var(axis=(0, 2, 3), keepdims=True)
        return ((v - mean) / jnp.sqrt(var + 1e-5)
                * g[None, :, None, None] + b[None, :, None, None])

    strides = (1, 2, 2, 2, 2)
    pads = (0, 1, 1, 1, 1)
    for i in range(4):
        x = _ref_conv_transpose_nchw(x, params[f"w{i + 1}"], strides[i], pads[i])
        x = jax.nn.relu(bn(x, params[f"g{i + 1}"], params[f"b{i + 1}"]))
    x = _ref_conv_transpose_nchw(x, params["w5"], strides[4], pads[4])
    return jnp.tanh(x)


# ------------------------------------ main -----------------------------------

if __name__ == "__main__":
    ngf, z_dim, channels_dim = 4, 8, 3
    conditional, num_classes, embed_length = True, 10, 4
    batch = 2  # output spatial is 64x64 (fixed by the 5-layer architecture)

    key = jax.random.PRNGKey(0)
    kp, kz, kl = jax.random.split(key, 3)
    params = init_params(kp, ngf, z_dim, channels_dim, num_classes,
                         embed_length, conditional)
    z = jax.random.normal(kz, (batch, z_dim, 1, 1), jnp.float32)
    labels = jax.random.randint(kl, (batch,), 0, num_classes)

    fwd = jax.jit(generator_forward)
    out = jax.block_until_ready(fwd(params, z, labels))
    assert out.shape == (batch, channels_dim, 64, 64), out.shape

    ref = jax.block_until_ready(ref_forward(params, z, labels))
    max_err = float(jnp.max(jnp.abs(out - ref)))
    # bf16 MXU inputs, bf16 intermediate activations and bf16 final writeback:
    # typical |err| ~1e-3, worst case ~1e-2.
    assert max_err < 3e-2, f"mismatch vs reference: {max_err}"

    print("KERNEL_OK")
</pallas_src>

<mosaic_0001>
module attributes {stable_mosaic.version = 11 : i64} {
  func.func @_matmul_stats_kernel(%arg0: i32, %arg1: memref<8x12xbf16, #tpu.memory_space<vmem>>, %arg2: memref<12x512xbf16, #tpu.memory_space<vmem>>, %arg3: memref<8x512xbf16, #tpu.memory_space<vmem>>, %arg4: memref<1x8x512xf32, #tpu.memory_space<vmem>>) attributes {dimension_semantics = [#tpu.dimension_semantics<parallel>], iteration_bounds = array<i64: 1>, scalar_prefetch = 0 : i64, scratch_operands = 0 : i64, tpu.core_type = #tpu.core_type<tc>, window_params = [{transform_indices = @transform_0, window_bounds = array<i64: 8, 12>}, {pipeline_mode = #tpu.pipeline_mode<synchronous>, transform_indices = @transform_1, window_bounds = array<i64: 12, 512>}, {transform_indices = @transform_2, window_bounds = array<i64: 8, 512>}, {transform_indices = @transform_3, window_bounds = array<i64: 1, 8, 512>}]} {
    %c0 = arith.constant 0 : index
    %c0_0 = arith.constant 0 : index
    %0 = vector.load %arg1[%c0, %c0_0] : memref<8x12xbf16, #tpu.memory_space<vmem>>, vector<8x12xbf16>
    %c0_1 = arith.constant 0 : index
    %c0_2 = arith.constant 0 : index
    %1 = vector.load %arg2[%c0_1, %c0_2] : memref<12x512xbf16, #tpu.memory_space<vmem>>, vector<12x512xbf16>
    %cst = arith.constant dense<0.000000e+00> : vector<8x512xf32>
    %2 = tpu.matmul %0, %1, %cst {dimension_numbers = #tpu.dot_dimension_numbers<[1], [0], [0], [1], [0, 0, 1, 1], [], []>} : vector<8x12xbf16>, vector<12x512xbf16>, vector<8x512xf32> -> vector<8x512xf32>
    %3 = arith.truncf %2 : vector<8x512xf32> to vector<8x512xbf16>
    %c0_3 = arith.constant 0 : index
    %c0_4 = arith.constant 0 : index
    %4 = vector.load %arg3[%c0_3, %c0_4] : memref<8x512xbf16, #tpu.memory_space<vmem>>, vector<8x512xbf16>
    tpu.vector_store %arg3[%c0_3, %c0_4], %3 {strides = array<i32>} : memref<8x512xbf16, #tpu.memory_space<vmem>>, vector<8x512xbf16>,
    %cst_5 = arith.constant dense<0.000000e+00> : vector<512xf32>
    %5 = vector.multi_reduction <add>, %2, %cst_5 [0] : vector<8x512xf32> to vector<512xf32>
    %6 = vector.shape_cast %5 : vector<512xf32> to vector<1x512xf32>
    %7 = arith.mulf %2, %2 : vector<8x512xf32>
    %cst_6 = arith.constant dense<0.000000e+00> : vector<512xf32>
    %8 = vector.multi_reduction <add>, %7, %cst_6 [0] : vector<8x512xf32> to vector<512xf32>
    %9 = vector.shape_cast %8 : vector<512xf32> to vector<1x512xf32>
    %cst_7 = arith.constant 0.000000e+00 : f32
    %10 = vector.broadcast %cst_7 : f32 to vector<6x512xf32>
    %11 = tpu.concatenate %6, %9, %10 in 0 : vector<1x512xf32>, vector<1x512xf32>, vector<6x512xf32> -> vector<8x512xf32>
    %12 = vector.shape_cast %11 : vector<8x512xf32> to vector<1x8x512xf32>
    %c0_8 = arith.constant 0 : index
    %c0_9 = arith.constant 0 : index
    %c0_10 = arith.constant 0 : index
    %13 = vector.load %arg4[%c0_8, %c0_9, %c0_10] : memref<1x8x512xf32, #tpu.memory_space<vmem>>, vector<1x8x512xf32>
    tpu.vector_store %arg4[%c0_8, %c0_9, %c0_10], %12 {strides = array<i32>} : memref<1x8x512xf32, #tpu.memory_space<vmem>>, vector<1x8x512xf32>,
    return
  }
  func.func @transform_0(%arg0: i32) -> (i32, i32) {
    %c0_i32 = arith.constant 0 : i32
    %c0_i32_0 = arith.constant 0 : i32
    return %arg0, %c0_i32 : i32, i32
  }
  func.func @transform_1(%arg0: i32) -> (i32, i32) {
    %c0_i32 = arith.constant 0 : i32
    %c0_i32_0 = arith.constant 0 : i32
    %c0_i32_1 = arith.constant 0 : i32
    return %c0_i32, %c0_i32_0 : i32, i32
  }
  func.func @transform_2(%arg0: i32) -> (i32, i32) {
    %c0_i32 = arith.constant 0 : i32
    %c0_i32_0 = arith.constant 0 : i32
    return %arg0, %c0_i32 : i32, i32
  }
  func.func @transform_3(%arg0: i32) -> (i32, i32, i32) {
    %c0_i32 = arith.constant 0 : i32
    %c0_i32_0 = arith.constant 0 : i32
    %c0_i32_1 = arith.constant 0 : i32
    return %arg0, %c0_i32, %c0_i32_0 : i32, i32, i32
  }
}

module attributes {stable_mosaic.version = 11 : i64} {
  func.func @_affine_relu_kernel(%arg0: i32, %arg1: memref<8x512xbf16, #tpu.memory_space<vmem>>, %arg2: memref<1x512xf32, #tpu.memory_space<vmem>>, %arg3: memref<1x512xf32, #tpu.memory_space<vmem>>, %arg4: memref<8x512xbf16, #tpu.memory_space<vmem>>) attributes {dimension_semantics = [#tpu.dimension_semantics<parallel>], iteration_bounds = array<i64: 1>, scalar_prefetch = 0 : i64, scratch_operands = 0 : i64, tpu.core_type = #tpu.core_type<tc>, window_params = [{transform_indices = @transform_0, window_bounds = array<i64: 8, 512>}, {pipeline_mode = #tpu.pipeline_mode<synchronous>, transform_indices = @transform_1, window_bounds = array<i64: 1, 512>}, {pipeline_mode = #tpu.pipeline_mode<synchronous>, transform_indices = @transform_2, window_bounds = array<i64: 1, 512>}, {transform_indices = @transform_3, window_bounds = array<i64: 8, 512>}]} {
    %c0 = arith.constant 0 : index
    %c0_0 = arith.constant 0 : index
    %0 = vector.load %arg1[%c0, %c0_0] : memref<8x512xbf16, #tpu.memory_space<vmem>>, vector<8x512xbf16>
    %1 = arith.extf %0 : vector<8x512xbf16> to vector<8x512xf32>
    %c0_1 = arith.constant 0 : index
    %c0_2 = arith.constant 0 : index
    %2 = vector.load %arg2[%c0_1, %c0_2] : memref<1x512xf32, #tpu.memory_space<vmem>>, vector<1x512xf32>
    %3 = vector.broadcast %2 : vector<1x512xf32> to vector<8x512xf32>
    %4 = arith.mulf %1, %3 : vector<8x512xf32>
    %c0_3 = arith.constant 0 : index
    %c0_4 = arith.constant 0 : index
    %5 = vector.load %arg3[%c0_3, %c0_4] : memref<1x512xf32, #tpu.memory_space<vmem>>, vector<1x512xf32>
    %6 = vector.broadcast %5 : vector<1x512xf32> to vector<8x512xf32>
    %7 = arith.addf %4, %6 : vector<8x512xf32>
    %cst = arith.constant 0.000000e+00 : f32
    %8 = vector.broadcast %cst : f32 to vector<8x512xf32>
    %9 = arith.maximumf %7, %8 : vector<8x512xf32>
    %10 = arith.truncf %9 : vector<8x512xf32> to vector<8x512xbf16>
    %c0_5 = arith.constant 0 : index
    %c0_6 = arith.constant 0 : index
    %11 = vector.load %arg4[%c0_5, %c0_6] : memref<8x512xbf16, #tpu.memory_space<vmem>>, vector<8x512xbf16>
    tpu.vector_store %arg4[%c0_5, %c0_6], %10 {strides = array<i32>} : memref<8x512xbf16, #tpu.memory_space<vmem>>, vector<8x512xbf16>,
    return
  }
  func.func @transform_0(%arg0: i32) -> (i32, i32) {
    %c0_i32 = arith.constant 0 : i32
    %c0_i32_0 = arith.constant 0 : i32
    return %arg0, %c0_i32 : i32, i32
  }
  func.func @transform_1(%arg0: i32) -> (i32, i32) {
    %c0_i32 = arith.constant 0 : i32
    %c0_i32_0 = arith.constant 0 : i32
    %c0_i32_1 = arith.constant 0 : i32
    return %c0_i32, %c0_i32_0 : i32, i32
  }
  func.func @transform_2(%arg0: i32) -> (i32, i32) {
    %c0_i32 = arith.constant 0 : i32
    %c0_i32_0 = arith.constant 0 : i32
    %c0_i32_1 = arith.constant 0 : i32
    return %c0_i32, %c0_i32_0 : i32, i32
  }
  func.func @transform_3(%arg0: i32) -> (i32, i32) {
    %c0_i32 = arith.constant 0 : i32
    %c0_i32_0 = arith.constant 0 : i32
    return %arg0, %c0_i32 : i32, i32
  }
}

module attributes {stable_mosaic.version = 11 : i64} {
  func.func @_matmul_stats_kernel(%arg0: i32, %arg1: memref<32x288xbf16, #tpu.memory_space<vmem>>, %arg2: memref<288x128xbf16, #tpu.memory_space<vmem>>, %arg3: memref<32x128xbf16, #tpu.memory_space<vmem>>, %arg4: memref<1x8x128xf32, #tpu.memory_space<vmem>>) attributes {dimension_semantics = [#tpu.dimension_semantics<parallel>], iteration_bounds = array<i64: 1>, scalar_prefetch = 0 : i64, scratch_operands = 0 : i64, tpu.core_type = #tpu.core_type<tc>, window_params = [{transform_indices = @transform_0, window_bounds = array<i64: 32, 288>}, {pipeline_mode = #tpu.pipeline_mode<synchronous>, transform_indices = @transform_1, window_bounds = array<i64: 288, 128>}, {transform_indices = @transform_2, window_bounds = array<i64: 32, 128>}, {transform_indices = @transform_3, window_bounds = array<i64: 1, 8, 128>}]} {
    %c0 = arith.constant 0 : index
    %c0_0 = arith.constant 0 : index
    %0 = vector.load %arg1[%c0, %c0_0] : memref<32x288xbf16, #tpu.memory_space<vmem>>, vector<32x288xbf16>
    %c0_1 = arith.constant 0 : index
    %c0_2 = arith.constant 0 : index
    %1 = vector.load %arg2[%c0_1, %c0_2] : memref<288x128xbf16, #tpu.memory_space<vmem>>, vector<288x128xbf16>
    %cst = arith.constant dense<0.000000e+00> : vector<32x128xf32>
    %2 = tpu.matmul %0, %1, %cst {dimension_numbers = #tpu.dot_dimension_numbers<[1], [0], [0], [1], [0, 0, 1, 1], [], []>} : vector<32x288xbf16>, vector<288x128xbf16>, vector<32x128xf32> -> vector<32x128xf32>
    %3 = arith.truncf %2 : vector<32x128xf32> to vector<32x128xbf16>
    %c0_3 = arith.constant 0 : index
    %c0_4 = arith.constant 0 : index
    %4 = vector.load %arg3[%c0_3, %c0_4] : memref<32x128xbf16, #tpu.memory_space<vmem>>, vector<32x128xbf16>
    tpu.vector_store %arg3[%c0_3, %c0_4], %3 {strides = array<i32>} : memref<32x128xbf16, #tpu.memory_space<vmem>>, vector<32x128xbf16>,
    %cst_5 = arith.constant dense<0.000000e+00> : vector<128xf32>
    %5 = vector.multi_reduction <add>, %2, %cst_5 [0] : vector<32x128xf32> to vector<128xf32>
    %6 = vector.shape_cast %5 : vector<128xf32> to vector<1x128xf32>
    %7 = arith.mulf %2, %2 : vector<32x128xf32>
    %cst_6 = arith.constant dense<0.000000e+00> : vector<128xf32>
    %8 = vector.multi_reduction <add>, %7, %cst_6 [0] : vector<32x128xf32> to vector<128xf32>
    %9 = vector.shape_cast %8 : vector<128xf32> to vector<1x128xf32>
    %cst_7 = arith.constant 0.000000e+00 : f32
    %10 = vector.broadcast %cst_7 : f32 to vector<6x128xf32>
    %11 = tpu.concatenate %6, %9, %10 in 0 : vector<1x128xf32>, vector<1x128xf32>, vector<6x128xf32> -> vector<8x128xf32>
    %12 = vector.shape_cast %11 : vector<8x128xf32> to vector<1x8x128xf32>
    %c0_8 = arith.constant 0 : index
    %c0_9 = arith.constant 0 : index
    %c0_10 = arith.constant 0 : index
    %13 = vector.load %arg4[%c0_8, %c0_9, %c0_10] : memref<1x8x128xf32, #tpu.memory_space<vmem>>, vector<1x8x128xf32>
    tpu.vector_store %arg4[%c0_8, %c0_9, %c0_10], %12 {strides = array<i32>} : memref<1x8x128xf32, #tpu.memory_space<vmem>>, vector<1x8x128xf32>,
    return
  }
  func.func @transform_0(%arg0: i32) -> (i32, i32) {
    %c0_i32 = arith.constant 0 : i32
    %c0_i32_0 = arith.constant 0 : i32
    return %arg0, %c0_i32 : i32, i32
  }
  func.func @transform_1(%arg0: i32) -> (i32, i32) {
    %c0_i32 = arith.constant 0 : i32
    %c0_i32_0 = arith.constant 0 : i32
    %c0_i32_1 = arith.constant 0 : i32
    return %c0_i32, %c0_i32_0 : i32, i32
  }
  func.func @transform_2(%arg0: i32) -> (i32, i32) {
    %c0_i32 = arith.constant 0 : i32
    %c0_i32_0 = arith.constant 0 : i32
    return %arg0, %c0_i32 : i32, i32
  }
  func.func @transform_3(%arg0: i32) -> (i32, i32, i32) {
    %c0_i32 = arith.constant 0 : i32
    %c0_i32_0 = arith.constant 0 : i32
    %c0_i32_1 = arith.constant 0 : i32
    return %arg0, %c0_i32, %c0_i32_0 : i32, i32, i32
  }
}

module attributes {stable_mosaic.version = 11 : i64} {
  func.func @_affine_relu_kernel(%arg0: i32, %arg1: memref<32x128xbf16, #tpu.memory_space<vmem>>, %arg2: memref<1x128xf32, #tpu.memory_space<vmem>>, %arg3: memref<1x128xf32, #tpu.memory_space<vmem>>, %arg4: memref<32x128xbf16, #tpu.memory_space<vmem>>) attributes {dimension_semantics = [#tpu.dimension_semantics<parallel>], iteration_bounds = array<i64: 1>, scalar_prefetch = 0 : i64, scratch_operands = 0 : i64, tpu.core_type = #tpu.core_type<tc>, window_params = [{transform_indices = @transform_0, window_bounds = array<i64: 32, 128>}, {pipeline_mode = #tpu.pipeline_mode<synchronous>, transform_indices = @transform_1, window_bounds = array<i64: 1, 128>}, {pipeline_mode = #tpu.pipeline_mode<synchronous>, transform_indices = @transform_2, window_bounds = array<i64: 1, 128>}, {transform_indices = @transform_3, window_bounds = array<i64: 32, 128>}]} {
    %c0 = arith.constant 0 : index
    %c0_0 = arith.constant 0 : index
    %0 = vector.load %arg1[%c0, %c0_0] : memref<32x128xbf16, #tpu.memory_space<vmem>>, vector<32x128xbf16>
    %1 = arith.extf %0 : vector<32x128xbf16> to vector<32x128xf32>
    %c0_1 = arith.constant 0 : index
    %c0_2 = arith.constant 0 : index
    %2 = vector.load %arg2[%c0_1, %c0_2] : memref<1x128xf32, #tpu.memory_space<vmem>>, vector<1x128xf32>
    %3 = vector.broadcast %2 : vector<1x128xf32> to vector<32x128xf32>
    %4 = arith.mulf %1, %3 : vector<32x128xf32>
    %c0_3 = arith.constant 0 : index
    %c0_4 = arith.constant 0 : index
    %5 = vector.load %arg3[%c0_3, %c0_4] : memref<1x128xf32, #tpu.memory_space<vmem>>, vector<1x128xf32>
    %6 = vector.broadcast %5 : vector<1x128xf32> to vector<32x128xf32>
    %7 = arith.addf %4, %6 : vector<32x128xf32>
    %cst = arith.constant 0.000000e+00 : f32
    %8 = vector.broadcast %cst : f32 to vector<32x128xf32>
    %9 = arith.maximumf %7, %8 : vector<32x128xf32>
    %10 = arith.truncf %9 : vector<32x128xf32> to vector<32x128xbf16>
    %c0_5 = arith.constant 0 : index
    %c0_6 = arith.constant 0 : index
    %11 = vector.load %arg4[%c0_5, %c0_6] : memref<32x128xbf16, #tpu.memory_space<vmem>>, vector<32x128xbf16>
    tpu.vector_store %arg4[%c0_5, %c0_6], %10 {strides = array<i32>} : memref<32x128xbf16, #tpu.memory_space<vmem>>, vector<32x128xbf16>,
    return
  }
  func.func @transform_0(%arg0: i32) -> (i32, i32) {
    %c0_i32 = arith.constant 0 : i32
    %c0_i32_0 = arith.constant 0 : i32
    return %arg0, %c0_i32 : i32, i32
  }
  func.func @transform_1(%arg0: i32) -> (i32, i32) {
    %c0_i32 = arith.constant 0 : i32
    %c0_i32_0 = arith.constant 0 : i32
    %c0_i32_1 = arith.constant 0 : i32
    return %c0_i32, %c0_i32_0 : i32, i32
  }
  func.func @transform_2(%arg0: i32) -> (i32, i32) {
    %c0_i32 = arith.constant 0 : i32
    %c0_i32_0 = arith.constant 0 : i32
    %c0_i32_1 = arith.constant 0 : i32
    return %c0_i32, %c0_i32_0 : i32, i32
  }
  func.func @transform_3(%arg0: i32) -> (i32, i32) {
    %c0_i32 = arith.constant 0 : i32
    %c0_i32_0 = arith.constant 0 : i32
    return %arg0, %c0_i32 : i32, i32
  }
}

module attributes {stable_mosaic.version = 11 : i64} {
  func.func @_affine_relu_kernel(%arg0: i32, %arg1: memref<128x128xbf16, #tpu.memory_space<vmem>>, %arg2: memref<1x128xf32, #tpu.memory_space<vmem>>, %arg3: memref<1x128xf32, #tpu.memory_space<vmem>>, %arg4: memref<128x128xbf16, #tpu.memory_space<vmem>>) attributes {dimension_semantics = [#tpu.dimension_semantics<parallel>], iteration_bounds = array<i64: 1>, scalar_prefetch = 0 : i64, scratch_operands = 0 : i64, tpu.core_type = #tpu.core_type<tc>, window_params = [{transform_indices = @transform_0, window_bounds = array<i64: 128, 128>}, {pipeline_mode = #tpu.pipeline_mode<synchronous>, transform_indices = @transform_1, window_bounds = array<i64: 1, 128>}, {pipeline_mode = #tpu.pipeline_mode<synchronous>, transform_indices = @transform_2, window_bounds = array<i64: 1, 128>}, {transform_indices = @transform_3, window_bounds = array<i64: 128, 128>}]} {
    %c0 = arith.constant 0 : index
    %c0_0 = arith.constant 0 : index
    %0 = vector.load %arg1[%c0, %c0_0] : memref<128x128xbf16, #tpu.memory_space<vmem>>, vector<128x128xbf16>
    %1 = arith.extf %0 : vector<128x128xbf16> to vector<128x128xf32>
    %c0_1 = arith.constant 0 : index
    %c0_2 = arith.constant 0 : index
    %2 = vector.load %arg2[%c0_1, %c0_2] : memref<1x128xf32, #tpu.memory_space<vmem>>, vector<1x128xf32>
    %3 = vector.broadcast %2 : vector<1x128xf32> to vector<128x128xf32>
    %4 = arith.mulf %1, %3 : vector<128x128xf32>
    %c0_3 = arith.constant 0 : index
    %c0_4 = arith.constant 0 : index
    %5 = vector.load %arg3[%c0_3, %c0_4] : memref<1x128xf32, #tpu.memory_space<vmem>>, vector<1x128xf32>
    %6 = vector.broadcast %5 : vector<1x128xf32> to vector<128x128xf32>
    %7 = arith.addf %4, %6 : vector<128x128xf32>
    %cst = arith.constant 0.000000e+00 : f32
    %8 = vector.broadcast %cst : f32 to vector<128x128xf32>
    %9 = arith.maximumf %7, %8 : vector<128x128xf32>
    %10 = arith.truncf %9 : vector<128x128xf32> to vector<128x128xbf16>
    %c0_5 = arith.constant 0 : index
    %c0_6 = arith.constant 0 : index
    %11 = vector.load %arg4[%c0_5, %c0_6] : memref<128x128xbf16, #tpu.memory_space<vmem>>, vector<128x128xbf16>
    tpu.vector_store %arg4[%c0_5, %c0_6], %10 {strides = array<i32>} : memref<128x128xbf16, #tpu.memory_space<vmem>>, vector<128x128xbf16>,
    return
  }
  func.func @transform_0(%arg0: i32) -> (i32, i32) {
    %c0_i32 = arith.constant 0 : i32
    %c0_i32_0 = arith.constant 0 : i32
    return %arg0, %c0_i32 : i32, i32
  }
  func.func @transform_1(%arg0: i32) -> (i32, i32) {
    %c0_i32 = arith.constant 0 : i32
    %c0_i32_0 = arith.constant 0 : i32
    %c0_i32_1 = arith.constant 0 : i32
    return %c0_i32, %c0_i32_0 : i32, i32
  }
  func.func @transform_2(%arg0: i32) -> (i32, i32) {
    %c0_i32 = arith.constant 0 : i32
    %c0_i32_0 = arith.constant 0 : i32
    %c0_i32_1 = arith.constant 0 : i32
    return %c0_i32, %c0_i32_0 : i32, i32
  }
  func.func @transform_3(%arg0: i32) -> (i32, i32) {
    %c0_i32 = arith.constant 0 : i32
    %c0_i32_0 = arith.constant 0 : i32
    return %arg0, %c0_i32 : i32, i32
  }
}

module attributes {stable_mosaic.version = 11 : i64} {
  func.func @_matmul_stats_kernel(%arg0: i32, %arg1: memref<128x144xbf16, #tpu.memory_space<vmem>>, %arg2: memref<144x128xbf16, #tpu.memory_space<vmem>>, %arg3: memref<128x128xbf16, #tpu.memory_space<vmem>>, %arg4: memref<1x8x128xf32, #tpu.memory_space<vmem>>) attributes {dimension_semantics = [#tpu.dimension_semantics<parallel>], iteration_bounds = array<i64: 1>, scalar_prefetch = 0 : i64, scratch_operands = 0 : i64, tpu.core_type = #tpu.core_type<tc>, window_params = [{transform_indices = @transform_0, window_bounds = array<i64: 128, 144>}, {pipeline_mode = #tpu.pipeline_mode<synchronous>, transform_indices = @transform_1, window_bounds = array<i64: 144, 128>}, {transform_indices = @transform_2, window_bounds = array<i64: 128, 128>}, {transform_indices = @transform_3, window_bounds = array<i64: 1, 8, 128>}]} {
    %c0 = arith.constant 0 : index
    %c0_0 = arith.constant 0 : index
    %0 = vector.load %arg1[%c0, %c0_0] : memref<128x144xbf16, #tpu.memory_space<vmem>>, vector<128x144xbf16>
    %c0_1 = arith.constant 0 : index
    %c0_2 = arith.constant 0 : index
    %1 = vector.load %arg2[%c0_1, %c0_2] : memref<144x128xbf16, #tpu.memory_space<vmem>>, vector<144x128xbf16>
    %cst = arith.constant dense<0.000000e+00> : vector<128x128xf32>
    %2 = tpu.matmul %0, %1, %cst {dimension_numbers = #tpu.dot_dimension_numbers<[1], [0], [0], [1], [0, 0, 1, 1], [], []>} : vector<128x144xbf16>, vector<144x128xbf16>, vector<128x128xf32> -> vector<128x128xf32>
    %3 = arith.truncf %2 : vector<128x128xf32> to vector<128x128xbf16>
    %c0_3 = arith.constant 0 : index
    %c0_4 = arith.constant 0 : index
    %4 = vector.load %arg3[%c0_3, %c0_4] : memref<128x128xbf16, #tpu.memory_space<vmem>>, vector<128x128xbf16>
    tpu.vector_store %arg3[%c0_3, %c0_4], %3 {strides = array<i32>} : memref<128x128xbf16, #tpu.memory_space<vmem>>, vector<128x128xbf16>,
    %cst_5 = arith.constant dense<0.000000e+00> : vector<128xf32>
    %5 = vector.multi_reduction <add>, %2, %cst_5 [0] : vector<128x128xf32> to vector<128xf32>
    %6 = vector.shape_cast %5 : vector<128xf32> to vector<1x128xf32>
    %7 = arith.mulf %2, %2 : vector<128x128xf32>
    %cst_6 = arith.constant dense<0.000000e+00> : vector<128xf32>
    %8 = vector.multi_reduction <add>, %7, %cst_6 [0] : vector<128x128xf32> to vector<128xf32>
    %9 = vector.shape_cast %8 : vector<128xf32> to vector<1x128xf32>
    %cst_7 = arith.constant 0.000000e+00 : f32
    %10 = vector.broadcast %cst_7 : f32 to vector<6x128xf32>
    %11 = tpu.concatenate %6, %9, %10 in 0 : vector<1x128xf32>, vector<1x128xf32>, vector<6x128xf32> -> vector<8x128xf32>
    %12 = vector.shape_cast %11 : vector<8x128xf32> to vector<1x8x128xf32>
    %c0_8 = arith.constant 0 : index
    %c0_9 = arith.constant 0 : index
    %c0_10 = arith.constant 0 : index
    %13 = vector.load %arg4[%c0_8, %c0_9, %c0_10] : memref<1x8x128xf32, #tpu.memory_space<vmem>>, vector<1x8x128xf32>
    tpu.vector_store %arg4[%c0_8, %c0_9, %c0_10], %12 {strides = array<i32>} : memref<1x8x128xf32, #tpu.memory_space<vmem>>, vector<1x8x128xf32>,
    return
  }
  func.func @transform_0(%arg0: i32) -> (i32, i32) {
    %c0_i32 = arith.constant 0 : i32
    %c0_i32_0 = arith.constant 0 : i32
    return %arg0, %c0_i32 : i32, i32
  }
  func.func @transform_1(%arg0: i32) -> (i32, i32) {
    %c0_i32 = arith.constant 0 : i32
    %c0_i32_0 = arith.constant 0 : i32
    %c0_i32_1 = arith.constant 0 : i32
    return %c0_i32, %c0_i32_0 : i32, i32
  }
  func.func @transform_2(%arg0: i32) -> (i32, i32) {
    %c0_i32 = arith.constant 0 : i32
    %c0_i32_0 = arith.constant 0 : i32
    return %arg0, %c0_i32 : i32, i32
  }
  func.func @transform_3(%arg0: i32) -> (i32, i32, i32) {
    %c0_i32 = arith.constant 0 : i32
    %c0_i32_0 = arith.constant 0 : i32
    %c0_i32_1 = arith.constant 0 : i32
    return %arg0, %c0_i32, %c0_i32_0 : i32, i32, i32
  }
}

module attributes {stable_mosaic.version = 11 : i64} {
  func.func @_affine_relu_kernel(%arg0: i32, %arg1: memref<512x128xbf16, #tpu.memory_space<vmem>>, %arg2: memref<1x128xf32, #tpu.memory_space<vmem>>, %arg3: memref<1x128xf32, #tpu.memory_space<vmem>>, %arg4: memref<512x128xbf16, #tpu.memory_space<vmem>>) attributes {dimension_semantics = [#tpu.dimension_semantics<parallel>], iteration_bounds = array<i64: 1>, scalar_prefetch = 0 : i64, scratch_operands = 0 : i64, tpu.core_type = #tpu.core_type<tc>, window_params = [{transform_indices = @transform_0, window_bounds = array<i64: 512, 128>}, {pipeline_mode = #tpu.pipeline_mode<synchronous>, transform_indices = @transform_1, window_bounds = array<i64: 1, 128>}, {pipeline_mode = #tpu.pipeline_mode<synchronous>, transform_indices = @transform_2, window_bounds = array<i64: 1, 128>}, {transform_indices = @transform_3, window_bounds = array<i64: 512, 128>}]} {
    %c0 = arith.constant 0 : index
    %c0_0 = arith.constant 0 : index
    %0 = vector.load %arg1[%c0, %c0_0] : memref<512x128xbf16, #tpu.memory_space<vmem>>, vector<512x128xbf16>
    %1 = arith.extf %0 : vector<512x128xbf16> to vector<512x128xf32>
    %c0_1 = arith.constant 0 : index
    %c0_2 = arith.constant 0 : index
    %2 = vector.load %arg2[%c0_1, %c0_2] : memref<1x128xf32, #tpu.memory_space<vmem>>, vector<1x128xf32>
    %3 = vector.broadcast %2 : vector<1x128xf32> to vector<512x128xf32>
    %4 = arith.mulf %1, %3 : vector<512x128xf32>
    %c0_3 = arith.constant 0 : index
    %c0_4 = arith.constant 0 : index
    %5 = vector.load %arg3[%c0_3, %c0_4] : memref<1x128xf32, #tpu.memory_space<vmem>>, vector<1x128xf32>
    %6 = vector.broadcast %5 : vector<1x128xf32> to vector<512x128xf32>
    %7 = arith.addf %4, %6 : vector<512x128xf32>
    %cst = arith.constant 0.000000e+00 : f32
    %8 = vector.broadcast %cst : f32 to vector<512x128xf32>
    %9 = arith.maximumf %7, %8 : vector<512x128xf32>
    %10 = arith.truncf %9 : vector<512x128xf32> to vector<512x128xbf16>
    %c0_5 = arith.constant 0 : index
    %c0_6 = arith.constant 0 : index
    %11 = vector.load %arg4[%c0_5, %c0_6] : memref<512x128xbf16, #tpu.memory_space<vmem>>, vector<512x128xbf16>
    tpu.vector_store %arg4[%c0_5, %c0_6], %10 {strides = array<i32>} : memref<512x128xbf16, #tpu.memory_space<vmem>>, vector<512x128xbf16>,
    return
  }
  func.func @transform_0(%arg0: i32) -> (i32, i32) {
    %c0_i32 = arith.constant 0 : i32
    %c0_i32_0 = arith.constant 0 : i32
    return %arg0, %c0_i32 : i32, i32
  }
  func.func @transform_1(%arg0: i32) -> (i32, i32) {
    %c0_i32 = arith.constant 0 : i32
    %c0_i32_0 = arith.constant 0 : i32
    %c0_i32_1 = arith.constant 0 : i32
    return %c0_i32, %c0_i32_0 : i32, i32
  }
  func.func @transform_2(%arg0: i32) -> (i32, i32) {
    %c0_i32 = arith.constant 0 : i32
    %c0_i32_0 = arith.constant 0 : i32
    %c0_i32_1 = arith.constant 0 : i32
    return %c0_i32, %c0_i32_0 : i32, i32
  }
  func.func @transform_3(%arg0: i32) -> (i32, i32) {
    %c0_i32 = arith.constant 0 : i32
    %c0_i32_0 = arith.constant 0 : i32
    return %arg0, %c0_i32 : i32, i32
  }
}

module attributes {stable_mosaic.version = 11 : i64} {
  func.func @_matmul_stats_kernel(%arg0: i32, %arg1: memref<512x72xbf16, #tpu.memory_space<vmem>>, %arg2: memref<72x128xbf16, #tpu.memory_space<vmem>>, %arg3: memref<512x128xbf16, #tpu.memory_space<vmem>>, %arg4: memref<1x8x128xf32, #tpu.memory_space<vmem>>) attributes {dimension_semantics = [#tpu.dimension_semantics<parallel>], iteration_bounds = array<i64: 1>, scalar_prefetch = 0 : i64, scratch_operands = 0 : i64, tpu.core_type = #tpu.core_type<tc>, window_params = [{transform_indices = @transform_0, window_bounds = array<i64: 512, 72>}, {pipeline_mode = #tpu.pipeline_mode<synchronous>, transform_indices = @transform_1, window_bounds = array<i64: 72, 128>}, {transform_indices = @transform_2, window_bounds = array<i64: 512, 128>}, {transform_indices = @transform_3, window_bounds = array<i64: 1, 8, 128>}]} {
    %c0 = arith.constant 0 : index
    %c0_0 = arith.constant 0 : index
    %0 = vector.load %arg1[%c0, %c0_0] : memref<512x72xbf16, #tpu.memory_space<vmem>>, vector<512x72xbf16>
    %c0_1 = arith.constant 0 : index
    %c0_2 = arith.constant 0 : index
    %1 = vector.load %arg2[%c0_1, %c0_2] : memref<72x128xbf16, #tpu.memory_space<vmem>>, vector<72x128xbf16>
    %cst = arith.constant dense<0.000000e+00> : vector<512x128xf32>
    %2 = tpu.matmul %0, %1, %cst {dimension_numbers = #tpu.dot_dimension_numbers<[1], [0], [0], [1], [0, 0, 1, 1], [], []>} : vector<512x72xbf16>, vector<72x128xbf16>, vector<512x128xf32> -> vector<512x128xf32>
    %3 = arith.truncf %2 : vector<512x128xf32> to vector<512x128xbf16>
    %c0_3 = arith.constant 0 : index
    %c0_4 = arith.constant 0 : index
    %4 = vector.load %arg3[%c0_3, %c0_4] : memref<512x128xbf16, #tpu.memory_space<vmem>>, vector<512x128xbf16>
    tpu.vector_store %arg3[%c0_3, %c0_4], %3 {strides = array<i32>} : memref<512x128xbf16, #tpu.memory_space<vmem>>, vector<512x128xbf16>,
    %cst_5 = arith.constant dense<0.000000e+00> : vector<128xf32>
    %5 = vector.multi_reduction <add>, %2, %cst_5 [0] : vector<512x128xf32> to vector<128xf32>
    %6 = vector.shape_cast %5 : vector<128xf32> to vector<1x128xf32>
    %7 = arith.mulf %2, %2 : vector<512x128xf32>
    %cst_6 = arith.constant dense<0.000000e+00> : vector<128xf32>
    %8 = vector.multi_reduction <add>, %7, %cst_6 [0] : vector<512x128xf32> to vector<128xf32>
    %9 = vector.shape_cast %8 : vector<128xf32> to vector<1x128xf32>
    %cst_7 = arith.constant 0.000000e+00 : f32
    %10 = vector.broadcast %cst_7 : f32 to vector<6x128xf32>
    %11 = tpu.concatenate %6, %9, %10 in 0 : vector<1x128xf32>, vector<1x128xf32>, vector<6x128xf32> -> vector<8x128xf32>
    %12 = vector.shape_cast %11 : vector<8x128xf32> to vector<1x8x128xf32>
    %c0_8 = arith.constant 0 : index
    %c0_9 = arith.constant 0 : index
    %c0_10 = arith.constant 0 : index
    %13 = vector.load %arg4[%c0_8, %c0_9, %c0_10] : memref<1x8x128xf32, #tpu.memory_space<vmem>>, vector<1x8x128xf32>
    tpu.vector_store %arg4[%c0_8, %c0_9, %c0_10], %12 {strides = array<i32>} : memref<1x8x128xf32, #tpu.memory_space<vmem>>, vector<1x8x128xf32>,
    return
  }
  func.func @transform_0(%arg0: i32) -> (i32, i32) {
    %c0_i32 = arith.constant 0 : i32
    %c0_i32_0 = arith.constant 0 : i32
    return %arg0, %c0_i32 : i32, i32
  }
  func.func @transform_1(%arg0: i32) -> (i32, i32) {
    %c0_i32 = arith.constant 0 : i32
    %c0_i32_0 = arith.constant 0 : i32
    %c0_i32_1 = arith.constant 0 : i32
    return %c0_i32, %c0_i32_0 : i32, i32
  }
  func.func @transform_2(%arg0: i32) -> (i32, i32) {
    %c0_i32 = arith.constant 0 : i32
    %c0_i32_0 = arith.constant 0 : i32
    return %arg0, %c0_i32 : i32, i32
  }
  func.func @transform_3(%arg0: i32) -> (i32, i32, i32) {
    %c0_i32 = arith.constant 0 : i32
    %c0_i32_0 = arith.constant 0 : i32
    %c0_i32_1 = arith.constant 0 : i32
    return %arg0, %c0_i32, %c0_i32_0 : i32, i32, i32
  }
}

module attributes {stable_mosaic.version = 11 : i64} {
  func.func @_matmul_tanh_kernel(%arg0: i32, %arg1: memref<1024x36xbf16, #tpu.memory_space<vmem>>, %arg2: memref<36x128xbf16, #tpu.memory_space<vmem>>, %arg3: memref<1024x128xbf16, #tpu.memory_space<vmem>>) attributes {dimension_semantics = [#tpu.dimension_semantics<parallel>], iteration_bounds = array<i64: 2>, scalar_prefetch = 0 : i64, scratch_operands = 0 : i64, tpu.core_type = #tpu.core_type<tc>, window_params = [{transform_indices = @transform_0, window_bounds = array<i64: 1024, 36>}, {pipeline_mode = #tpu.pipeline_mode<synchronous>, transform_indices = @transform_1, window_bounds = array<i64: 36, 128>}, {transform_indices = @transform_2, window_bounds = array<i64: 1024, 128>}]} {
    %c0 = arith.constant 0 : index
    %c0_0 = arith.constant 0 : index
    %0 = vector.load %arg1[%c0, %c0_0] : memref<1024x36xbf16, #tpu.memory_space<vmem>>, vector<1024x36xbf16>
    %c0_1 = arith.constant 0 : index
    %c0_2 = arith.constant 0 : index
    %1 = vector.load %arg2[%c0_1, %c0_2] : memref<36x128xbf16, #tpu.memory_space<vmem>>, vector<36x128xbf16>
    %cst = arith.constant dense<0.000000e+00> : vector<1024x128xf32>
    %2 = tpu.matmul %0, %1, %cst {dimension_numbers = #tpu.dot_dimension_numbers<[1], [0], [0], [1], [0, 0, 1, 1], [], []>} : vector<1024x36xbf16>, vector<36x128xbf16>, vector<1024x128xf32> -> vector<1024x128xf32>
    %3 = math.tanh %2 : vector<1024x128xf32>
    %4 = arith.truncf %3 : vector<1024x128xf32> to vector<1024x128xbf16>
    %c0_3 = arith.constant 0 : index
    %c0_4 = arith.constant 0 : index
    %5 = vector.load %arg3[%c0_3, %c0_4] : memref<1024x128xbf16, #tpu.memory_space<vmem>>, vector<1024x128xbf16>
    tpu.vector_store %arg3[%c0_3, %c0_4], %4 {strides = array<i32>} : memref<1024x128xbf16, #tpu.memory_space<vmem>>, vector<1024x128xbf16>,
    return
  }
  func.func @transform_0(%arg0: i32) -> (i32, i32) {
    %c0_i32 = arith.constant 0 : i32
    %c0_i32_0 = arith.constant 0 : i32
    return %arg0, %c0_i32 : i32, i32
  }
  func.func @transform_1(%arg0: i32) -> (i32, i32) {
    %c0_i32 = arith.constant 0 : i32
    %c0_i32_0 = arith.constant 0 : i32
    %c0_i32_1 = arith.constant 0 : i32
    return %c0_i32, %c0_i32_0 : i32, i32
  }
  func.func @transform_2(%arg0: i32) -> (i32, i32) {
    %c0_i32 = arith.constant 0 : i32
    %c0_i32_0 = arith.constant 0 : i32
    return %arg0, %c0_i32 : i32, i32
  }
}

</mosaic_0001>

<llo_original>
// kernel: squeeze.72
$region0: #{squeeze.72}
  %s0 = inlined_call_operand.vmem [shape: f32[512], index: 0, kind: input, shape index: {}]
  %s1 = inlined_call_operand.vmem [shape: f32[16,32], index: 1, kind: output, shape index: {}]
  $region1: #{squeeze.72} parent=0
    #allocation0 [shape = 'u8[4096]{0}', space=vmem, size = 0x1000, scoped, tag = 'scoped mem for input reshape']
    %s3 = sshllo.u32 0, 4
    %v4 = vld [vmem:[%s0] sm:%s3]
    %5 = vst [vmem:[#allocation0] sm:%s3] %v4
    %v6 = vld [vmem:[#allocation0] sm:$0xf]
    %vm7 = vcmask 261120
    %8 = vst.msk [vmem:[%s1] ss:$4 sm:$0xf] %vm7, %v6
    %v9 = vld [vmem:[#allocation0] sm:$0xf]
    %10 = vrot.lane.b32.xlu0 %v9, 96
    %v11 = vpop.permute.xlu0 %10
    %vm12 = vcmask 261120
    %s13 = scalar_lea.vmem %s1, 1
    %14 = vst.msk [vmem:[%s13] ss:$4 sm:$0xf] %vm12, %v11
    %v15 = vld [vmem:[#allocation0] sm:$0xf]
    %16 = vrot.lane.b32.xlu0 %v15, 64
    %v17 = vpop.permute.xlu0 %16
    %vm18 = vcmask 261120
    %s19 = scalar_lea.vmem %s1, 2
    %20 = vst.msk [vmem:[%s19] ss:$4 sm:$0xf] %vm18, %v17
    %v21 = vld [vmem:[#allocation0] sm:$0xf]
    %22 = vrot.lane.b32.xlu0 %v21, 32
    %v23 = vpop.permute.xlu0 %22
    %vm24 = vcmask 261120
    %s25 = scalar_lea.vmem %s1, 3
    %26 = vst.msk [vmem:[%s25] ss:$4 sm:$0xf] %vm24, %v23

// kernel: tile.43
$region0: #{tile.43}
  #allocation0 [shape = 's32[1]{0}', space=sflag, size = 0x4, scoped, tag = 'scoped memory for tile.43']
  %s0 = inlined_call_operand.vmem [shape: f32[32], index: 0, kind: input, shape index: {}]
  %s1 = inlined_call_operand.vmem [shape: f32[16,32], index: 1, kind: output, shape index: {}]
  // Predicated region
  $region2: #{tile.43} parent=0 // pred_check
    _
  $region3: #{tile.43} parent=0 // pred_check_branch
    %3 = sbr.rel (0) target = $region5
  $region4: #{tile.43} parent=0 // pred_region
    _
  $region5: #{tile.43} parent=0 // pred_fallthru
    _
  %v4 = vld [vmem:[%s0] ss:$0 sm:$0xff]
  %5 = vst [vmem:[%s1] sm:$0xff] %v4
  %s6 = scalar_lea.vmem %s1, 8
  %7 = vst [vmem:[%s6] sm:$0xff] %v4

// kernel: generator_forward.9
$region0: #{generator_forward.9}
  #allocation0 [shape = 'u32[]', space=smem, size = 0x4, offset = 0x4, fixed_abs, tag = 'smem constant byte address 0x4 - core index']
  #allocation1 [shape = 'u32[144,128]{1,0:T(1,128)}', space=vmem, size = 0x12000, scoped, tag = 'internal scratch']
  %s0 = inlined_call_operand.vmem [shape: bf16[8,12], index: 0, kind: input, shape index: {}]
  %s1 = inlined_call_operand.vmem [shape: bf16[12,512], index: 1, kind: input, shape index: {}]
  %s2 = inlined_call_operand.vmem [shape: bf16[8,512], index: 2, kind: output, shape index: {0}]
  %s3 = inlined_call_operand.vmem [shape: f32[1,8,512], index: 3, kind: output, shape index: {1}]
  %4 = xla_tuple %s2, %s3
  %s5 = sld [smem:[#allocation0]]
  $region26: #{generator_forward.9} parent=0
    _
  %s7 = ssub.s32 1, %s5
  %s8 = scalar_select 0, %s7, %s5
  // Predicated region
  $region2: #{generator_forward.9} parent=0 // pred_check
    _
  $region3: #{generator_forward.9} parent=0 // pred_check_branch
    %10 = sbr.rel (0) target = $region5
  $region4: #{generator_forward.9} parent=0 // pred_region
    _
  $region5: #{generator_forward.9} parent=0 // pred_fallthru
    _
  // Predicated region
  $region6: #{generator_forward.9} parent=0 // pred_check
    _
  $region7: #{generator_forward.9} parent=0 // pred_check_branch
    %12 = sbr.rel (0) target = $region9
  $region8: #{generator_forward.9} parent=0 // pred_region
    _
  $region9: #{generator_forward.9} parent=0 // pred_fallthru
    _
  %v14 = vld [vmem:[%s0] sm:$0xf]
  %v15 = vld [vmem:[%s1] sm:$0xff]
  %v16 = vld [vmem:[%s1 + $0x8] sm:$0xff]
  %v17 = vld [vmem:[%s1 + $0x10] sm:$0x33]
  %v18 = vld [vmem:[%s1 + $0x18] sm:$0x33]
  %v23 = vunpack.c.l.b16 %v15
  %v24 = vunpack.c.h.b16 %v15
  %v25 = vunpack.c.l.b16 %v16
  %v26 = vunpack.c.h.b16 %v16
  %v27 = vunpack.c.l.b16 %v17
  %v28 = vunpack.c.h.b16 %v17
  %v29 = vunpack.c.l.b16 %v18
  %v30 = vunpack.c.h.b16 %v18
  %v31 = vpack.c.b16 %v27, %v23
  %v32 = vpack.c.b16 %v28, %v24
  %v33 = vpack.c.b16 %v29, %v25
  %v34 = vpack.c.b16 %v30, %v26
  %vm35 = vcmask 97280
  %v37 = vsel %vm35, %v14, 0
  %vm39 = vcmask 1045504
  %v41 = vsel %vm39, %v31, 0
  %v44 = vsel %vm39, %v32, 0
  %v47 = vsel %vm39, %v33, 0
  %v50 = vsel %vm39, %v34, 0
  %52 = vmatprep.subr.bf16.mxu0 %v44
  %53 = vmatpush1.bf16.msra.mxu0 %v41
  %54 = vmatprep.subr.bf16.mxu0 0
  %55 = vmatpush1.bf16.msra.mxu0 0
  %56 = vmatprep.subr.bf16.mxu0 0
  %57 = vmatpush1.bf16.msra.mxu0 0
  %58 = vmatprep.subr.bf16.mxu0 0
  %59 = vmatpush1.bf16.msra.mxu0 0
  %60 = vmatprep.subr.bf16.mxu0 0
  %61 = vmatpush1.bf16.msra.mxu0 0
  %62 = vmatprep.subr.bf16.mxu0 0
  %63 = vmatpush1.bf16.msra.mxu0 0
  %64 = vmatprep.subr.bf16.mxu0 0
  %65 = vmatpush1.bf16.msra.mxu0 0
  %66 = vmatprep.subr.bf16.mxu0 0
  %67 = vmatpush1.bf16.msra.mxu0 0
  %68 = vmatprep.subr.bf16.mxu0 0
  %69 = vmatpush1.bf16.msra.mxu0 0
  %70 = vmatprep.subr.bf16.mxu0 0
  %71 = vmatpush1.bf16.msra.mxu0 0
  %72 = vmatprep.subr.bf16.mxu0 0
  %73 = vmatpush1.bf16.msra.mxu0 0
  %74 = vmatprep.subr.bf16.mxu0 0
  %75 = vmatpush1.bf16.msra.mxu0 0
  %76 = vmatprep.subr.bf16.mxu0 0
  %77 = vmatpush1.bf16.msra.mxu0 0
  %78 = vmatprep.subr.bf16.mxu0 0
  %79 = vmatpush1.bf16.msra.mxu0 0
  %80 = vmatprep.subr.bf16.mxu0 0
  %81 = vmatpush1.bf16.msra.mxu0 0
  %82 = vmatprep.subr.bf16.mxu0 0
  %83 = vmatpush1.bf16.msra.mxu0 0
  %84 = vmatprep.mubr.bf16.mxu0 0
  %85 = vmatmul.mubr.bf16.gmra.mrb[0].mxu0 %v37
  %v86 = vpop.f32.mrb[0].mxu0
  %v87 = vadd.f32 0.0, %v86
  %v88 = vpop.f32.mrb[0].mxu0
  %v89 = vadd.f32 0.0, %v88
  %v90 = vpop.f32.mrb[0].mxu0
  %v91 = vpop.f32.mrb[0].mxu0
  %92 = vdwg.mxu0
  %93 = vmatprep.subr.bf16.mxu0 %v50
  %94 = vmatpush1.bf16.msra.mxu0 %v47
  %95 = vmatprep.subr.bf16.mxu0 0
  %96 = vmatpush1.bf16.msra.mxu0 0
  %97 = vmatprep.subr.bf16.mxu0 0
  %98 = vmatpush1.bf16.msra.mxu0 0
  %99 = vmatprep.subr.bf16.mxu0 0
  %100 = vmatpush1.bf16.msra.mxu0 0
  %101 = vmatprep.subr.bf16.mxu0 0
  %102 = vmatpush1.bf16.msra.mxu0 0
  %103 = vmatprep.subr.bf16.mxu0 0
  %104 = vmatpush1.bf16.msra.mxu0 0
  %105 = vmatprep.subr.bf16.mxu0 0
  %106 = vmatpush1.bf16.msra.mxu0 0
  %107 = vmatprep.subr.bf16.mxu0 0
  %108 = vmatpush1.bf16.msra.mxu0 0
  %109 = vmatprep.subr.bf16.mxu0 0
  %110 = vmatpush1.bf16.msra.mxu0 0
  %111 = vmatprep.subr.bf16.mxu0 0
  %112 = vmatpush1.bf16.msra.mxu0 0
  %113 = vmatprep.subr.bf16.mxu0 0
  %114 = vmatpush1.bf16.msra.mxu0 0
  %115 = vmatprep.subr.bf16.mxu0 0
  %116 = vmatpush1.bf16.msra.mxu0 0
  %117 = vmatprep.subr.bf16.mxu0 0
  %118 = vmatpush1.bf16.msra.mxu0 0
  %119 = vmatprep.subr.bf16.mxu0 0
  %120 = vmatpush1.bf16.msra.mxu0 0
  %121 = vmatprep.subr.bf16.mxu0 0
  %122 = vmatpush1.bf16.msra.mxu0 0
  %123 = vmatprep.subr.bf16.mxu0 0
  %124 = vmatpush1.bf16.msra.mxu0 0
  %125 = vmatprep.mubr.bf16.mxu0 0
  %126 = vmatmul.mubr.bf16.gmra.mrb[0].mxu0 %v37
  %v127 = vpop.f32.mrb[0].mxu0
  %v128 = vadd.f32 0.0, %v127
  %v129 = vpop.f32.mrb[0].mxu0
  %v130 = vadd.f32 0.0, %v129
  %v131 = vpop.f32.mrb[0].mxu0
  %v132 = vpop.f32.mrb[0].mxu0
  %133 = vdwg.mxu0
  %v134 = vpack.c.bf16 %v87, %v87
  %v135 = vpack.c.bf16 %v89, %v89
  %v136 = vpack.c.bf16 %v128, %v128
  %v137 = vpack.c.bf16 %v130, %v130
  %v142 = vunpack.c.l.b16 %v134
  %v143 = vunpack.c.l.b16 %v135
  %v144 = vunpack.c.l.b16 %v136
  %v145 = vunpack.c.l.b16 %v137
  %v146 = vpack.c.b16 %v143, %v142
  %v147 = vpack.c.b16 %v145, %v144
  %150 = vst [vmem:[%s2] sm:$0xff] %v146
  %151 = vst [vmem:[%s2 + $0x8] sm:$0xff] %v147
  %v152 = vrot.slane %v87, 4
  %v153 = vadd.f32 %v87, %v152
  %v154 = vrot.slane %v153, 2
  %v155 = vadd.f32 %v153, %v154
  %v156 = vrot.slane %v155, 1
  %v157 = vadd.f32 %v155, %v156
  %v158 = vrot.slane %v89, 4
  %v159 = vadd.f32 %v89, %v158
  %v160 = vrot.slane %v159, 2
  %v161 = vadd.f32 %v159, %v160
  %v162 = vrot.slane %v161, 1
  %v163 = vadd.f32 %v161, %v162
  %v164 = vrot.slane %v128, 4
  %v165 = vadd.f32 %v128, %v164
  %v166 = vrot.slane %v165, 2
  %v167 = vadd.f32 %v165, %v166
  %v168 = vrot.slane %v167, 1
  %v169 = vadd.f32 %v167, %v168
  %v170 = vrot.slane %v130, 4
  %v171 = vadd.f32 %v130, %v170
  %v172 = vrot.slane %v171, 2
  %v173 = vadd.f32 %v171, %v172
  %v174 = vrot.slane %v173, 1
  %v175 = vadd.f32 %v173, %v174
  %v176 = vmul.f32 %v87, %v87
  %v177 = vmul.f32 %v89, %v89
  %v178 = vmul.f32 %v128, %v128
  %v179 = vmul.f32 %v130, %v130
  %v180 = vrot.slane %v176, 4
  %v181 = vadd.f32 %v176, %v180
  %v182 = vrot.slane %v181, 2
  %v183 = vadd.f32 %v181, %v182
  %v184 = vrot.slane %v183, 1
  %v185 = vadd.f32 %v183, %v184
  %v186 = vrot.slane %v177, 4
  %v187 = vadd.f32 %v177, %v186
  %v188 = vrot.slane %v187, 2
  %v189 = vadd.f32 %v187, %v188
  %v190 = vrot.slane %v189, 1
  %v191 = vadd.f32 %v189, %v190
  %v192 = vrot.slane %v178, 4
  %v193 = vadd.f32 %v178, %v192
  %v194 = vrot.slane %v193, 2
  %v195 = vadd.f32 %v193, %v194
  %v196 = vrot.slane %v195, 1
  %v197 = vadd.f32 %v195, %v196
  %v198 = vrot.slane %v179, 4
  %v199 = vadd.f32 %v179, %v198
  %v200 = vrot.slane %v199, 2
  %v201 = vadd.f32 %v199, %v200
  %v202 = vrot.slane %v201, 1
  %v203 = vadd.f32 %v201, %v202
  %vm204 = vcmask 1040384
  %v205 = vsel %vm204, %v157, %v185
  %v206 = vsel %vm204, %v163, %v191
  %v207 = vsel %vm204, %v169, %v197
  %v208 = vsel %vm204, %v175, %v203
  %vm209 = vcmask 1041408
  %v210 = vsel %vm209, %v205, 0.0
  %v211 = vsel %vm209, %v206, 0.0
  %v212 = vsel %vm209, %v207, 0.0
  %v213 = vsel %vm209, %v208, 0.0
  %214 = vst [vmem:[%s3] sm:$0xff] %v210
  %215 = vst [vmem:[%s3 + $0x8] sm:$0xff] %v211
  %216 = vst [vmem:[%s3 + $0x10] sm:$0xff] %v212
  %217 = vst [vmem:[%s3 + $0x18] sm:$0xff] %v213
  // Predicated region
  $region10: #{generator_forward.9} parent=0 // pred_check
    _
  $region11: #{generator_forward.9} parent=0 // pred_check_branch
    %219 = sbr.rel (0) target = $region13
  $region12: #{generator_forward.9} parent=0 // pred_region
    _
  $region13: #{generator_forward.9} parent=0 // pred_fallthru
    _
  // Predicated region
  $region14: #{generator_forward.9} parent=0 // pred_check
    _
  $region15: #{generator_forward.9} parent=0 // pred_check_branch
    %221 = sbr.rel (0) target = $region17
  $region16: #{generator_forward.9} parent=0 // pred_region
    _
  $region17: #{generator_forward.9} parent=0 // pred_fallthru
    _
  // Predicated region
  $region18: #{generator_forward.9} parent=0 // pred_check
    _
  $region19: #{generator_forward.9} parent=0 // pred_check_branch
    %223 = sbr.rel (0) target = $region21
  $region20: #{generator_forward.9} parent=0 // pred_region
    _
  $region21: #{generator_forward.9} parent=0 // pred_fallthru
    _
  // Predicated region
  $region22: #{generator_forward.9} parent=0 // pred_check
    _
  $region23: #{generator_forward.9} parent=0 // pred_check_branch
    %225 = sbr.rel (0) target = $region25
  $region24: #{generator_forward.9} parent=0 // pred_region
    _
  $region25: #{generator_forward.9} parent=0 // pred_fallthru
    _

// kernel: generator_forward.10
$region0: #{generator_forward.10}
  #allocation0 [shape = 'u32[]', space=smem, size = 0x4, offset = 0x4, fixed_abs, tag = 'smem constant byte address 0x4 - core index']
  #allocation1 [shape = 'u32[144,128]{1,0:T(1,128)}', space=vmem, size = 0x12000, scoped, tag = 'internal scratch']
  %s0 = inlined_call_operand.vmem [shape: bf16[8,512], index: 0, kind: input, shape index: {}]
  %s1 = inlined_call_operand.vmem [shape: f32[1,512], index: 1, kind: input, shape index: {}]
  %s2 = inlined_call_operand.vmem [shape: f32[1,512], index: 2, kind: input, shape index: {}]
  %s3 = inlined_call_operand.vmem [shape: bf16[8,512], index: 3, kind: output, shape index: {}]
  %s4 = sld [smem:[#allocation0]]
  $region22: #{generator_forward.10} parent=0
    _
  %s6 = ssub.s32 1, %s4
  %s7 = scalar_select 0, %s6, %s4
  // Predicated region
  $region2: #{generator_forward.10} parent=0 // pred_check
    _
  $region3: #{generator_forward.10} parent=0 // pred_check_branch
    %9 = sbr.rel (0) target = $region5
  $region4: #{generator_forward.10} parent=0 // pred_region
    _
  $region5: #{generator_forward.10} parent=0 // pred_fallthru
    _
  // Predicated region
  $region6: #{generator_forward.10} parent=0 // pred_check
    _
  $region7: #{generator_forward.10} parent=0 // pred_check_branch
    %11 = sbr.rel (0) target = $region9
  $region8: #{generator_forward.10} parent=0 // pred_region
    _
  $region9: #{generator_forward.10} parent=0 // pred_fallthru
    _
  // Predicated region
  $region10: #{generator_forward.10} parent=0 // pred_check
    _
  $region11: #{generator_forward.10} parent=0 // pred_check_branch
    %13 = sbr.rel (0) target = $region13
  $region12: #{generator_forward.10} parent=0 // pred_region
    _
  $region13: #{generator_forward.10} parent=0 // pred_fallthru
    _
  %v14 = vld [vmem:[%s0] sm:$0xff]
  %v15 = vld [vmem:[%s0 + $0x8] sm:$0xff]
  %v16 = vunpack.c.l.bf16 %v14
  %v17 = vunpack.c.h.bf16 %v14
  %v18 = vunpack.c.l.bf16 %v15
  %v19 = vunpack.c.h.bf16 %v15
  %v20 = vld [vmem:[%s1] sm:$0xf]
  %v22 = vlaneseq
  %v23 = vshrl.u32 %v22, 7
  %v24 = vsub.s32 0, %v23
  %v25 = vrot.slane %v20, %v24
  %v26 = vlaneseq
  %v27 = vshrl.u32 %v26, 7
  %v28 = vsub.s32 1, %v27
  %v29 = vrot.slane %v20, %v28
  %v30 = vlaneseq
  %v31 = vshrl.u32 %v30, 7
  %v32 = vsub.s32 2, %v31
  %v33 = vrot.slane %v20, %v32
  %v34 = vlaneseq
  %v35 = vshrl.u32 %v34, 7
  %v36 = vsub.s32 3, %v35
  %v37 = vrot.slane %v20, %v36
  %v42 = vmul.f32 %v16, %v25
  %v43 = vmul.f32 %v17, %v29
  %v44 = vmul.f32 %v18, %v33
  %v45 = vmul.f32 %v19, %v37
  %v46 = vld [vmem:[%s2] sm:$0xf]
  %v48 = vlaneseq
  %v49 = vshrl.u32 %v48, 7
  %v50 = vsub.s32 0, %v49
  %v51 = vrot.slane %v46, %v50
  %v52 = vlaneseq
  %v53 = vshrl.u32 %v52, 7
  %v54 = vsub.s32 1, %v53
  %v55 = vrot.slane %v46, %v54
  %v56 = vlaneseq
  %v57 = vshrl.u32 %v56, 7
  %v58 = vsub.s32 2, %v57
  %v59 = vrot.slane %v46, %v58
  %v60 = vlaneseq
  %v61 = vshrl.u32 %v60, 7
  %v62 = vsub.s32 3, %v61
  %v63 = vrot.slane %v46, %v62
  %v68 = vadd.f32 %v42, %v51
  %v69 = vadd.f32 %v43, %v55
  %v70 = vadd.f32 %v44, %v59
  %v71 = vadd.f32 %v45, %v63
  %v72 = vmax.f32 %v68, 0.0
  %v73 = vmax.f32 %v69, 0.0
  %v74 = vmax.f32 %v70, 0.0
  %v75 = vmax.f32 %v71, 0.0
  %v76 = vpack.c.bf16 %v72, %v72
  %v77 = vpack.c.bf16 %v73, %v73
  %v78 = vpack.c.bf16 %v74, %v74
  %v79 = vpack.c.bf16 %v75, %v75
  %v84 = vunpack.c.l.b16 %v76
  %v85 = vunpack.c.l.b16 %v77
  %v86 = vunpack.c.l.b16 %v78
  %v87 = vunpack.c.l.b16 %v79
  %v88 = vpack.c.b16 %v85, %v84
  %v89 = vpack.c.b16 %v87, %v86
  %92 = vst [vmem:[%s3] sm:$0xff] %v88
  %93 = vst [vmem:[%s3 + $0x8] sm:$0xff] %v89
  // Predicated region
  $region14: #{generator_forward.10} parent=0 // pred_check
    _
  $region15: #{generator_forward.10} parent=0 // pred_check_branch
    %95 = sbr.rel (0) target = $region17
  $region16: #{generator_forward.10} parent=0 // pred_region
    _
  $region17: #{generator_forward.10} parent=0 // pred_fallthru
    _
  // Predicated region
  $region18: #{generator_forward.10} parent=0 // pred_check
    _
  $region19: #{generator_forward.10} parent=0 // pred_check_branch
    %97 = sbr.rel (0) target = $region21
  $region20: #{generator_forward.10} parent=0 // pred_region
    _
  $region21: #{generator_forward.10} parent=0 // pred_fallthru
    _

// kernel: squeeze.90
$region0: #{squeeze.90}
  %s0 = inlined_call_operand.vmem [shape: f32[64], index: 0, kind: input, shape index: {}]
  %s1 = inlined_call_operand.vmem [shape: f32[4,16], index: 1, kind: output, shape index: {}]
  $region1: #{squeeze.90} parent=0
    #allocation0 [shape = 'u8[4096]{0}', space=vmem, size = 0x1000, scoped, tag = 'scoped mem for output reshape']
    #allocation1 [shape = 'u8[4096]{0}', space=vmem, size = 0x1000, scoped, tag = 'scoped mem for input reshape']
    %s3 = sshllo.u32 0, 1
    %v4 = vld [vmem:[%s0] sm:%s3]
    %5 = vst [vmem:[#allocation1] sm:%s3] %v4
    %v6 = vld [vmem:[#allocation1] sm:$0x1]
    %vm7 = vcmask 130048
    %8 = vst.msk [vmem:[#allocation0] sm:$0x1] %vm7, %v6
    %v9 = vld [vmem:[#allocation1] sm:$0x1]
    %10 = vrot.lane.b32.xlu0 %v9, 112
    %v11 = vpop.permute.xlu0 %10
    %vm12 = vcmask 130048
    %s13 = scalar_lea.vmem [#allocation0], 1
    %14 = vst.msk [vmem:[%s13] sm:$0x1] %vm12, %v11
    %v15 = vld [vmem:[#allocation1] sm:$0x1]
    %16 = vrot.lane.b32.xlu0 %v15, 96
    %v17 = vpop.permute.xlu0 %16
    %vm18 = vcmask 130048
    %s19 = scalar_lea.vmem [#allocation0], 2
    %20 = vst.msk [vmem:[%s19] sm:$0x1] %vm18, %v17
    %v21 = vld [vmem:[#allocation1] sm:$0x1]
    %22 = vrot.lane.b32.xlu0 %v21, 80
    %v23 = vpop.permute.xlu0 %22
    %vm24 = vcmask 130048
    %s25 = scalar_lea.vmem [#allocation0], 3
    %26 = vst.msk [vmem:[%s25] sm:$0x1] %vm24, %v23
    %s28 = sshllo.u32 0, 4
    %v30 = vld [vmem:[#allocation0] sm:%s28]
    %s31 = sshllo.u32 0, 4
    %32 = vst [vmem:[%s1] sm:%s31] %v30

// kernel: tile.53
$region0: #{tile.53}
  #allocation0 [shape = 's32[1]{0}', space=sflag, size = 0x4, scoped, tag = 'scoped memory for tile.53']
  %s0 = inlined_call_operand.vmem [shape: f32[16], index: 0, kind: input, shape index: {}]
  %s1 = inlined_call_operand.vmem [shape: f32[4,16], index: 1, kind: output, shape index: {}]
  // Predicated region
  $region2: #{tile.53} parent=0 // pred_check
    _
  $region3: #{tile.53} parent=0 // pred_check_branch
    %3 = sbr.rel (0) target = $region5
  $region4: #{tile.53} parent=0 // pred_region
    _
  $region5: #{tile.53} parent=0 // pred_fallthru
    _
  %v4 = vld [vmem:[%s0] ss:$0 sm:$0xff]
  %5 = vst [vmem:[%s1] sm:$0xf] %v4

// kernel: tile.54
$region0: #{tile.54}
  %s0 = inlined_call_operand.vmem [shape: f32[4,16], index: 0, kind: input, shape index: {}]
  %s1 = inlined_call_operand.vmem [shape: f32[64], index: 1, kind: output, shape index: {}]
  $region1: #{tile.54} parent=0
    #allocation0 [shape = 'u8[4096]{0}', space=vmem, size = 0x1000, scoped, tag = 'scoped mem for output reshape']
    #allocation1 [shape = 'u8[4096]{0}', space=vmem, size = 0x1000, scoped, tag = 'scoped mem for input reshape']
    %s3 = sshllo.u32 0, 4
    %v4 = vld [vmem:[%s0] sm:%s3]
    %5 = vst [vmem:[#allocation1] sm:%s3] %v4
    %v6 = vld [vmem:[#allocation1] sm:$0x1]
    %vm7 = vcmask 130048
    %8 = vst.msk [vmem:[#allocation0] sm:$0x1] %vm7, %v6
    %s9 = scalar_lea.vmem [#allocation1], 3
    %v10 = vld [vmem:[%s9] sm:$0x1]
    %11 = vrot.lane.b32.xlu0 %v10, 48
    %v12 = vpop.permute.xlu0 %11
    %vm13 = vcmask 523648
    %14 = vst.msk [vmem:[#allocation0] sm:$0x1] %vm13, %v12
    %s15 = scalar_lea.vmem [#allocation1], 2
    %v16 = vld [vmem:[%s15] sm:$0x1]
    %17 = vrot.lane.b32.xlu0 %v16, 32
    %v18 = vpop.permute.xlu0 %17
    %vm19 = vcmask 392448
    %20 = vst.msk [vmem:[#allocation0] sm:$0x1] %vm19, %v18
    %s21 = scalar_lea.vmem [#allocation1], 1
    %v22 = vld [vmem:[%s21] sm:$0x1]
    %23 = vrot.lane.b32.xlu0 %v22, 16
    %v24 = vpop.permute.xlu0 %23
    %vm25 = vcmask 261248
    %26 = vst.msk [vmem:[#allocation0] sm:$0x1] %vm25, %v24
    %s28 = sshllo.u32 0, 1
    %v30 = vld [vmem:[#allocation0] sm:%s28]
    %s31 = sshllo.u32 0, 1
    %32 = vst [vmem:[%s1] sm:%s31] %v30

// kernel: generator_forward.11
$region0: #{generator_forward.11}
  #allocation0 [shape = 'u32[]', space=smem, size = 0x4, offset = 0x4, fixed_abs, tag = 'smem constant byte address 0x4 - core index']
  #allocation1 [shape = 'u32[144,128]{1,0:T(1,128)}', space=vmem, size = 0x12000, scoped, tag = 'internal scratch']
  %s0 = inlined_call_operand.vmem [shape: bf16[32,288], index: 0, kind: input, shape index: {}]
  %s1 = inlined_call_operand.vmem [shape: bf16[288,128], index: 1, kind: input, shape index: {}]
  %s2 = inlined_call_operand.vmem [shape: bf16[32,128], index: 2, kind: output, shape index: {0}]
  %s3 = inlined_call_operand.vmem [shape: f32[1,8,128], index: 3, kind: output, shape index: {1}]
  %4 = xla_tuple %s2, %s3
  %s5 = sld [smem:[#allocation0]]
  $region26: #{generator_forward.11} parent=0
    _
  %s7 = ssub.s32 1, %s5
  %s8 = scalar_select 0, %s7, %s5
  // Predicated region
  $region2: #{generator_forward.11} parent=0 // pred_check
    _
  $region3: #{generator_forward.11} parent=0 // pred_check_branch
    %10 = sbr.rel (0) target = $region5
  $region4: #{generator_forward.11} parent=0 // pred_region
    _
  $region5: #{generator_forward.11} parent=0 // pred_fallthru
    _
  // Predicated region
  $region6: #{generator_forward.11} parent=0 // pred_check
    _
  $region7: #{generator_forward.11} parent=0 // pred_check_branch
    %12 = sbr.rel (0) target = $region9
  $region8: #{generator_forward.11} parent=0 // pred_region
    _
  $region9: #{generator_forward.11} parent=0 // pred_fallthru
    _
  %v14 = vld [vmem:[%s0] sm:$0xff]
  %v15 = vld [vmem:[%s0 + $0x8] sm:$0xf]
  %v16 = vld [vmem:[%s0 + $0xc] sm:$0xff]
  %v17 = vld [vmem:[%s0 + $0x14] sm:$0xf]
  %v18 = vld [vmem:[%s0 + $0x18] sm:$0xff]
  %v19 = vld [vmem:[%s0 + $0x20] sm:$0xf]
  %v20 = vld [vmem:[%s0 + $0x24] sm:$0xff]
  %v21 = vld [vmem:[%s0 + $0x2c] sm:$0xf]
  %v22 = vld [vmem:[%s1] sm:$0xf]
  %v23 = vld [vmem:[%s1 + $0x4] sm:$0xf]
  %v24 = vld [vmem:[%s1 + $0x8] sm:$0xf]
  %v25 = vld [vmem:[%s1 + $0xc] sm:$0xf]
  %v26 = vld [vmem:[%s1 + $0x10] sm:$0xf]
  %v27 = vld [vmem:[%s1 + $0x14] sm:$0xf]
  %v28 = vld [vmem:[%s1 + $0x18] sm:$0xf]
  %v29 = vld [vmem:[%s1 + $0x1c] sm:$0xf]
  %v30 = vld [vmem:[%s1 + $0x20] sm:$0xf]
  %v31 = vld [vmem:[%s1 + $0x24] sm:$0xf]
  %v32 = vld [vmem:[%s1 + $0x28] sm:$0xf]
  %v33 = vld [vmem:[%s1 + $0x2c] sm:$0xf]
  %v34 = vld [vmem:[%s1 + $0x30] sm:$0xf]
  %v35 = vld [vmem:[%s1 + $0x34] sm:$0xf]
  %v36 = vld [vmem:[%s1 + $0x38] sm:$0xf]
  %v37 = vld [vmem:[%s1 + $0x3c] sm:$0xf]
  %v38 = vld [vmem:[%s1 + $0x40] sm:$0xf]
  %v39 = vld [vmem:[%s1 + $0x44] sm:$0xf]
  %v40 = vld [vmem:[%s1 + $0x48] sm:$0xf]
  %v41 = vld [vmem:[%s1 + $0x4c] sm:$0xf]
  %v42 = vld [vmem:[%s1 + $0x50] sm:$0xf]
  %v43 = vld [vmem:[%s1 + $0x54] sm:$0xf]
  %v44 = vld [vmem:[%s1 + $0x58] sm:$0xf]
  %v45 = vld [vmem:[%s1 + $0x5c] sm:$0xf]
  %v46 = vld [vmem:[%s1 + $0x60] sm:$0xf]
  %v47 = vld [vmem:[%s1 + $0x64] sm:$0xf]
  %v48 = vld [vmem:[%s1 + $0x68] sm:$0xf]
  %v49 = vld [vmem:[%s1 + $0x6c] sm:$0xf]
  %v50 = vld [vmem:[%s1 + $0x70] sm:$0xf]
  %v51 = vld [vmem:[%s1 + $0x74] sm:$0xf]
  %v52 = vld [vmem:[%s1 + $0x78] sm:$0xf]
  %v53 = vld [vmem:[%s1 + $0x7c] sm:$0xf]
  %v54 = vld [vmem:[%s1 + $0x80] sm:$0xf]
  %v55 = vld [vmem:[%s1 + $0x84] sm:$0xf]
  %v56 = vld [vmem:[%s1 + $0x88] sm:$0xf]
  %v57 = vld [vmem:[%s1 + $0x8c] sm:$0xf]
  %v66 = vunpack.c.l.b16 %v14
  %v67 = vunpack.c.h.b16 %v14
  %v68 = vunpack.c.l.b16 %v15
  %v69 = vunpack.c.l.b16 %v16
  %v70 = vunpack.c.h.b16 %v16
  %v71 = vunpack.c.l.b16 %v17
  %v72 = vunpack.c.l.b16 %v18
  %v73 = vunpack.c.h.b16 %v18
  %v74 = vunpack.c.l.b16 %v19
  %v75 = vunpack.c.l.b16 %v20
  %v76 = vunpack.c.h.b16 %v20
  %v77 = vunpack.c.l.b16 %v21
  %v78 = vpack.c.b16 %v69, %v66
  %v79 = vpack.c.b16 %v70, %v67
  %v80 = vpack.c.b16 %v71, %v68
  %v81 = vpack.c.b16 %v75, %v72
  %v82 = vpack.c.b16 %v76, %v73
  %v83 = vpack.c.b16 %v77, %v74
  %v124 = vunpack.c.l.b16 %v22
  %v125 = vunpack.c.l.b16 %v23
  %v126 = vunpack.c.l.b16 %v24
  %v127 = vunpack.c.l.b16 %v25
  %v128 = vunpack.c.l.b16 %v26
  %v129 = vunpack.c.l.b16 %v27
  %v130 = vunpack.c.l.b16 %v28
  %v131 = vunpack.c.l.b16 %v29
  %v132 = vunpack.c.l.b16 %v30
  %v133 = vunpack.c.l.b16 %v31
  %v134 = vunpack.c.l.b16 %v32
  %v135 = vunpack.c.l.b16 %v33
  %v136 = vunpack.c.l.b16 %v34
  %v137 = vunpack.c.l.b16 %v35
  %v138 = vunpack.c.l.b16 %v36
  %v139 = vunpack.c.l.b16 %v37
  %v140 = vunpack.c.l.b16 %v38
  %v141 = vunpack.c.l.b16 %v39
  %v142 = vunpack.c.l.b16 %v40
  %v143 = vunpack.c.l.b16 %v41
  %v144 = vunpack.c.l.b16 %v42
  %v145 = vunpack.c.l.b16 %v43
  %v146 = vunpack.c.l.b16 %v44
  %v147 = vunpack.c.l.b16 %v45
  %v148 = vunpack.c.l.b16 %v46
  %v149 = vunpack.c.l.b16 %v47
  %v150 = vunpack.c.l.b16 %v48
  %v151 = vunpack.c.l.b16 %v49
  %v152 = vunpack.c.l.b16 %v50
  %v153 = vunpack.c.l.b16 %v51
  %v154 = vunpack.c.l.b16 %v52
  %v155 = vunpack.c.l.b16 %v53
  %v156 = vunpack.c.l.b16 %v54
  %v157 = vunpack.c.l.b16 %v55
  %v158 = vunpack.c.l.b16 %v56
  %v159 = vunpack.c.l.b16 %v57
  %v160 = vpack.c.b16 %v125, %v124
  %v161 = vpack.c.b16 %v127, %v126
  %v162 = vpack.c.b16 %v129, %v128
  %v163 = vpack.c.b16 %v131, %v130
  %v164 = vpack.c.b16 %v133, %v132
  %v165 = vpack.c.b16 %v135, %v134
  %v166 = vpack.c.b16 %v137, %v136
  %v167 = vpack.c.b16 %v139, %v138
  %v168 = vpack.c.b16 %v141, %v140
  %v169 = vpack.c.b16 %v143, %v142
  %v170 = vpack.c.b16 %v145, %v144
  %v171 = vpack.c.b16 %v147, %v146
  %v172 = vpack.c.b16 %v149, %v148
  %v173 = vpack.c.b16 %v151, %v150
  %v174 = vpack.c.b16 %v153, %v152
  %v175 = vpack.c.b16 %v155, %v154
  %v176 = vpack.c.b16 %v157, %v156
  %v177 = vpack.c.b16 %v159, %v158
  %vm196 = vcmask 261120
  %v198 = vsel %vm196, %v80, 0
  %v201 = vsel %vm196, %v83, 0
  %203 = vmatprep.subr.bf16.mxu0 0
  %204 = vmatpush1.bf16.msra.mxu0 %v160
  %205 = vmatprep.subr.bf16.mxu0 0
  %206 = vmatpush1.bf16.msra.mxu0 %v161
  %207 = vmatprep.subr.bf16.mxu0 0
  %208 = vmatpush1.bf16.msra.mxu0 %v162
  %209 = vmatprep.subr.bf16.mxu0 0
  %210 = vmatpush1.bf16.msra.mxu0 %v163
  %211 = vmatprep.subr.bf16.mxu0 0
  %212 = vmatpush1.bf16.msra.mxu0 %v164
  %213 = vmatprep.subr.bf16.mxu0 0
  %214 = vmatpush1.bf16.msra.mxu0 %v165
  %215 = vmatprep.subr.bf16.mxu0 0
  %216 = vmatpush1.bf16.msra.mxu0 %v166
  %217 = vmatprep.subr.bf16.mxu0 0
  %218 = vmatpush1.bf16.msra.mxu0 %v167
  %219 = vmatprep.subr.bf16.mxu0 0
  %220 = vmatpush1.bf16.msra.mxu0 %v168
  %221 = vmatprep.subr.bf16.mxu0 0
  %222 = vmatpush1.bf16.msra.mxu0 %v169
  %223 = vmatprep.subr.bf16.mxu0 0
  %224 = vmatpush1.bf16.msra.mxu0 %v170
  %225 = vmatprep.subr.bf16.mxu0 0
  %226 = vmatpush1.bf16.msra.mxu0 %v171
  %227 = vmatprep.subr.bf16.mxu0 0
  %228 = vmatpush1.bf16.msra.mxu0 %v172
  %229 = vmatprep.subr.bf16.mxu0 0
  %230 = vmatpush1.bf16.msra.mxu0 %v173
  %231 = vmatprep.subr.bf16.mxu0 0
  %232 = vmatpush1.bf16.msra.mxu0 %v174
  %233 = vmatprep.subr.bf16.mxu0 0
  %234 = vmatpush1.bf16.msra.mxu0 %v175
  %235 = vmatprep.mubr.bf16.mxu0 %v79
  %236 = vmatmul.mubr.bf16.gmra.mrb[0].mxu0 %v78
  %v237 = vpop.f32.mrb[0].mxu0
  %v238 = vadd.f32 0.0, %v237
  %v239 = vpop.f32.mrb[0].mxu0
  %v240 = vpop.f32.mrb[0].mxu0
  %v241 = vadd.f32 0.0, %v240
  %v242 = vpop.f32.mrb[0].mxu0
  %243 = vmatprep.mubr.bf16.mxu0 %v82
  %244 = vmatmul.mubr.bf16.gmra.mrb[0].mxu0 %v81
  %v245 = vpop.f32.mrb[0].mxu0
  %v246 = vadd.f32 0.0, %v245
  %v247 = vpop.f32.mrb[0].mxu0
  %v248 = vpop.f32.mrb[0].mxu0
  %v249 = vadd.f32 0.0, %v248
  %v250 = vpop.f32.mrb[0].mxu0
  %251 = vdwg.mxu0
  %252 = vmatprep.subr.bf16.mxu0 0
  %253 = vmatpush1.bf16.msra.mxu0 %v176
  %254 = vmatprep.subr.bf16.mxu0 0
  %255 = vmatpush1.bf16.msra.mxu0 %v177
  %256 = vmatprep.subr.bf16.mxu0 0
  %257 = vmatpush1.bf16.msra.mxu0 0
  %258 = vmatprep.subr.bf16.mxu0 0
  %259 = vmatpush1.bf16.msra.mxu0 0
  %260 = vmatprep.subr.bf16.mxu0 0
  %261 = vmatpush1.bf16.msra.mxu0 0
  %262 = vmatprep.subr.bf16.mxu0 0
  %263 = vmatpush1.bf16.msra.mxu0 0
  %264 = vmatprep.subr.bf16.mxu0 0
  %265 = vmatpush1.bf16.msra.mxu0 0
  %266 = vmatprep.subr.bf16.mxu0 0
  %267 = vmatpush1.bf16.msra.mxu0 0
  %268 = vmatprep.subr.bf16.mxu0 0
  %269 = vmatpush1.bf16.msra.mxu0 0
  %270 = vmatprep.subr.bf16.mxu0 0
  %271 = vmatpush1.bf16.msra.mxu0 0
  %272 = vmatprep.subr.bf16.mxu0 0
  %273 = vmatpush1.bf16.msra.mxu0 0
  %274 = vmatprep.subr.bf16.mxu0 0
  %275 = vmatpush1.bf16.msra.mxu0 0
  %276 = vmatprep.subr.bf16.mxu0 0
  %277 = vmatpush1.bf16.msra.mxu0 0
  %278 = vmatprep.subr.bf16.mxu0 0
  %279 = vmatpush1.bf16.msra.mxu0 0
  %280 = vmatprep.subr.bf16.mxu0 0
  %281 = vmatpush1.bf16.msra.mxu0 0
  %282 = vmatprep.subr.bf16.mxu0 0
  %283 = vmatpush1.bf16.msra.mxu0 0
  %284 = vmatprep.mubr.bf16.mxu0 0
  %285 = vmatmul.mubr.bf16.gmra.mrb[0].mxu0 %v198
  %v286 = vpop.f32.mrb[0].mxu0
  %v287 = vadd.f32 %v238, %v286
  %v288 = vpop.f32.mrb[0].mxu0
  %v289 = vpop.f32.mrb[0].mxu0
  %v290 = vadd.f32 %v241, %v289
  %v291 = vpop.f32.mrb[0].mxu0
  %292 = vmatprep.mubr.bf16.mxu0 0
  %293 = vmatmul.mubr.bf16.gmra.mrb[0].mxu0 %v201
  %v294 = vpop.f32.mrb[0].mxu0
  %v295 = vadd.f32 %v246, %v294
  %v296 = vpop.f32.mrb[0].mxu0
  %v297 = vpop.f32.mrb[0].mxu0
  %v298 = vadd.f32 %v249, %v297
  %v299 = vpop.f32.mrb[0].mxu0
  %300 = vdwg.mxu0
  %v301 = vpack.c.bf16 %v290, %v287
  %v302 = vpack.c.bf16 %v298, %v295
  %v305 = vunpack.c.l.b16 %v301
  %v306 = vunpack.c.h.b16 %v301
  %v307 = vunpack.c.l.b16 %v302
  %v308 = vunpack.c.h.b16 %v302
  %v309 = vpack.c.b16 %v305, %v305
  %v310 = vpack.c.b16 %v306, %v306
  %v311 = vpack.c.b16 %v307, %v307
  %v312 = vpack.c.b16 %v308, %v308
  %317 = vst [vmem:[%s2] sm:$0xf] %v309
  %318 = vst [vmem:[%s2 + $0x4] sm:$0xf] %v310
  %319 = vst [vmem:[%s2 + $0x8] sm:$0xf] %v311
  %320 = vst [vmem:[%s2 + $0xc] sm:$0xf] %v312
  %v321 = vadd.f32 %v287, %v290
  %v322 = vadd.f32 %v321, %v295
  %v323 = vadd.f32 %v322, %v298
  %v324 = vrot.slane %v323, 4
  %v325 = vadd.f32 %v323, %v324
  %v326 = vrot.slane %v325, 2
  %v327 = vadd.f32 %v325, %v326
  %v328 = vrot.slane %v327, 1
  %v329 = vadd.f32 %v327, %v328
  %v330 = vmul.f32 %v287, %v287
  %v331 = vmul.f32 %v290, %v290
  %v332 = vmul.f32 %v295, %v295
  %v333 = vmul.f32 %v298, %v298
  %v334 = vadd.f32 %v330, %v331
  %v335 = vadd.f32 %v334, %v332
  %v336 = vadd.f32 %v335, %v333
  %v337 = vrot.slane %v336, 4
  %v338 = vadd.f32 %v336, %v337
  %v339 = vrot.slane %v338, 2
  %v340 = vadd.f32 %v338, %v339
  %v341 = vrot.slane %v340, 1
  %v342 = vadd.f32 %v340, %v341
  %vm343 = vcmask 1040384
  %v344 = vsel %vm343, %v329, %v342
  %vm345 = vcmask 1041408
  %v346 = vsel %vm345, %v344, 0.0
  %347 = vst [vmem:[%s3] sm:$0xff] %v346
  // Predicated region
  $region10: #{generator_forward.11} parent=0 // pred_check
    _
  $region11: #{generator_forward.11} parent=0 // pred_check_branch
    %349 = sbr.rel (0) target = $region13
  $region12: #{generator_forward.11} parent=0 // pred_region
    _
  $region13: #{generator_forward.11} parent=0 // pred_fallthru
    _
  // Predicated region
  $region14: #{generator_forward.11} parent=0 // pred_check
    _
  $region15: #{generator_forward.11} parent=0 // pred_check_branch
    %351 = sbr.rel (0) target = $region17
  $region16: #{generator_forward.11} parent=0 // pred_region
    _
  $region17: #{generator_forward.11} parent=0 // pred_fallthru
    _
  // Predicated region
  $region18: #{generator_forward.11} parent=0 // pred_check
    _
  $region19: #{generator_forward.11} parent=0 // pred_check_branch
    %353 = sbr.rel (0) target = $region21
  $region20: #{generator_forward.11} parent=0 // pred_region
    _
  $region21: #{generator_forward.11} parent=0 // pred_fallthru
    _
  // Predicated region
  $region22: #{generator_forward.11} parent=0 // pred_check
    _
  $region23: #{generator_forward.11} parent=0 // pred_check_branch
    %355 = sbr.rel (0) target = $region25
  $region24: #{generator_forward.11} parent=0 // pred_region
    _
  $region25: #{generator_forward.11} parent=0 // pred_fallthru
    _

// kernel: generator_forward.12
$region0: #{generator_forward.12}
  #allocation0 [shape = 'u32[]', space=smem, size = 0x4, offset = 0x4, fixed_abs, tag = 'smem constant byte address 0x4 - core index']
  #allocation1 [shape = 'u32[144,128]{1,0:T(1,128)}', space=vmem, size = 0x12000, scoped, tag = 'internal scratch']
  %s0 = inlined_call_operand.vmem [shape: bf16[32,128], index: 0, kind: input, shape index: {}]
  %s1 = inlined_call_operand.vmem [shape: f32[1,128], index: 1, kind: input, shape index: {}]
  %s2 = inlined_call_operand.vmem [shape: f32[1,128], index: 2, kind: input, shape index: {}]
  %s3 = inlined_call_operand.vmem [shape: bf16[32,128], index: 3, kind: output, shape index: {}]
  %s4 = sld [smem:[#allocation0]]
  $region22: #{generator_forward.12} parent=0
    _
  %s6 = ssub.s32 1, %s4
  %s7 = scalar_select 0, %s6, %s4
  // Predicated region
  $region2: #{generator_forward.12} parent=0 // pred_check
    _
  $region3: #{generator_forward.12} parent=0 // pred_check_branch
    %9 = sbr.rel (0) target = $region5
  $region4: #{generator_forward.12} parent=0 // pred_region
    _
  $region5: #{generator_forward.12} parent=0 // pred_fallthru
    _
  // Predicated region
  $region6: #{generator_forward.12} parent=0 // pred_check
    _
  $region7: #{generator_forward.12} parent=0 // pred_check_branch
    %11 = sbr.rel (0) target = $region9
  $region8: #{generator_forward.12} parent=0 // pred_region
    _
  $region9: #{generator_forward.12} parent=0 // pred_fallthru
    _
  // Predicated region
  $region10: #{generator_forward.12} parent=0 // pred_check
    _
  $region11: #{generator_forward.12} parent=0 // pred_check_branch
    %13 = sbr.rel (0) target = $region13
  $region12: #{generator_forward.12} parent=0 // pred_region
    _
  $region13: #{generator_forward.12} parent=0 // pred_fallthru
    _
  %v14 = vld [vmem:[%s0] sm:$0xf]
  %v15 = vld [vmem:[%s0 + $0x4] sm:$0xf]
  %v16 = vld [vmem:[%s0 + $0x8] sm:$0xf]
  %v17 = vld [vmem:[%s0 + $0xc] sm:$0xf]
  %v18 = vunpack.c.l.bf16 %v14
  %v19 = vunpack.c.l.bf16 %v15
  %v20 = vunpack.c.l.bf16 %v16
  %v21 = vunpack.c.l.bf16 %v17
  %v22 = vld [vmem:[%s1] sm:$0x1]
  %v24 = vlaneseq
  %v25 = vshrl.u32 %v24, 7
  %v26 = vsub.s32 0, %v25
  %v27 = vrot.slane %v22, %v26
  %v29 = vmul.f32 %v18, %v27
  %v30 = vmul.f32 %v19, %v27
  %v31 = vmul.f32 %v20, %v27
  %v32 = vmul.f32 %v21, %v27
  %v33 = vld [vmem:[%s2] sm:$0x1]
  %v35 = vlaneseq
  %v36 = vshrl.u32 %v35, 7
  %v37 = vsub.s32 0, %v36
  %v38 = vrot.slane %v33, %v37
  %v40 = vadd.f32 %v29, %v38
  %v41 = vadd.f32 %v30, %v38
  %v42 = vadd.f32 %v31, %v38
  %v43 = vadd.f32 %v32, %v38
  %v44 = vmax.f32 %v40, 0.0
  %v45 = vmax.f32 %v41, 0.0
  %v46 = vmax.f32 %v42, 0.0
  %v47 = vmax.f32 %v43, 0.0
  %v48 = vpack.c.bf16 %v45, %v44
  %v49 = vpack.c.bf16 %v47, %v46
  %v52 = vunpack.c.l.b16 %v48
  %v53 = vunpack.c.h.b16 %v48
  %v54 = vunpack.c.l.b16 %v49
  %v55 = vunpack.c.h.b16 %v49
  %v56 = vpack.c.b16 %v52, %v52
  %v57 = vpack.c.b16 %v53, %v53
  %v58 = vpack.c.b16 %v54, %v54
  %v59 = vpack.c.b16 %v55, %v55
  %64 = vst [vmem:[%s3] sm:$0xf] %v56
  %65 = vst [vmem:[%s3 + $0x4] sm:$0xf] %v57
  %66 = vst [vmem:[%s3 + $0x8] sm:$0xf] %v58
  %67 = vst [vmem:[%s3 + $0xc] sm:$0xf] %v59
  // Predicated region
  $region14: #{generator_forward.12} parent=0 // pred_check
    _
  $region15: #{generator_forward.12} parent=0 // pred_check_branch
    %69 = sbr.rel (0) target = $region17
  $region16: #{generator_forward.12} parent=0 // pred_region
    _
  $region17: #{generator_forward.12} parent=0 // pred_fallthru
    _
  // Predicated region
  $region18: #{generator_forward.12} parent=0 // pred_check
    _
  $region19: #{generator_forward.12} parent=0 // pred_check_branch
    %71 = sbr.rel (0) target = $region21
  $region20: #{generator_forward.12} parent=0 // pred_region
    _
  $region21: #{generator_forward.12} parent=0 // pred_fallthru
    _

// kernel: squeeze.108
$region0: #{squeeze.108}
  %s0 = inlined_call_operand.vmem [shape: f32[32], index: 0, kind: input, shape index: {}]
  %s1 = inlined_call_operand.vmem [shape: f32[4,8], index: 1, kind: output, shape index: {}]
  $region1: #{squeeze.108} parent=0
    #allocation0 [shape = 'u8[4096]{0}', space=vmem, size = 0x1000, scoped, tag = 'scoped mem for output reshape']
    #allocation1 [shape = 'u8[4096]{0}', space=vmem, size = 0x1000, scoped, tag = 'scoped mem for input reshape']
    %s3 = sshllo.u32 0, 1
    %v4 = vld [vmem:[%s0] sm:%s3]
    %5 = vst [vmem:[#allocation1] sm:%s3] %v4
    %v6 = vld [vmem:[#allocation1] sm:$0x1]
    %vm7 = vcmask 64512
    %8 = vst.msk [vmem:[#allocation0] sm:$0x1] %vm7, %v6
    %v9 = vld [vmem:[#allocation1] sm:$0x1]
    %10 = vrot.lane.b32.xlu0 %v9, 120
    %v11 = vpop.permute.xlu0 %10
    %vm12 = vcmask 64512
    %s13 = scalar_lea.vmem [#allocation0], 1
    %14 = vst.msk [vmem:[%s13] sm:$0x1] %vm12, %v11
    %v15 = vld [vmem:[#allocation1] sm:$0x1]
    %16 = vrot.lane.b32.xlu0 %v15, 112
    %v17 = vpop.permute.xlu0 %16
    %vm18 = vcmask 64512
    %s19 = scalar_lea.vmem [#allocation0], 2
    %20 = vst.msk [vmem:[%s19] sm:$0x1] %vm18, %v17
    %v21 = vld [vmem:[#allocation1] sm:$0x1]
    %22 = vrot.lane.b32.xlu0 %v21, 104
    %v23 = vpop.permute.xlu0 %22
    %vm24 = vcmask 64512
    %s25 = scalar_lea.vmem [#allocation0], 3
    %26 = vst.msk [vmem:[%s25] sm:$0x1] %vm24, %v23
    %s28 = sshllo.u32 0, 4
    %v30 = vld [vmem:[#allocation0] sm:%s28]
    %s31 = sshllo.u32 0, 4
    %32 = vst [vmem:[%s1] sm:%s31] %v30

// kernel: tile.68
$region0: #{tile.68}
  #allocation0 [shape = 's32[1]{0}', space=sflag, size = 0x4, scoped, tag = 'scoped memory for tile.68']
  %s0 = inlined_call_operand.vmem [shape: f32[8], index: 0, kind: input, shape index: {}]
  %s1 = inlined_call_operand.vmem [shape: f32[4,8], index: 1, kind: output, shape index: {}]
  // Predicated region
  $region2: #{tile.68} parent=0 // pred_check
    _
  $region3: #{tile.68} parent=0 // pred_check_branch
    %3 = sbr.rel (0) target = $region5
  $region4: #{tile.68} parent=0 // pred_region
    _
  $region5: #{tile.68} parent=0 // pred_fallthru
    _
  %v4 = vld [vmem:[%s0] ss:$0 sm:$0xff]
  %5 = vst [vmem:[%s1] sm:$0xf] %v4

// kernel: tile.69
$region0: #{tile.69}
  %s0 = inlined_call_operand.vmem [shape: f32[4,8], index: 0, kind: input, shape index: {}]
  %s1 = inlined_call_operand.vmem [shape: f32[32], index: 1, kind: output, shape index: {}]
  $region1: #{tile.69} parent=0
    #allocation0 [shape = 'u8[4096]{0}', space=vmem, size = 0x1000, scoped, tag = 'scoped mem for output reshape']
    #allocation1 [shape = 'u8[4096]{0}', space=vmem, size = 0x1000, scoped, tag = 'scoped mem for input reshape']
    %s3 = sshllo.u32 0, 4
    %v4 = vld [vmem:[%s0] sm:%s3]
    %5 = vst [vmem:[#allocation1] sm:%s3] %v4
    %v6 = vld [vmem:[#allocation1] sm:$0x1]
    %vm7 = vcmask 64512
    %8 = vst.msk [vmem:[#allocation0] sm:$0x1] %vm7, %v6
    %s9 = scalar_lea.vmem [#allocation1], 3
    %v10 = vld [vmem:[%s9] sm:$0x1]
    %11 = vrot.lane.b32.xlu0 %v10, 24
    %v12 = vpop.permute.xlu0 %11
    %vm13 = vcmask 261312
    %14 = vst.msk [vmem:[#allocation0] sm:$0x1] %vm13, %v12
    %s15 = scalar_lea.vmem [#allocation1], 2
    %v16 = vld [vmem:[%s15] sm:$0x1]
    %17 = vrot.lane.b32.xlu0 %v16, 16
    %v18 = vpop.permute.xlu0 %17
    %vm19 = vcmask 195712
    %20 = vst.msk [vmem:[#allocation0] sm:$0x1] %vm19, %v18
    %s21 = scalar_lea.vmem [#allocation1], 1
    %v22 = vld [vmem:[%s21] sm:$0x1]
    %23 = vrot.lane.b32.xlu0 %v22, 8
    %v24 = vpop.permute.xlu0 %23
    %vm25 = vcmask 130112
    %26 = vst.msk [vmem:[#allocation0] sm:$0x1] %vm25, %v24
    %s28 = sshllo.u32 0, 1
    %v30 = vld [vmem:[#allocation0] sm:%s28]
    %s31 = sshllo.u32 0, 1
    %32 = vst [vmem:[%s1] sm:%s31] %v30

// kernel: generator_forward.14
$region0: #{generator_forward.14}
  #allocation0 [shape = 'u32[]', space=smem, size = 0x4, offset = 0x4, fixed_abs, tag = 'smem constant byte address 0x4 - core index']
  #allocation1 [shape = 'u32[144,128]{1,0:T(1,128)}', space=vmem, size = 0x12000, scoped, tag = 'internal scratch']
  %s0 = inlined_call_operand.vmem [shape: bf16[128,128], index: 0, kind: input, shape index: {}]
  %s1 = inlined_call_operand.vmem [shape: f32[1,128], index: 1, kind: input, shape index: {}]
  %s2 = inlined_call_operand.vmem [shape: f32[1,128], index: 2, kind: input, shape index: {}]
  %s3 = inlined_call_operand.vmem [shape: bf16[128,128], index: 3, kind: output, shape index: {}]
  %s4 = sld [smem:[#allocation0]]
  $region22: #{generator_forward.14} parent=0
    _
  %s6 = ssub.s32 1, %s4
  %s7 = scalar_select 0, %s6, %s4
  // Predicated region
  $region2: #{generator_forward.14} parent=0 // pred_check
    _
  $region3: #{generator_forward.14} parent=0 // pred_check_branch
    %9 = sbr.rel (0) target = $region5
  $region4: #{generator_forward.14} parent=0 // pred_region
    _
  $region5: #{generator_forward.14} parent=0 // pred_fallthru
    _
  // Predicated region
  $region6: #{generator_forward.14} parent=0 // pred_check
    _
  $region7: #{generator_forward.14} parent=0 // pred_check_branch
    %11 = sbr.rel (0) target = $region9
  $region8: #{generator_forward.14} parent=0 // pred_region
    _
  $region9: #{generator_forward.14} parent=0 // pred_fallthru
    _
  // Predicated region
  $region10: #{generator_forward.14} parent=0 // pred_check
    _
  $region11: #{generator_forward.14} parent=0 // pred_check_branch
    %13 = sbr.rel (0) target = $region13
  $region12: #{generator_forward.14} parent=0 // pred_region
    _
  $region13: #{generator_forward.14} parent=0 // pred_fallthru
    _
  %v14 = vld [vmem:[%s0] sm:$0xf]
  %v15 = vld [vmem:[%s0 + $0x4] sm:$0xf]
  %v16 = vld [vmem:[%s0 + $0x8] sm:$0xf]
  %v17 = vld [vmem:[%s0 + $0xc] sm:$0xf]
  %v18 = vld [vmem:[%s0 + $0x10] sm:$0xf]
  %v19 = vld [vmem:[%s0 + $0x14] sm:$0xf]
  %v20 = vld [vmem:[%s0 + $0x18] sm:$0xf]
  %v21 = vld [vmem:[%s0 + $0x1c] sm:$0xf]
  %v22 = vld [vmem:[%s0 + $0x20] sm:$0xf]
  %v23 = vld [vmem:[%s0 + $0x24] sm:$0xf]
  %v24 = vld [vmem:[%s0 + $0x28] sm:$0xf]
  %v25 = vld [vmem:[%s0 + $0x2c] sm:$0xf]
  %v26 = vld [vmem:[%s0 + $0x30] sm:$0xf]
  %v27 = vld [vmem:[%s0 + $0x34] sm:$0xf]
  %v28 = vld [vmem:[%s0 + $0x38] sm:$0xf]
  %v29 = vld [vmem:[%s0 + $0x3c] sm:$0xf]
  %v30 = vunpack.c.l.bf16 %v14
  %v31 = vunpack.c.l.bf16 %v15
  %v32 = vunpack.c.l.bf16 %v16
  %v33 = vunpack.c.l.bf16 %v17
  %v34 = vunpack.c.l.bf16 %v18
  %v35 = vunpack.c.l.bf16 %v19
  %v36 = vunpack.c.l.bf16 %v20
  %v37 = vunpack.c.l.bf16 %v21
  %v38 = vunpack.c.l.bf16 %v22
  %v39 = vunpack.c.l.bf16 %v23
  %v40 = vunpack.c.l.bf16 %v24
  %v41 = vunpack.c.l.bf16 %v25
  %v42 = vunpack.c.l.bf16 %v26
  %v43 = vunpack.c.l.bf16 %v27
  %v44 = vunpack.c.l.bf16 %v28
  %v45 = vunpack.c.l.bf16 %v29
  %v46 = vld [vmem:[%s1] sm:$0x1]
  %v48 = vlaneseq
  %v49 = vshrl.u32 %v48, 7
  %v50 = vsub.s32 0, %v49
  %v51 = vrot.slane %v46, %v50
  %v53 = vmul.f32 %v30, %v51
  %v54 = vmul.f32 %v31, %v51
  %v55 = vmul.f32 %v32, %v51
  %v56 = vmul.f32 %v33, %v51
  %v57 = vmul.f32 %v34, %v51
  %v58 = vmul.f32 %v35, %v51
  %v59 = vmul.f32 %v36, %v51
  %v60 = vmul.f32 %v37, %v51
  %v61 = vmul.f32 %v38, %v51
  %v62 = vmul.f32 %v39, %v51
  %v63 = vmul.f32 %v40, %v51
  %v64 = vmul.f32 %v41, %v51
  %v65 = vmul.f32 %v42, %v51
  %v66 = vmul.f32 %v43, %v51
  %v67 = vmul.f32 %v44, %v51
  %v68 = vmul.f32 %v45, %v51
  %v69 = vld [vmem:[%s2] sm:$0x1]
  %v71 = vlaneseq
  %v72 = vshrl.u32 %v71, 7
  %v73 = vsub.s32 0, %v72
  %v74 = vrot.slane %v69, %v73
  %v76 = vadd.f32 %v53, %v74
  %v77 = vadd.f32 %v54, %v74
  %v78 = vadd.f32 %v55, %v74
  %v79 = vadd.f32 %v56, %v74
  %v80 = vadd.f32 %v57, %v74
  %v81 = vadd.f32 %v58, %v74
  %v82 = vadd.f32 %v59, %v74
  %v83 = vadd.f32 %v60, %v74
  %v84 = vadd.f32 %v61, %v74
  %v85 = vadd.f32 %v62, %v74
  %v86 = vadd.f32 %v63, %v74
  %v87 = vadd.f32 %v64, %v74
  %v88 = vadd.f32 %v65, %v74
  %v89 = vadd.f32 %v66, %v74
  %v90 = vadd.f32 %v67, %v74
  %v91 = vadd.f32 %v68, %v74
  %v92 = vmax.f32 %v76, 0.0
  %v93 = vmax.f32 %v77, 0.0
  %v94 = vmax.f32 %v78, 0.0
  %v95 = vmax.f32 %v79, 0.0
  %v96 = vmax.f32 %v80, 0.0
  %v97 = vmax.f32 %v81, 0.0
  %v98 = vmax.f32 %v82, 0.0
  %v99 = vmax.f32 %v83, 0.0
  %v100 = vmax.f32 %v84, 0.0
  %v101 = vmax.f32 %v85, 0.0
  %v102 = vmax.f32 %v86, 0.0
  %v103 = vmax.f32 %v87, 0.0
  %v104 = vmax.f32 %v88, 0.0
  %v105 = vmax.f32 %v89, 0.0
  %v106 = vmax.f32 %v90, 0.0
  %v107 = vmax.f32 %v91, 0.0
  %v108 = vpack.c.bf16 %v93, %v92
  %v109 = vpack.c.bf16 %v95, %v94
  %v110 = vpack.c.bf16 %v97, %v96
  %v111 = vpack.c.bf16 %v99, %v98
  %v112 = vpack.c.bf16 %v101, %v100
  %v113 = vpack.c.bf16 %v103, %v102
  %v114 = vpack.c.bf16 %v105, %v104
  %v115 = vpack.c.bf16 %v107, %v106
  %v124 = vunpack.c.l.b16 %v108
  %v125 = vunpack.c.h.b16 %v108
  %v126 = vunpack.c.l.b16 %v109
  %v127 = vunpack.c.h.b16 %v109
  %v128 = vunpack.c.l.b16 %v110
  %v129 = vunpack.c.h.b16 %v110
  %v130 = vunpack.c.l.b16 %v111
  %v131 = vunpack.c.h.b16 %v111
  %v132 = vunpack.c.l.b16 %v112
  %v133 = vunpack.c.h.b16 %v112
  %v134 = vunpack.c.l.b16 %v113
  %v135 = vunpack.c.h.b16 %v113
  %v136 = vunpack.c.l.b16 %v114
  %v137 = vunpack.c.h.b16 %v114
  %v138 = vunpack.c.l.b16 %v115
  %v139 = vunpack.c.h.b16 %v115
  %v140 = vpack.c.b16 %v124, %v124
  %v141 = vpack.c.b16 %v125, %v125
  %v142 = vpack.c.b16 %v126, %v126
  %v143 = vpack.c.b16 %v127, %v127
  %v144 = vpack.c.b16 %v128, %v128
  %v145 = vpack.c.b16 %v129, %v129
  %v146 = vpack.c.b16 %v130, %v130
  %v147 = vpack.c.b16 %v131, %v131
  %v148 = vpack.c.b16 %v132, %v132
  %v149 = vpack.c.b16 %v133, %v133
  %v150 = vpack.c.b16 %v134, %v134
  %v151 = vpack.c.b16 %v135, %v135
  %v152 = vpack.c.b16 %v136, %v136
  %v153 = vpack.c.b16 %v137, %v137
  %v154 = vpack.c.b16 %v138, %v138
  %v155 = vpack.c.b16 %v139, %v139
  %172 = vst [vmem:[%s3] sm:$0xf] %v140
  %173 = vst [vmem:[%s3 + $0x4] sm:$0xf] %v141
  %174 = vst [vmem:[%s3 + $0x8] sm:$0xf] %v142
  %175 = vst [vmem:[%s3 + $0xc] sm:$0xf] %v143
  %176 = vst [vmem:[%s3 + $0x10] sm:$0xf] %v144
  %177 = vst [vmem:[%s3 + $0x14] sm:$0xf] %v145
  %178 = vst [vmem:[%s3 + $0x18] sm:$0xf] %v146
  %179 = vst [vmem:[%s3 + $0x1c] sm:$0xf] %v147
  %180 = vst [vmem:[%s3 + $0x20] sm:$0xf] %v148
  %181 = vst [vmem:[%s3 + $0x24] sm:$0xf] %v149
  %182 = vst [vmem:[%s3 + $0x28] sm:$0xf] %v150
  %183 = vst [vmem:[%s3 + $0x2c] sm:$0xf] %v151
  %184 = vst [vmem:[%s3 + $0x30] sm:$0xf] %v152
  %185 = vst [vmem:[%s3 + $0x34] sm:$0xf] %v153
  %186 = vst [vmem:[%s3 + $0x38] sm:$0xf] %v154
  %187 = vst [vmem:[%s3 + $0x3c] sm:$0xf] %v155
  // Predicated region
  $region14: #{generator_forward.14} parent=0 // pred_check
    _
  $region15: #{generator_forward.14} parent=0 // pred_check_branch
    %189 = sbr.rel (0) target = $region17
  $region16: #{generator_forward.14} parent=0 // pred_region
    _
  $region17: #{generator_forward.14} parent=0 // pred_fallthru
    _
  // Predicated region
  $region18: #{generator_forward.14} parent=0 // pred_check
    _
  $region19: #{generator_forward.14} parent=0 // pred_check_branch
    %191 = sbr.rel (0) target = $region21
  $region20: #{generator_forward.14} parent=0 // pred_region
    _
  $region21: #{generator_forward.14} parent=0 // pred_fallthru
    _

// kernel: generator_forward.13
$region0: #{generator_forward.13}
  #allocation0 [shape = 'u32[]', space=smem, size = 0x4, offset = 0x4, fixed_abs, tag = 'smem constant byte address 0x4 - core index']
  #allocation1 [shape = 'u32[144,128]{1,0:T(1,128)}', space=vmem, size = 0x12000, scoped, tag = 'internal scratch']
  %s0 = inlined_call_operand.vmem [shape: bf16[128,144], index: 0, kind: input, shape index: {}]
  %s1 = inlined_call_operand.vmem [shape: bf16[144,128], index: 1, kind: input, shape index: {}]
  %s2 = inlined_call_operand.vmem [shape: bf16[128,128], index: 2, kind: output, shape index: {0}]
  %s3 = inlined_call_operand.vmem [shape: f32[1,8,128], index: 3, kind: output, shape index: {1}]
  %4 = xla_tuple %s2, %s3
  %s5 = sld [smem:[#allocation0]]
  $region26: #{generator_forward.13} parent=0
    _
  %s7 = ssub.s32 1, %s5
  %s8 = scalar_select 0, %s7, %s5
  // Predicated region
  $region2: #{generator_forward.13} parent=0 // pred_check
    _
  $region3: #{generator_forward.13} parent=0 // pred_check_branch
    %10 = sbr.rel (0) target = $region5
  $region4: #{generator_forward.13} parent=0 // pred_region
    _
  $region5: #{generator_forward.13} parent=0 // pred_fallthru
    _
  // Predicated region
  $region6: #{generator_forward.13} parent=0 // pred_check
    _
  $region7: #{generator_forward.13} parent=0 // pred_check_branch
    %12 = sbr.rel (0) target = $region9
  $region8: #{generator_forward.13} parent=0 // pred_region
    _
  $region9: #{generator_forward.13} parent=0 // pred_fallthru
    _
  %v14 = vld [vmem:[%s0] sm:$0xff]
  %v15 = vld [vmem:[%s0 + $0x8] sm:$0xff]
  %v16 = vld [vmem:[%s0 + $0x10] sm:$0xff]
  %v17 = vld [vmem:[%s0 + $0x18] sm:$0xff]
  %v18 = vld [vmem:[%s0 + $0x20] sm:$0xff]
  %v19 = vld [vmem:[%s0 + $0x28] sm:$0xff]
  %v20 = vld [vmem:[%s0 + $0x30] sm:$0xff]
  %v21 = vld [vmem:[%s0 + $0x38] sm:$0xff]
  %v22 = vld [vmem:[%s0 + $0x40] sm:$0xff]
  %v23 = vld [vmem:[%s0 + $0x48] sm:$0xff]
  %v24 = vld [vmem:[%s0 + $0x50] sm:$0xff]
  %v25 = vld [vmem:[%s0 + $0x58] sm:$0xff]
  %v26 = vld [vmem:[%s0 + $0x60] sm:$0xff]
  %v27 = vld [vmem:[%s0 + $0x68] sm:$0xff]
  %v28 = vld [vmem:[%s0 + $0x70] sm:$0xff]
  %v29 = vld [vmem:[%s0 + $0x78] sm:$0xff]
  %v30 = vld [vmem:[%s1] sm:$0xf]
  %v31 = vld [vmem:[%s1 + $0x4] sm:$0xf]
  %v32 = vld [vmem:[%s1 + $0x8] sm:$0xf]
  %v33 = vld [vmem:[%s1 + $0xc] sm:$0xf]
  %v34 = vld [vmem:[%s1 + $0x10] sm:$0xf]
  %v35 = vld [vmem:[%s1 + $0x14] sm:$0xf]
  %v36 = vld [vmem:[%s1 + $0x18] sm:$0xf]
  %v37 = vld [vmem:[%s1 + $0x1c] sm:$0xf]
  %v38 = vld [vmem:[%s1 + $0x20] sm:$0xf]
  %v39 = vld [vmem:[%s1 + $0x24] sm:$0xf]
  %v40 = vld [vmem:[%s1 + $0x28] sm:$0xf]
  %v41 = vld [vmem:[%s1 + $0x2c] sm:$0xf]
  %v42 = vld [vmem:[%s1 + $0x30] sm:$0xf]
  %v43 = vld [vmem:[%s1 + $0x34] sm:$0xf]
  %v44 = vld [vmem:[%s1 + $0x38] sm:$0xf]
  %v45 = vld [vmem:[%s1 + $0x3c] sm:$0xf]
  %v46 = vld [vmem:[%s1 + $0x40] sm:$0xf]
  %v47 = vld [vmem:[%s1 + $0x44] sm:$0xf]
  %v64 = vunpack.c.l.b16 %v14
  %v65 = vunpack.c.h.b16 %v14
  %v66 = vunpack.c.l.b16 %v15
  %v67 = vunpack.c.h.b16 %v15
  %v68 = vunpack.c.l.b16 %v16
  %v69 = vunpack.c.h.b16 %v16
  %v70 = vunpack.c.l.b16 %v17
  %v71 = vunpack.c.h.b16 %v17
  %v72 = vunpack.c.l.b16 %v18
  %v73 = vunpack.c.h.b16 %v18
  %v74 = vunpack.c.l.b16 %v19
  %v75 = vunpack.c.h.b16 %v19
  %v76 = vunpack.c.l.b16 %v20
  %v77 = vunpack.c.h.b16 %v20
  %v78 = vunpack.c.l.b16 %v21
  %v79 = vunpack.c.h.b16 %v21
  %v80 = vunpack.c.l.b16 %v22
  %v81 = vunpack.c.h.b16 %v22
  %v82 = vunpack.c.l.b16 %v23
  %v83 = vunpack.c.h.b16 %v23
  %v84 = vunpack.c.l.b16 %v24
  %v85 = vunpack.c.h.b16 %v24
  %v86 = vunpack.c.l.b16 %v25
  %v87 = vunpack.c.h.b16 %v25
  %v88 = vunpack.c.l.b16 %v26
  %v89 = vunpack.c.h.b16 %v26
  %v90 = vunpack.c.l.b16 %v27
  %v91 = vunpack.c.h.b16 %v27
  %v92 = vunpack.c.l.b16 %v28
  %v93 = vunpack.c.h.b16 %v28
  %v94 = vunpack.c.l.b16 %v29
  %v95 = vunpack.c.h.b16 %v29
  %v96 = vpack.c.b16 %v66, %v64
  %v97 = vpack.c.b16 %v67, %v65
  %v98 = vpack.c.b16 %v70, %v68
  %v99 = vpack.c.b16 %v71, %v69
  %v100 = vpack.c.b16 %v74, %v72
  %v101 = vpack.c.b16 %v75, %v73
  %v102 = vpack.c.b16 %v78, %v76
  %v103 = vpack.c.b16 %v79, %v77
  %v104 = vpack.c.b16 %v82, %v80
  %v105 = vpack.c.b16 %v83, %v81
  %v106 = vpack.c.b16 %v86, %v84
  %v107 = vpack.c.b16 %v87, %v85
  %v108 = vpack.c.b16 %v90, %v88
  %v109 = vpack.c.b16 %v91, %v89
  %v110 = vpack.c.b16 %v94, %v92
  %v111 = vpack.c.b16 %v95, %v93
  %v138 = vunpack.c.l.b16 %v30
  %v139 = vunpack.c.l.b16 %v31
  %v140 = vunpack.c.l.b16 %v32
  %v141 = vunpack.c.l.b16 %v33
  %v142 = vunpack.c.l.b16 %v34
  %v143 = vunpack.c.l.b16 %v35
  %v144 = vunpack.c.l.b16 %v36
  %v145 = vunpack.c.l.b16 %v37
  %v146 = vunpack.c.l.b16 %v38
  %v147 = vunpack.c.l.b16 %v39
  %v148 = vunpack.c.l.b16 %v40
  %v149 = vunpack.c.l.b16 %v41
  %v150 = vunpack.c.l.b16 %v42
  %v151 = vunpack.c.l.b16 %v43
  %v152 = vunpack.c.l.b16 %v44
  %v153 = vunpack.c.l.b16 %v45
  %v154 = vunpack.c.l.b16 %v46
  %v155 = vunpack.c.l.b16 %v47
  %v156 = vpack.c.b16 %v139, %v138
  %v157 = vpack.c.b16 %v141, %v140
  %v158 = vpack.c.b16 %v143, %v142
  %v159 = vpack.c.b16 %v145, %v144
  %v160 = vpack.c.b16 %v147, %v146
  %v161 = vpack.c.b16 %v149, %v148
  %v162 = vpack.c.b16 %v151, %v150
  %v163 = vpack.c.b16 %v153, %v152
  %v164 = vpack.c.b16 %v155, %v154
  %vm174 = vcmask 130048
  %v176 = vsel %vm174, %v97, 0
  %v179 = vsel %vm174, %v99, 0
  %v182 = vsel %vm174, %v101, 0
  %v185 = vsel %vm174, %v103, 0
  %v188 = vsel %vm174, %v105, 0
  %v191 = vsel %vm174, %v107, 0
  %v194 = vsel %vm174, %v109, 0
  %v197 = vsel %vm174, %v111, 0
  %199 = vmatprep.subr.bf16.mxu0 0
  %200 = vmatpush1.bf16.msra.mxu0 %v156
  %201 = vmatprep.subr.bf16.mxu0 0
  %202 = vmatpush1.bf16.msra.mxu0 %v157
  %203 = vmatprep.subr.bf16.mxu0 0
  %204 = vmatpush1.bf16.msra.mxu0 %v158
  %205 = vmatprep.subr.bf16.mxu0 0
  %206 = vmatpush1.bf16.msra.mxu0 %v159
  %207 = vmatprep.subr.bf16.mxu0 0
  %208 = vmatpush1.bf16.msra.mxu0 %v160
  %209 = vmatprep.subr.bf16.mxu0 0
  %210 = vmatpush1.bf16.msra.mxu0 %v161
  %211 = vmatprep.subr.bf16.mxu0 0
  %212 = vmatpush1.bf16.msra.mxu0 %v162
  %213 = vmatprep.subr.bf16.mxu0 0
  %214 = vmatpush1.bf16.msra.mxu0 %v163
  %215 = vmatprep.subr.bf16.mxu0 0
  %216 = vmatpush1.bf16.msra.mxu0 %v164
  %217 = vmatprep.subr.bf16.mxu0 0
  %218 = vmatpush1.bf16.msra.mxu0 0
  %219 = vmatprep.subr.bf16.mxu0 0
  %220 = vmatpush1.bf16.msra.mxu0 0
  %221 = vmatprep.subr.bf16.mxu0 0
  %222 = vmatpush1.bf16.msra.mxu0 0
  %223 = vmatprep.subr.bf16.mxu0 0
  %224 = vmatpush1.bf16.msra.mxu0 0
  %225 = vmatprep.subr.bf16.mxu0 0
  %226 = vmatpush1.bf16.msra.mxu0 0
  %227 = vmatprep.subr.bf16.mxu0 0
  %228 = vmatpush1.bf16.msra.mxu0 0
  %229 = vmatprep.subr.bf16.mxu0 0
  %230 = vmatpush1.bf16.msra.mxu0 0
  %231 = vmatprep.mubr.bf16.mxu0 %v176
  %232 = vmatmul.mubr.bf16.gmra.mrb[0].mxu0 %v96
  %v233 = vpop.f32.mrb[0].mxu0
  %v234 = vadd.f32 0.0, %v233
  %v235 = vpop.f32.mrb[0].mxu0
  %v236 = vpop.f32.mrb[0].mxu0
  %v237 = vadd.f32 0.0, %v236
  %v238 = vpop.f32.mrb[0].mxu0
  %239 = vmatprep.mubr.bf16.mxu0 %v179
  %240 = vmatmul.mubr.bf16.gmra.mrb[0].mxu0 %v98
  %v241 = vpop.f32.mrb[0].mxu0
  %v242 = vadd.f32 0.0, %v241
  %v243 = vpop.f32.mrb[0].mxu0
  %v244 = vpop.f32.mrb[0].mxu0
  %v245 = vadd.f32 0.0, %v244
  %v246 = vpop.f32.mrb[0].mxu0
  %247 = vmatprep.mubr.bf16.mxu0 %v182
  %248 = vmatmul.mubr.bf16.gmra.mrb[0].mxu0 %v100
  %v249 = vpop.f32.mrb[0].mxu0
  %v250 = vadd.f32 0.0, %v249
  %v251 = vpop.f32.mrb[0].mxu0
  %v252 = vpop.f32.mrb[0].mxu0
  %v253 = vadd.f32 0.0, %v252
  %v254 = vpop.f32.mrb[0].mxu0
  %255 = vmatprep.mubr.bf16.mxu0 %v185
  %256 = vmatmul.mubr.bf16.gmra.mrb[0].mxu0 %v102
  %v257 = vpop.f32.mrb[0].mxu0
  %v258 = vadd.f32 0.0, %v257
  %v259 = vpop.f32.mrb[0].mxu0
  %v260 = vpop.f32.mrb[0].mxu0
  %v261 = vadd.f32 0.0, %v260
  %v262 = vpop.f32.mrb[0].mxu0
  %263 = vmatprep.mubr.bf16.mxu0 %v188
  %264 = vmatmul.mubr.bf16.gmra.mrb[0].mxu0 %v104
  %v265 = vpop.f32.mrb[0].mxu0
  %v266 = vadd.f32 0.0, %v265
  %v267 = vpop.f32.mrb[0].mxu0
  %v268 = vpop.f32.mrb[0].mxu0
  %v269 = vadd.f32 0.0, %v268
  %v270 = vpop.f32.mrb[0].mxu0
  %271 = vmatprep.mubr.bf16.mxu0 %v191
  %272 = vmatmul.mubr.bf16.gmra.mrb[0].mxu0 %v106
  %v273 = vpop.f32.mrb[0].mxu0
  %v274 = vadd.f32 0.0, %v273
  %v275 = vpop.f32.mrb[0].mxu0
  %v276 = vpop.f32.mrb[0].mxu0
  %v277 = vadd.f32 0.0, %v276
  %v278 = vpop.f32.mrb[0].mxu0
  %279 = vmatprep.mubr.bf16.mxu0 %v194
  %280 = vmatmul.mubr.bf16.gmra.mrb[0].mxu0 %v108
  %v281 = vpop.f32.mrb[0].mxu0
  %v282 = vadd.f32 0.0, %v281
  %v283 = vpop.f32.mrb[0].mxu0
  %v284 = vpop.f32.mrb[0].mxu0
  %v285 = vadd.f32 0.0, %v284
  %v286 = vpop.f32.mrb[0].mxu0
  %287 = vmatprep.mubr.bf16.mxu0 %v197
  %288 = vmatmul.mubr.bf16.gmra.mrb[0].mxu0 %v110
  %v289 = vpop.f32.mrb[0].mxu0
  %v290 = vadd.f32 0.0, %v289
  %v291 = vpop.f32.mrb[0].mxu0
  %v292 = vpop.f32.mrb[0].mxu0
  %v293 = vadd.f32 0.0, %v292
  %v294 = vpop.f32.mrb[0].mxu0
  %295 = vdwg.mxu0
  %v296 = vpack.c.bf16 %v237, %v234
  %v297 = vpack.c.bf16 %v245, %v242
  %v298 = vpack.c.bf16 %v253, %v250
  %v299 = vpack.c.bf16 %v261, %v258
  %v300 = vpack.c.bf16 %v269, %v266
  %v301 = vpack.c.bf16 %v277, %v274
  %v302 = vpack.c.bf16 %v285, %v282
  %v303 = vpack.c.bf16 %v293, %v290
  %v312 = vunpack.c.l.b16 %v296
  %v313 = vunpack.c.h.b16 %v296
  %v314 = vunpack.c.l.b16 %v297
  %v315 = vunpack.c.h.b16 %v297
  %v316 = vunpack.c.l.b16 %v298
  %v317 = vunpack.c.h.b16 %v298
  %v318 = vunpack.c.l.b16 %v299
  %v319 = vunpack.c.h.b16 %v299
  %v320 = vunpack.c.l.b16 %v300
  %v321 = vunpack.c.h.b16 %v300
  %v322 = vunpack.c.l.b16 %v301
  %v323 = vunpack.c.h.b16 %v301
  %v324 = vunpack.c.l.b16 %v302
  %v325 = vunpack.c.h.b16 %v302
  %v326 = vunpack.c.l.b16 %v303
  %v327 = vunpack.c.h.b16 %v303
  %v328 = vpack.c.b16 %v312, %v312
  %v329 = vpack.c.b16 %v313, %v313
  %v330 = vpack.c.b16 %v314, %v314
  %v331 = vpack.c.b16 %v315, %v315
  %v332 = vpack.c.b16 %v316, %v316
  %v333 = vpack.c.b16 %v317, %v317
  %v334 = vpack.c.b16 %v318, %v318
  %v335 = vpack.c.b16 %v319, %v319
  %v336 = vpack.c.b16 %v320, %v320
  %v337 = vpack.c.b16 %v321, %v321
  %v338 = vpack.c.b16 %v322, %v322
  %v339 = vpack.c.b16 %v323, %v323
  %v340 = vpack.c.b16 %v324, %v324
  %v341 = vpack.c.b16 %v325, %v325
  %v342 = vpack.c.b16 %v326, %v326
  %v343 = vpack.c.b16 %v327, %v327
  %360 = vst [vmem:[%s2] sm:$0xf] %v328
  %361 = vst [vmem:[%s2 + $0x4] sm:$0xf] %v329
  %362 = vst [vmem:[%s2 + $0x8] sm:$0xf] %v330
  %363 = vst [vmem:[%s2 + $0xc] sm:$0xf] %v331
  %364 = vst [vmem:[%s2 + $0x10] sm:$0xf] %v332
  %365 = vst [vmem:[%s2 + $0x14] sm:$0xf] %v333
  %366 = vst [vmem:[%s2 + $0x18] sm:$0xf] %v334
  %367 = vst [vmem:[%s2 + $0x1c] sm:$0xf] %v335
  %368 = vst [vmem:[%s2 + $0x20] sm:$0xf] %v336
  %369 = vst [vmem:[%s2 + $0x24] sm:$0xf] %v337
  %370 = vst [vmem:[%s2 + $0x28] sm:$0xf] %v338
  %371 = vst [vmem:[%s2 + $0x2c] sm:$0xf] %v339
  %372 = vst [vmem:[%s2 + $0x30] sm:$0xf] %v340
  %373 = vst [vmem:[%s2 + $0x34] sm:$0xf] %v341
  %374 = vst [vmem:[%s2 + $0x38] sm:$0xf] %v342
  %375 = vst [vmem:[%s2 + $0x3c] sm:$0xf] %v343
  %v376 = vadd.f32 %v234, %v237
  %v377 = vadd.f32 %v376, %v242
  %v378 = vadd.f32 %v377, %v245
  %v379 = vadd.f32 %v378, %v250
  %v380 = vadd.f32 %v379, %v253
  %v381 = vadd.f32 %v380, %v258
  %v382 = vadd.f32 %v381, %v261
  %v383 = vadd.f32 %v382, %v266
  %v384 = vadd.f32 %v383, %v269
  %v385 = vadd.f32 %v384, %v274
  %v386 = vadd.f32 %v385, %v277
  %v387 = vadd.f32 %v386, %v282
  %v388 = vadd.f32 %v387, %v285
  %v389 = vadd.f32 %v388, %v290
  %v390 = vadd.f32 %v389, %v293
  %v391 = vrot.slane %v390, 4
  %v392 = vadd.f32 %v390, %v391
  %v393 = vrot.slane %v392, 2
  %v394 = vadd.f32 %v392, %v393
  %v395 = vrot.slane %v394, 1
  %v396 = vadd.f32 %v394, %v395
  %v397 = vmul.f32 %v234, %v234
  %v398 = vmul.f32 %v237, %v237
  %v399 = vmul.f32 %v242, %v242
  %v400 = vmul.f32 %v245, %v245
  %v401 = vmul.f32 %v250, %v250
  %v402 = vmul.f32 %v253, %v253
  %v403 = vmul.f32 %v258, %v258
  %v404 = vmul.f32 %v261, %v261
  %v405 = vmul.f32 %v266, %v266
  %v406 = vmul.f32 %v269, %v269
  %v407 = vmul.f32 %v274, %v274
  %v408 = vmul.f32 %v277, %v277
  %v409 = vmul.f32 %v282, %v282
  %v410 = vmul.f32 %v285, %v285
  %v411 = vmul.f32 %v290, %v290
  %v412 = vmul.f32 %v293, %v293
  %v413 = vadd.f32 %v397, %v398
  %v414 = vadd.f32 %v413, %v399
  %v415 = vadd.f32 %v414, %v400
  %v416 = vadd.f32 %v415, %v401
  %v417 = vadd.f32 %v416, %v402
  %v418 = vadd.f32 %v417, %v403
  %v419 = vadd.f32 %v418, %v404
  %v420 = vadd.f32 %v419, %v405
  %v421 = vadd.f32 %v420, %v406
  %v422 = vadd.f32 %v421, %v407
  %v423 = vadd.f32 %v422, %v408
  %v424 = vadd.f32 %v423, %v409
  %v425 = vadd.f32 %v424, %v410
  %v426 = vadd.f32 %v425, %v411
  %v427 = vadd.f32 %v426, %v412
  %v428 = vrot.slane %v427, 4
  %v429 = vadd.f32 %v427, %v428
  %v430 = vrot.slane %v429, 2
  %v431 = vadd.f32 %v429, %v430
  %v432 = vrot.slane %v431, 1
  %v433 = vadd.f32 %v431, %v432
  %vm434 = vcmask 1040384
  %v435 = vsel %vm434, %v396, %v433
  %vm436 = vcmask 1041408
  %v437 = vsel %vm436, %v435, 0.0
  %438 = vst [vmem:[%s3] sm:$0xff] %v437
  // Predicated region
  $region10: #{generator_forward.13} parent=0 // pred_check
    _
  $region11: #{generator_forward.13} parent=0 // pred_check_branch
    %440 = sbr.rel (0) target = $region13
  $region12: #{generator_forward.13} parent=0 // pred_region
    _
  $region13: #{generator_forward.13} parent=0 // pred_fallthru
    _
  // Predicated region
  $region14: #{generator_forward.13} parent=0 // pred_check
    _
  $region15: #{generator_forward.13} parent=0 // pred_check_branch
    %442 = sbr.rel (0) target = $region17
  $region16: #{generator_forward.13} parent=0 // pred_region
    _
  $region17: #{generator_forward.13} parent=0 // pred_fallthru
    _
  // Predicated region
  $region18: #{generator_forward.13} parent=0 // pred_check
    _
  $region19: #{generator_forward.13} parent=0 // pred_check_branch
    %444 = sbr.rel (0) target = $region21
  $region20: #{generator_forward.13} parent=0 // pred_region
    _
  $region21: #{generator_forward.13} parent=0 // pred_fallthru
    _
  // Predicated region
  $region22: #{generator_forward.13} parent=0 // pred_check
    _
  $region23: #{generator_forward.13} parent=0 // pred_check_branch
    %446 = sbr.rel (0) target = $region25
  $region24: #{generator_forward.13} parent=0 // pred_region
    _
  $region25: #{generator_forward.13} parent=0 // pred_fallthru
    _

// kernel: squeeze.126
$region0: #{squeeze.126}
  %s0 = inlined_call_operand.vmem [shape: f32[16], index: 0, kind: input, shape index: {}]
  %s1 = inlined_call_operand.vmem [shape: f32[4,4], index: 1, kind: output, shape index: {}]
  $region1: #{squeeze.126} parent=0
    #allocation0 [shape = 'u8[4096]{0}', space=vmem, size = 0x1000, scoped, tag = 'scoped mem for output reshape']
    #allocation1 [shape = 'u8[4096]{0}', space=vmem, size = 0x1000, scoped, tag = 'scoped mem for input reshape']
    %s3 = sshllo.u32 0, 1
    %v4 = vld [vmem:[%s0] sm:%s3]
    %5 = vst [vmem:[#allocation1] sm:%s3] %v4
    %v6 = vld [vmem:[#allocation1] sm:$0x1]
    %vm7 = vcmask 31744
    %8 = vst.msk [vmem:[#allocation0] sm:$0x1] %vm7, %v6
    %v9 = vld [vmem:[#allocation1] sm:$0x1]
    %10 = vrot.lane.b32.xlu0 %v9, 124
    %v11 = vpop.permute.xlu0 %10
    %vm12 = vcmask 31744
    %s13 = scalar_lea.vmem [#allocation0], 1
    %14 = vst.msk [vmem:[%s13] sm:$0x1] %vm12, %v11
    %v15 = vld [vmem:[#allocation1] sm:$0x1]
    %16 = vrot.lane.b32.xlu0 %v15, 120
    %v17 = vpop.permute.xlu0 %16
    %vm18 = vcmask 31744
    %s19 = scalar_lea.vmem [#allocation0], 2
    %20 = vst.msk [vmem:[%s19] sm:$0x1] %vm18, %v17
    %v21 = vld [vmem:[#allocation1] sm:$0x1]
    %22 = vrot.lane.b32.xlu0 %v21, 116
    %v23 = vpop.permute.xlu0 %22
    %vm24 = vcmask 31744
    %s25 = scalar_lea.vmem [#allocation0], 3
    %26 = vst.msk [vmem:[%s25] sm:$0x1] %vm24, %v23
    %s28 = sshllo.u32 0, 4
    %v30 = vld [vmem:[#allocation0] sm:%s28]
    %s31 = sshllo.u32 0, 4
    %32 = vst [vmem:[%s1] sm:%s31] %v30

// kernel: tile.78
$region0: #{tile.78}
  #allocation0 [shape = 's32[1]{0}', space=sflag, size = 0x4, scoped, tag = 'scoped memory for tile.78']
  %s0 = inlined_call_operand.vmem [shape: f32[4], index: 0, kind: input, shape index: {}]
  %s1 = inlined_call_operand.vmem [shape: f32[4,4], index: 1, kind: output, shape index: {}]
  // Predicated region
  $region2: #{tile.78} parent=0 // pred_check
    _
  $region3: #{tile.78} parent=0 // pred_check_branch
    %3 = sbr.rel (0) target = $region5
  $region4: #{tile.78} parent=0 // pred_region
    _
  $region5: #{tile.78} parent=0 // pred_fallthru
    _
  %v4 = vld [vmem:[%s0] ss:$0 sm:$0xff]
  %5 = vst [vmem:[%s1] sm:$0xf] %v4

// kernel: tile.79
$region0: #{tile.79}
  %s0 = inlined_call_operand.vmem [shape: f32[4,4], index: 0, kind: input, shape index: {}]
  %s1 = inlined_call_operand.vmem [shape: f32[16], index: 1, kind: output, shape index: {}]
  $region1: #{tile.79} parent=0
    #allocation0 [shape = 'u8[4096]{0}', space=vmem, size = 0x1000, scoped, tag = 'scoped mem for output reshape']
    #allocation1 [shape = 'u8[4096]{0}', space=vmem, size = 0x1000, scoped, tag = 'scoped mem for input reshape']
    %s3 = sshllo.u32 0, 4
    %v4 = vld [vmem:[%s0] sm:%s3]
    %5 = vst [vmem:[#allocation1] sm:%s3] %v4
    %v6 = vld [vmem:[#allocation1] sm:$0x1]
    %vm7 = vcmask 31744
    %8 = vst.msk [vmem:[#allocation0] sm:$0x1] %vm7, %v6
    %s9 = scalar_lea.vmem [#allocation1], 3
    %v10 = vld [vmem:[%s9] sm:$0x1]
    %11 = vrot.lane.b32.xlu0 %v10, 12
    %v12 = vpop.permute.xlu0 %11
    %vm13 = vcmask 130144
    %14 = vst.msk [vmem:[#allocation0] sm:$0x1] %vm13, %v12
    %s15 = scalar_lea.vmem [#allocation1], 2
    %v16 = vld [vmem:[%s15] sm:$0x1]
    %17 = vrot.lane.b32.xlu0 %v16, 8
    %v18 = vpop.permute.xlu0 %17
    %vm19 = vcmask 97344
    %20 = vst.msk [vmem:[#allocation0] sm:$0x1] %vm19, %v18
    %s21 = scalar_lea.vmem [#allocation1], 1
    %v22 = vld [vmem:[%s21] sm:$0x1]
    %23 = vrot.lane.b32.xlu0 %v22, 4
    %v24 = vpop.permute.xlu0 %23
    %vm25 = vcmask 64544
    %26 = vst.msk [vmem:[#allocation0] sm:$0x1] %vm25, %v24
    %s28 = sshllo.u32 0, 1
    %v30 = vld [vmem:[#allocation0] sm:%s28]
    %s31 = sshllo.u32 0, 1
    %32 = vst [vmem:[%s1] sm:%s31] %v30

// kernel: generator_forward.16
$region0: #{generator_forward.16}
  #allocation0 [shape = 'u32[]', space=smem, size = 0x4, offset = 0x4, fixed_abs, tag = 'smem constant byte address 0x4 - core index']
  #allocation1 [shape = 'u32[144,128]{1,0:T(1,128)}', space=vmem, size = 0x12000, scoped, tag = 'internal scratch']
  %s0 = inlined_call_operand.vmem [shape: bf16[512,128], index: 0, kind: input, shape index: {}]
  %s1 = inlined_call_operand.vmem [shape: f32[1,128], index: 1, kind: input, shape index: {}]
  %s2 = inlined_call_operand.vmem [shape: f32[1,128], index: 2, kind: input, shape index: {}]
  %s3 = inlined_call_operand.vmem [shape: bf16[512,128], index: 3, kind: output, shape index: {}]
  %s4 = sld [smem:[#allocation0]]
  $region22: #{generator_forward.16} parent=0
    _
  %s6 = ssub.s32 1, %s4
  %s7 = scalar_select 0, %s6, %s4
  // Predicated region
  $region2: #{generator_forward.16} parent=0 // pred_check
    _
  $region3: #{generator_forward.16} parent=0 // pred_check_branch
    %9 = sbr.rel (0) target = $region5
  $region4: #{generator_forward.16} parent=0 // pred_region
    _
  $region5: #{generator_forward.16} parent=0 // pred_fallthru
    _
  // Predicated region
  $region6: #{generator_forward.16} parent=0 // pred_check
    _
  $region7: #{generator_forward.16} parent=0 // pred_check_branch
    %11 = sbr.rel (0) target = $region9
  $region8: #{generator_forward.16} parent=0 // pred_region
    _
  $region9: #{generator_forward.16} parent=0 // pred_fallthru
    _
  // Predicated region
  $region10: #{generator_forward.16} parent=0 // pred_check
    _
  $region11: #{generator_forward.16} parent=0 // pred_check_branch
    %13 = sbr.rel (0) target = $region13
  $region12: #{generator_forward.16} parent=0 // pred_region
    _
  $region13: #{generator_forward.16} parent=0 // pred_fallthru
    _
  %v14 = vld [vmem:[%s0] sm:$0xf]
  %v15 = vld [vmem:[%s0 + $0x4] sm:$0xf]
  %v16 = vld [vmem:[%s0 + $0x8] sm:$0xf]
  %v17 = vld [vmem:[%s0 + $0xc] sm:$0xf]
  %v18 = vld [vmem:[%s0 + $0x10] sm:$0xf]
  %v19 = vld [vmem:[%s0 + $0x14] sm:$0xf]
  %v20 = vld [vmem:[%s0 + $0x18] sm:$0xf]
  %v21 = vld [vmem:[%s0 + $0x1c] sm:$0xf]
  %v22 = vld [vmem:[%s0 + $0x20] sm:$0xf]
  %v23 = vld [vmem:[%s0 + $0x24] sm:$0xf]
  %v24 = vld [vmem:[%s0 + $0x28] sm:$0xf]
  %v25 = vld [vmem:[%s0 + $0x2c] sm:$0xf]
  %v26 = vld [vmem:[%s0 + $0x30] sm:$0xf]
  %v27 = vld [vmem:[%s0 + $0x34] sm:$0xf]
  %v28 = vld [vmem:[%s0 + $0x38] sm:$0xf]
  %v29 = vld [vmem:[%s0 + $0x3c] sm:$0xf]
  %v30 = vld [vmem:[%s0 + $0x40] sm:$0xf]
  %v31 = vld [vmem:[%s0 + $0x44] sm:$0xf]
  %v32 = vld [vmem:[%s0 + $0x48] sm:$0xf]
  %v33 = vld [vmem:[%s0 + $0x4c] sm:$0xf]
  %v34 = vld [vmem:[%s0 + $0x50] sm:$0xf]
  %v35 = vld [vmem:[%s0 + $0x54] sm:$0xf]
  %v36 = vld [vmem:[%s0 + $0x58] sm:$0xf]
  %v37 = vld [vmem:[%s0 + $0x5c] sm:$0xf]
  %v38 = vld [vmem:[%s0 + $0x60] sm:$0xf]
  %v39 = vld [vmem:[%s0 + $0x64] sm:$0xf]
  %v40 = vld [vmem:[%s0 + $0x68] sm:$0xf]
  %v41 = vld [vmem:[%s0 + $0x6c] sm:$0xf]
  %v42 = vld [vmem:[%s0 + $0x70] sm:$0xf]
  %v43 = vld [vmem:[%s0 + $0x74] sm:$0xf]
  %v44 = vld [vmem:[%s0 + $0x78] sm:$0xf]
  %v45 = vld [vmem:[%s0 + $0x7c] sm:$0xf]
  %v46 = vld [vmem:[%s0 + $0x80] sm:$0xf]
  %v47 = vld [vmem:[%s0 + $0x84] sm:$0xf]
  %v48 = vld [vmem:[%s0 + $0x88] sm:$0xf]
  %v49 = vld [vmem:[%s0 + $0x8c] sm:$0xf]
  %v50 = vld [vmem:[%s0 + $0x90] sm:$0xf]
  %v51 = vld [vmem:[%s0 + $0x94] sm:$0xf]
  %v52 = vld [vmem:[%s0 + $0x98] sm:$0xf]
  %v53 = vld [vmem:[%s0 + $0x9c] sm:$0xf]
  %v54 = vld [vmem:[%s0 + $0xa0] sm:$0xf]
  %v55 = vld [vmem:[%s0 + $0xa4] sm:$0xf]
  %v56 = vld [vmem:[%s0 + $0xa8] sm:$0xf]
  %v57 = vld [vmem:[%s0 + $0xac] sm:$0xf]
  %v58 = vld [vmem:[%s0 + $0xb0] sm:$0xf]
  %v59 = vld [vmem:[%s0 + $0xb4] sm:$0xf]
  %v60 = vld [vmem:[%s0 + $0xb8] sm:$0xf]
  %v61 = vld [vmem:[%s0 + $0xbc] sm:$0xf]
  %v62 = vld [vmem:[%s0 + $0xc0] sm:$0xf]
  %v63 = vld [vmem:[%s0 + $0xc4] sm:$0xf]
  %v64 = vld [vmem:[%s0 + $0xc8] sm:$0xf]
  %v65 = vld [vmem:[%s0 + $0xcc] sm:$0xf]
  %v66 = vld [vmem:[%s0 + $0xd0] sm:$0xf]
  %v67 = vld [vmem:[%s0 + $0xd4] sm:$0xf]
  %v68 = vld [vmem:[%s0 + $0xd8] sm:$0xf]
  %v69 = vld [vmem:[%s0 + $0xdc] sm:$0xf]
  %v70 = vld [vmem:[%s0 + $0xe0] sm:$0xf]
  %v71 = vld [vmem:[%s0 + $0xe4] sm:$0xf]
  %v72 = vld [vmem:[%s0 + $0xe8] sm:$0xf]
  %v73 = vld [vmem:[%s0 + $0xec] sm:$0xf]
  %v74 = vld [vmem:[%s0 + $0xf0] sm:$0xf]
  %v75 = vld [vmem:[%s0 + $0xf4] sm:$0xf]
  %v76 = vld [vmem:[%s0 + $0xf8] sm:$0xf]
  %v77 = vld [vmem:[%s0 + $0xfc] sm:$0xf]
  %v78 = vunpack.c.l.bf16 %v14
  %v79 = vunpack.c.l.bf16 %v15
  %v80 = vunpack.c.l.bf16 %v16
  %v81 = vunpack.c.l.bf16 %v17
  %v82 = vunpack.c.l.bf16 %v18
  %v83 = vunpack.c.l.bf16 %v19
  %v84 = vunpack.c.l.bf16 %v20
  %v85 = vunpack.c.l.bf16 %v21
  %v86 = vunpack.c.l.bf16 %v22
  %v87 = vunpack.c.l.bf16 %v23
  %v88 = vunpack.c.l.bf16 %v24
  %v89 = vunpack.c.l.bf16 %v25
  %v90 = vunpack.c.l.bf16 %v26
  %v91 = vunpack.c.l.bf16 %v27
  %v92 = vunpack.c.l.bf16 %v28
  %v93 = vunpack.c.l.bf16 %v29
  %v94 = vunpack.c.l.bf16 %v30
  %v95 = vunpack.c.l.bf16 %v31
  %v96 = vunpack.c.l.bf16 %v32
  %v97 = vunpack.c.l.bf16 %v33
  %v98 = vunpack.c.l.bf16 %v34
  %v99 = vunpack.c.l.bf16 %v35
  %v100 = vunpack.c.l.bf16 %v36
  %v101 = vunpack.c.l.bf16 %v37
  %v102 = vunpack.c.l.bf16 %v38
  %v103 = vunpack.c.l.bf16 %v39
  %v104 = vunpack.c.l.bf16 %v40
  %v105 = vunpack.c.l.bf16 %v41
  %v106 = vunpack.c.l.bf16 %v42
  %v107 = vunpack.c.l.bf16 %v43
  %v108 = vunpack.c.l.bf16 %v44
  %v109 = vunpack.c.l.bf16 %v45
  %v110 = vunpack.c.l.bf16 %v46
  %v111 = vunpack.c.l.bf16 %v47
  %v112 = vunpack.c.l.bf16 %v48
  %v113 = vunpack.c.l.bf16 %v49
  %v114 = vunpack.c.l.bf16 %v50
  %v115 = vunpack.c.l.bf16 %v51
  %v116 = vunpack.c.l.bf16 %v52
  %v117 = vunpack.c.l.bf16 %v53
  %v118 = vunpack.c.l.bf16 %v54
  %v119 = vunpack.c.l.bf16 %v55
  %v120 = vunpack.c.l.bf16 %v56
  %v121 = vunpack.c.l.bf16 %v57
  %v122 = vunpack.c.l.bf16 %v58
  %v123 = vunpack.c.l.bf16 %v59
  %v124 = vunpack.c.l.bf16 %v60
  %v125 = vunpack.c.l.bf16 %v61
  %v126 = vunpack.c.l.bf16 %v62
  %v127 = vunpack.c.l.bf16 %v63
  %v128 = vunpack.c.l.bf16 %v64
  %v129 = vunpack.c.l.bf16 %v65
  %v130 = vunpack.c.l.bf16 %v66
  %v131 = vunpack.c.l.bf16 %v67
  %v132 = vunpack.c.l.bf16 %v68
  %v133 = vunpack.c.l.bf16 %v69
  %v134 = vunpack.c.l.bf16 %v70
  %v135 = vunpack.c.l.bf16 %v71
  %v136 = vunpack.c.l.bf16 %v72
  %v137 = vunpack.c.l.bf16 %v73
  %v138 = vunpack.c.l.bf16 %v74
  %v139 = vunpack.c.l.bf16 %v75
  %v140 = vunpack.c.l.bf16 %v76
  %v141 = vunpack.c.l.bf16 %v77
  %v142 = vld [vmem:[%s1] sm:$0x1]
  %v144 = vlaneseq
  %v145 = vshrl.u32 %v144, 7
  %v146 = vsub.s32 0, %v145
  %v147 = vrot.slane %v142, %v146
  %v149 = vmul.f32 %v78, %v147
  %v150 = vmul.f32 %v79, %v147
  %v151 = vmul.f32 %v80, %v147
  %v152 = vmul.f32 %v81, %v147
  %v153 = vmul.f32 %v82, %v147
  %v154 = vmul.f32 %v83, %v147
  %v155 = vmul.f32 %v84, %v147
  %v156 = vmul.f32 %v85, %v147
  %v157 = vmul.f32 %v86, %v147
  %v158 = vmul.f32 %v87, %v147
  %v159 = vmul.f32 %v88, %v147
  %v160 = vmul.f32 %v89, %v147
  %v161 = vmul.f32 %v90, %v147
  %v162 = vmul.f32 %v91, %v147
  %v163 = vmul.f32 %v92, %v147
  %v164 = vmul.f32 %v93, %v147
  %v165 = vmul.f32 %v94, %v147
  %v166 = vmul.f32 %v95, %v147
  %v167 = vmul.f32 %v96, %v147
  %v168 = vmul.f32 %v97, %v147
  %v169 = vmul.f32 %v98, %v147
  %v170 = vmul.f32 %v99, %v147
  %v171 = vmul.f32 %v100, %v147
  %v172 = vmul.f32 %v101, %v147
  %v173 = vmul.f32 %v102, %v147
  %v174 = vmul.f32 %v103, %v147
  %v175 = vmul.f32 %v104, %v147
  %v176 = vmul.f32 %v105, %v147
  %v177 = vmul.f32 %v106, %v147
  %v178 = vmul.f32 %v107, %v147
  %v179 = vmul.f32 %v108, %v147
  %v180 = vmul.f32 %v109, %v147
  %v181 = vmul.f32 %v110, %v147
  %v182 = vmul.f32 %v111, %v147
  %v183 = vmul.f32 %v112, %v147
  %v184 = vmul.f32 %v113, %v147
  %v185 = vmul.f32 %v114, %v147
  %v186 = vmul.f32 %v115, %v147
  %v187 = vmul.f32 %v116, %v147
  %v188 = vmul.f32 %v117, %v147
  %v189 = vmul.f32 %v118, %v147
  %v190 = vmul.f32 %v119, %v147
  %v191 = vmul.f32 %v120, %v147
  %v192 = vmul.f32 %v121, %v147
  %v193 = vmul.f32 %v122, %v147
  %v194 = vmul.f32 %v123, %v147
  %v195 = vmul.f32 %v124, %v147
  %v196 = vmul.f32 %v125, %v147
  %v197 = vmul.f32 %v126, %v147
  %v198 = vmul.f32 %v127, %v147
  %v199 = vmul.f32 %v128, %v147
  %v200 = vmul.f32 %v129, %v147
  %v201 = vmul.f32 %v130, %v147
  %v202 = vmul.f32 %v131, %v147
  %v203 = vmul.f32 %v132, %v147
  %v204 = vmul.f32 %v133, %v147
  %v205 = vmul.f32 %v134, %v147
  %v206 = vmul.f32 %v135, %v147
  %v207 = vmul.f32 %v136, %v147
  %v208 = vmul.f32 %v137, %v147
  %v209 = vmul.f32 %v138, %v147
  %v210 = vmul.f32 %v139, %v147
  %v211 = vmul.f32 %v140, %v147
  %v212 = vmul.f32 %v141, %v147
  %v213 = vld [vmem:[%s2] sm:$0x1]
  %v215 = vlaneseq
  %v216 = vshrl.u32 %v215, 7
  %v217 = vsub.s32 0, %v216
  %v218 = vrot.slane %v213, %v217
  %v220 = vadd.f32 %v149, %v218
  %v221 = vadd.f32 %v150, %v218
  %v222 = vadd.f32 %v151, %v218
  %v223 = vadd.f32 %v152, %v218
  %v224 = vadd.f32 %v153, %v218
  %v225 = vadd.f32 %v154, %v218
  %v226 = vadd.f32 %v155, %v218
  %v227 = vadd.f32 %v156, %v218
  %v228 = vadd.f32 %v157, %v218
  %v229 = vadd.f32 %v158, %v218
  %v230 = vadd.f32 %v159, %v218
  %v231 = vadd.f32 %v160, %v218
  %v232 = vadd.f32 %v161, %v218
  %v233 = vadd.f32 %v162, %v218
  %v234 = vadd.f32 %v163, %v218
  %v235 = vadd.f32 %v164, %v218
  %v236 = vadd.f32 %v165, %v218
  %v237 = vadd.f32 %v166, %v218
  %v238 = vadd.f32 %v167, %v218
  %v239 = vadd.f32 %v168, %v218
  %v240 = vadd.f32 %v169, %v218
  %v241 = vadd.f32 %v170, %v218
  %v242 = vadd.f32 %v171, %v218
  %v243 = vadd.f32 %v172, %v218
  %v244 = vadd.f32 %v173, %v218
  %v245 = vadd.f32 %v174, %v218
  %v246 = vadd.f32 %v175, %v218
  %v247 = vadd.f32 %v176, %v218
  %v248 = vadd.f32 %v177, %v218
  %v249 = vadd.f32 %v178, %v218
  %v250 = vadd.f32 %v179, %v218
  %v251 = vadd.f32 %v180, %v218
  %v252 = vadd.f32 %v181, %v218
  %v253 = vadd.f32 %v182, %v218
  %v254 = vadd.f32 %v183, %v218
  %v255 = vadd.f32 %v184, %v218
  %v256 = vadd.f32 %v185, %v218
  %v257 = vadd.f32 %v186, %v218
  %v258 = vadd.f32 %v187, %v218
  %v259 = vadd.f32 %v188, %v218
  %v260 = vadd.f32 %v189, %v218
  %v261 = vadd.f32 %v190, %v218
  %v262 = vadd.f32 %v191, %v218
  %v263 = vadd.f32 %v192, %v218
  %v264 = vadd.f32 %v193, %v218
  %v265 = vadd.f32 %v194, %v218
  %v266 = vadd.f32 %v195, %v218
  %v267 = vadd.f32 %v196, %v218
  %v268 = vadd.f32 %v197, %v218
  %v269 = vadd.f32 %v198, %v218
  %v270 = vadd.f32 %v199, %v218
  %v271 = vadd.f32 %v200, %v218
  %v272 = vadd.f32 %v201, %v218
  %v273 = vadd.f32 %v202, %v218
  %v274 = vadd.f32 %v203, %v218
  %v275 = vadd.f32 %v204, %v218
  %v276 = vadd.f32 %v205, %v218
  %v277 = vadd.f32 %v206, %v218
  %v278 = vadd.f32 %v207, %v218
  %v279 = vadd.f32 %v208, %v218
  %v280 = vadd.f32 %v209, %v218
  %v281 = vadd.f32 %v210, %v218
  %v282 = vadd.f32 %v211, %v218
  %v283 = vadd.f32 %v212, %v218
  %v284 = vmax.f32 %v220, 0.0
  %v285 = vmax.f32 %v221, 0.0
  %v286 = vmax.f32 %v222, 0.0
  %v287 = vmax.f32 %v223, 0.0
  %v288 = vmax.f32 %v224, 0.0
  %v289 = vmax.f32 %v225, 0.0
  %v290 = vmax.f32 %v226, 0.0
  %v291 = vmax.f32 %v227, 0.0
  %v292 = vmax.f32 %v228, 0.0
  %v293 = vmax.f32 %v229, 0.0
  %v294 = vmax.f32 %v230, 0.0
  %v295 = vmax.f32 %v231, 0.0
  %v296 = vmax.f32 %v232, 0.0
  %v297 = vmax.f32 %v233, 0.0
  %v298 = vmax.f32 %v234, 0.0
  %v299 = vmax.f32 %v235, 0.0
  %v300 = vmax.f32 %v236, 0.0
  %v301 = vmax.f32 %v237, 0.0
  %v302 = vmax.f32 %v238, 0.0
  %v303 = vmax.f32 %v239, 0.0
  %v304 = vmax.f32 %v240, 0.0
  %v305 = vmax.f32 %v241, 0.0
  %v306 = vmax.f32 %v242, 0.0
  %v307 = vmax.f32 %v243, 0.0
  %v308 = vmax.f32 %v244, 0.0
  %v309 = vmax.f32 %v245, 0.0
  %v310 = vmax.f32 %v246, 0.0
  %v311 = vmax.f32 %v247, 0.0
  %v312 = vmax.f32 %v248, 0.0
  %v313 = vmax.f32 %v249, 0.0
  %v314 = vmax.f32 %v250, 0.0
  %v315 = vmax.f32 %v251, 0.0
  %v316 = vmax.f32 %v252, 0.0
  %v317 = vmax.f32 %v253, 0.0
  %v318 = vmax.f32 %v254, 0.0
  %v319 = vmax.f32 %v255, 0.0
  %v320 = vmax.f32 %v256, 0.0
  %v321 = vmax.f32 %v257, 0.0
  %v322 = vmax.f32 %v258, 0.0
  %v323 = vmax.f32 %v259, 0.0
  %v324 = vmax.f32 %v260, 0.0
  %v325 = vmax.f32 %v261, 0.0
  %v326 = vmax.f32 %v262, 0.0
  %v327 = vmax.f32 %v263, 0.0
  %v328 = vmax.f32 %v264, 0.0
  %v329 = vmax.f32 %v265, 0.0
  %v330 = vmax.f32 %v266, 0.0
  %v331 = vmax.f32 %v267, 0.0
  %v332 = vmax.f32 %v268, 0.0
  %v333 = vmax.f32 %v269, 0.0
  %v334 = vmax.f32 %v270, 0.0
  %v335 = vmax.f32 %v271, 0.0
  %v336 = vmax.f32 %v272, 0.0
  %v337 = vmax.f32 %v273, 0.0
  %v338 = vmax.f32 %v274, 0.0
  %v339 = vmax.f32 %v275, 0.0
  %v340 = vmax.f32 %v276, 0.0
  %v341 = vmax.f32 %v277, 0.0
  %v342 = vmax.f32 %v278, 0.0
  %v343 = vmax.f32 %v279, 0.0
  %v344 = vmax.f32 %v280, 0.0
  %v345 = vmax.f32 %v281, 0.0
  %v346 = vmax.f32 %v282, 0.0
  %v347 = vmax.f32 %v283, 0.0
  %v348 = vpack.c.bf16 %v285, %v284
  %v349 = vpack.c.bf16 %v287, %v286
  %v350 = vpack.c.bf16 %v289, %v288
  %v351 = vpack.c.bf16 %v291, %v290
  %v352 = vpack.c.bf16 %v293, %v292
  %v353 = vpack.c.bf16 %v295, %v294
  %v354 = vpack.c.bf16 %v297, %v296
  %v355 = vpack.c.bf16 %v299, %v298
  %v356 = vpack.c.bf16 %v301, %v300
  %v357 = vpack.c.bf16 %v303, %v302
  %v358 = vpack.c.bf16 %v305, %v304
  %v359 = vpack.c.bf16 %v307, %v306
  %v360 = vpack.c.bf16 %v309, %v308
  %v361 = vpack.c.bf16 %v311, %v310
  %v362 = vpack.c.bf16 %v313, %v312
  %v363 = vpack.c.bf16 %v315, %v314
  %v364 = vpack.c.bf16 %v317, %v316
  %v365 = vpack.c.bf16 %v319, %v318
  %v366 = vpack.c.bf16 %v321, %v320
  %v367 = vpack.c.bf16 %v323, %v322
  %v368 = vpack.c.bf16 %v325, %v324
  %v369 = vpack.c.bf16 %v327, %v326
  %v370 = vpack.c.bf16 %v329, %v328
  %v371 = vpack.c.bf16 %v331, %v330
  %v372 = vpack.c.bf16 %v333, %v332
  %v373 = vpack.c.bf16 %v335, %v334
  %v374 = vpack.c.bf16 %v337, %v336
  %v375 = vpack.c.bf16 %v339, %v338
  %v376 = vpack.c.bf16 %v341, %v340
  %v377 = vpack.c.bf16 %v343, %v342
  %v378 = vpack.c.bf16 %v345, %v344
  %v379 = vpack.c.bf16 %v347, %v346
  %v412 = vunpack.c.l.b16 %v348
  %v413 = vunpack.c.h.b16 %v348
  %v414 = vunpack.c.l.b16 %v349
  %v415 = vunpack.c.h.b16 %v349
  %v416 = vunpack.c.l.b16 %v350
  %v417 = vunpack.c.h.b16 %v350
  %v418 = vunpack.c.l.b16 %v351
  %v419 = vunpack.c.h.b16 %v351
  %v420 = vunpack.c.l.b16 %v352
  %v421 = vunpack.c.h.b16 %v352
  %v422 = vunpack.c.l.b16 %v353
  %v423 = vunpack.c.h.b16 %v353
  %v424 = vunpack.c.l.b16 %v354
  %v425 = vunpack.c.h.b16 %v354
  %v426 = vunpack.c.l.b16 %v355
  %v427 = vunpack.c.h.b16 %v355
  %v428 = vunpack.c.l.b16 %v356
  %v429 = vunpack.c.h.b16 %v356
  %v430 = vunpack.c.l.b16 %v357
  %v431 = vunpack.c.h.b16 %v357
  %v432 = vunpack.c.l.b16 %v358
  %v433 = vunpack.c.h.b16 %v358
  %v434 = vunpack.c.l.b16 %v359
  %v435 = vunpack.c.h.b16 %v359
  %v436 = vunpack.c.l.b16 %v360
  %v437 = vunpack.c.h.b16 %v360
  %v438 = vunpack.c.l.b16 %v361
  %v439 = vunpack.c.h.b16 %v361
  %v440 = vunpack.c.l.b16 %v362
  %v441 = vunpack.c.h.b16 %v362
  %v442 = vunpack.c.l.b16 %v363
  %v443 = vunpack.c.h.b16 %v363
  %v444 = vunpack.c.l.b16 %v364
  %v445 = vunpack.c.h.b16 %v364
  %v446 = vunpack.c.l.b16 %v365
  %v447 = vunpack.c.h.b16 %v365
  %v448 = vunpack.c.l.b16 %v366
  %v449 = vunpack.c.h.b16 %v366
  %v450 = vunpack.c.l.b16 %v367
  %v451 = vunpack.c.h.b16 %v367
  %v452 = vunpack.c.l.b16 %v368
  %v453 = vunpack.c.h.b16 %v368
  %v454 = vunpack.c.l.b16 %v369
  %v455 = vunpack.c.h.b16 %v369
  %v456 = vunpack.c.l.b16 %v370
  %v457 = vunpack.c.h.b16 %v370
  %v458 = vunpack.c.l.b16 %v371
  %v459 = vunpack.c.h.b16 %v371
  %v460 = vunpack.c.l.b16 %v372
  %v461 = vunpack.c.h.b16 %v372
  %v462 = vunpack.c.l.b16 %v373
  %v463 = vunpack.c.h.b16 %v373
  %v464 = vunpack.c.l.b16 %v374
  %v465 = vunpack.c.h.b16 %v374
  %v466 = vunpack.c.l.b16 %v375
  %v467 = vunpack.c.h.b16 %v375
  %v468 = vunpack.c.l.b16 %v376
  %v469 = vunpack.c.h.b16 %v376
  %v470 = vunpack.c.l.b16 %v377
  %v471 = vunpack.c.h.b16 %v377
  %v472 = vunpack.c.l.b16 %v378
  %v473 = vunpack.c.h.b16 %v378
  %v474 = vunpack.c.l.b16 %v379
  %v475 = vunpack.c.h.b16 %v379
  %v476 = vpack.c.b16 %v412, %v412
  %v477 = vpack.c.b16 %v413, %v413
  %v478 = vpack.c.b16 %v414, %v414
  %v479 = vpack.c.b16 %v415, %v415
  %v480 = vpack.c.b16 %v416, %v416
  %v481 = vpack.c.b16 %v417, %v417
  %v482 = vpack.c.b16 %v418, %v418
  %v483 = vpack.c.b16 %v419, %v419
  %v484 = vpack.c.b16 %v420, %v420
  %v485 = vpack.c.b16 %v421, %v421
  %v486 = vpack.c.b16 %v422, %v422
  %v487 = vpack.c.b16 %v423, %v423
  %v488 = vpack.c.b16 %v424, %v424
  %v489 = vpack.c.b16 %v425, %v425
  %v490 = vpack.c.b16 %v426, %v426
  %v491 = vpack.c.b16 %v427, %v427
  %v492 = vpack.c.b16 %v428, %v428
  %v493 = vpack.c.b16 %v429, %v429
  %v494 = vpack.c.b16 %v430, %v430
  %v495 = vpack.c.b16 %v431, %v431
  %v496 = vpack.c.b16 %v432, %v432
  %v497 = vpack.c.b16 %v433, %v433
  %v498 = vpack.c.b16 %v434, %v434
  %v499 = vpack.c.b16 %v435, %v435
  %v500 = vpack.c.b16 %v436, %v436
  %v501 = vpack.c.b16 %v437, %v437
  %v502 = vpack.c.b16 %v438, %v438
  %v503 = vpack.c.b16 %v439, %v439
  %v504 = vpack.c.b16 %v440, %v440
  %v505 = vpack.c.b16 %v441, %v441
  %v506 = vpack.c.b16 %v442, %v442
  %v507 = vpack.c.b16 %v443, %v443
  %v508 = vpack.c.b16 %v444, %v444
  %v509 = vpack.c.b16 %v445, %v445
  %v510 = vpack.c.b16 %v446, %v446
  %v511 = vpack.c.b16 %v447, %v447
  %v512 = vpack.c.b16 %v448, %v448
  %v513 = vpack.c.b16 %v449, %v449
  %v514 = vpack.c.b16 %v450, %v450
  %v515 = vpack.c.b16 %v451, %v451
  %v516 = vpack.c.b16 %v452, %v452
  %v517 = vpack.c.b16 %v453, %v453
  %v518 = vpack.c.b16 %v454, %v454
  %v519 = vpack.c.b16 %v455, %v455
  %v520 = vpack.c.b16 %v456, %v456
  %v521 = vpack.c.b16 %v457, %v457
  %v522 = vpack.c.b16 %v458, %v458
  %v523 = vpack.c.b16 %v459, %v459
  %v524 = vpack.c.b16 %v460, %v460
  %v525 = vpack.c.b16 %v461, %v461
  %v526 = vpack.c.b16 %v462, %v462
  %v527 = vpack.c.b16 %v463, %v463
  %v528 = vpack.c.b16 %v464, %v464
  %v529 = vpack.c.b16 %v465, %v465
  %v530 = vpack.c.b16 %v466, %v466
  %v531 = vpack.c.b16 %v467, %v467
  %v532 = vpack.c.b16 %v468, %v468
  %v533 = vpack.c.b16 %v469, %v469
  %v534 = vpack.c.b16 %v470, %v470
  %v535 = vpack.c.b16 %v471, %v471
  %v536 = vpack.c.b16 %v472, %v472
  %v537 = vpack.c.b16 %v473, %v473
  %v538 = vpack.c.b16 %v474, %v474
  %v539 = vpack.c.b16 %v475, %v475
  %604 = vst [vmem:[%s3] sm:$0xf] %v476
  %605 = vst [vmem:[%s3 + $0x4] sm:$0xf] %v477
  %606 = vst [vmem:[%s3 + $0x8] sm:$0xf] %v478
  %607 = vst [vmem:[%s3 + $0xc] sm:$0xf] %v479
  %608 = vst [vmem:[%s3 + $0x10] sm:$0xf] %v480
  %609 = vst [vmem:[%s3 + $0x14] sm:$0xf] %v481
  %610 = vst [vmem:[%s3 + $0x18] sm:$0xf] %v482
  %611 = vst [vmem:[%s3 + $0x1c] sm:$0xf] %v483
  %612 = vst [vmem:[%s3 + $0x20] sm:$0xf] %v484
  %613 = vst [vmem:[%s3 + $0x24] sm:$0xf] %v485
  %614 = vst [vmem:[%s3 + $0x28] sm:$0xf] %v486
  %615 = vst [vmem:[%s3 + $0x2c] sm:$0xf] %v487
  %616 = vst [vmem:[%s3 + $0x30] sm:$0xf] %v488
  %617 = vst [vmem:[%s3 + $0x34] sm:$0xf] %v489
  %618 = vst [vmem:[%s3 + $0x38] sm:$0xf] %v490
  %619 = vst [vmem:[%s3 + $0x3c] sm:$0xf] %v491
  %620 = vst [vmem:[%s3 + $0x40] sm:$0xf] %v492
  %621 = vst [vmem:[%s3 + $0x44] sm:$0xf] %v493
  %622 = vst [vmem:[%s3 + $0x48] sm:$0xf] %v494
  %623 = vst [vmem:[%s3 + $0x4c] sm:$0xf] %v495
  %624 = vst [vmem:[%s3 + $0x50] sm:$0xf] %v496
  %625 = vst [vmem:[%s3 + $0x54] sm:$0xf] %v497
  %626 = vst [vmem:[%s3 + $0x58] sm:$0xf] %v498
  %627 = vst [vmem:[%s3 + $0x5c] sm:$0xf] %v499
  %628 = vst [vmem:[%s3 + $0x60] sm:$0xf] %v500
  %629 = vst [vmem:[%s3 + $0x64] sm:$0xf] %v501
  %630 = vst [vmem:[%s3 + $0x68] sm:$0xf] %v502
  %631 = vst [vmem:[%s3 + $0x6c] sm:$0xf] %v503
  %632 = vst [vmem:[%s3 + $0x70] sm:$0xf] %v504
  %633 = vst [vmem:[%s3 + $0x74] sm:$0xf] %v505
  %634 = vst [vmem:[%s3 + $0x78] sm:$0xf] %v506
  %635 = vst [vmem:[%s3 + $0x7c] sm:$0xf] %v507
  %636 = vst [vmem:[%s3 + $0x80] sm:$0xf] %v508
  %637 = vst [vmem:[%s3 + $0x84] sm:$0xf] %v509
  %638 = vst [vmem:[%s3 + $0x88] sm:$0xf] %v510
  %639 = vst [vmem:[%s3 + $0x8c] sm:$0xf] %v511
  %640 = vst [vmem:[%s3 + $0x90] sm:$0xf] %v512
  %641 = vst [vmem:[%s3 + $0x94] sm:$0xf] %v513
  %642 = vst [vmem:[%s3 + $0x98] sm:$0xf] %v514
  %643 = vst [vmem:[%s3 + $0x9c] sm:$0xf] %v515
  %644 = vst [vmem:[%s3 + $0xa0] sm:$0xf] %v516
  %645 = vst [vmem:[%s3 + $0xa4] sm:$0xf] %v517
  %646 = vst [vmem:[%s3 + $0xa8] sm:$0xf] %v518
  %647 = vst [vmem:[%s3 + $0xac] sm:$0xf] %v519
  %648 = vst [vmem:[%s3 + $0xb0] sm:$0xf] %v520
  %649 = vst [vmem:[%s3 + $0xb4] sm:$0xf] %v521
  %650 = vst [vmem:[%s3 + $0xb8] sm:$0xf] %v522
  %651 = vst [vmem:[%s3 + $0xbc] sm:$0xf] %v523
  %652 = vst [vmem:[%s3 + $0xc0] sm:$0xf] %v524
  %653 = vst [vmem:[%s3 + $0xc4] sm:$0xf] %v525
  %654 = vst [vmem:[%s3 + $0xc8] sm:$0xf] %v526
  %655 = vst [vmem:[%s3 + $0xcc] sm:$0xf] %v527
  %656 = vst [vmem:[%s3 + $0xd0] sm:$0xf] %v528
  %657 = vst [vmem:[%s3 + $0xd4] sm:$0xf] %v529
  %658 = vst [vmem:[%s3 + $0xd8] sm:$0xf] %v530
  %659 = vst [vmem:[%s3 + $0xdc] sm:$0xf] %v531
  %660 = vst [vmem:[%s3 + $0xe0] sm:$0xf] %v532
  %661 = vst [vmem:[%s3 + $0xe4] sm:$0xf] %v533
  %662 = vst [vmem:[%s3 + $0xe8] sm:$0xf] %v534
  %663 = vst [vmem:[%s3 + $0xec] sm:$0xf] %v535
  %664 = vst [vmem:[%s3 + $0xf0] sm:$0xf] %v536
  %665 = vst [vmem:[%s3 + $0xf4] sm:$0xf] %v537
  %666 = vst [vmem:[%s3 + $0xf8] sm:$0xf] %v538
  %667 = vst [vmem:[%s3 + $0xfc] sm:$0xf] %v539
  // Predicated region
  $region14: #{generator_forward.16} parent=0 // pred_check
    _
  $region15: #{generator_forward.16} parent=0 // pred_check_branch
    %669 = sbr.rel (0) target = $region17
  $region16: #{generator_forward.16} parent=0 // pred_region
    _
  $region17: #{generator_forward.16} parent=0 // pred_fallthru
    _
  // Predicated region
  $region18: #{generator_forward.16} parent=0 // pred_check
    _
  $region19: #{generator_forward.16} parent=0 // pred_check_branch
    %671 = sbr.rel (0) target = $region21
  $region20: #{generator_forward.16} parent=0 // pred_region
    _
  $region21: #{generator_forward.16} parent=0 // pred_fallthru
    _

// kernel: generator_forward.15
$region0: #{generator_forward.15}
  #allocation0 [shape = 'u32[]', space=smem, size = 0x4, offset = 0x4, fixed_abs, tag = 'smem constant byte address 0x4 - core index']
  #allocation1 [shape = 'u32[144,128]{1,0:T(1,128)}', space=vmem, size = 0x12000, scoped, tag = 'internal scratch']
  %s0 = inlined_call_operand.vmem [shape: bf16[512,72], index: 0, kind: input, shape index: {}]
  %s1 = inlined_call_operand.vmem [shape: bf16[72,128], index: 1, kind: input, shape index: {}]
  %s2 = inlined_call_operand.vmem [shape: bf16[512,128], index: 2, kind: output, shape index: {0}]
  %s3 = inlined_call_operand.vmem [shape: f32[1,8,128], index: 3, kind: output, shape index: {1}]
  %4 = xla_tuple %s2, %s3
  %s5 = sld [smem:[#allocation0]]
  $region26: #{generator_forward.15} parent=0
    _
  %s7 = ssub.s32 1, %s5
  %s8 = scalar_select 0, %s7, %s5
  // Predicated region
  $region2: #{generator_forward.15} parent=0 // pred_check
    _
  $region3: #{generator_forward.15} parent=0 // pred_check_branch
    %10 = sbr.rel (0) target = $region5
  $region4: #{generator_forward.15} parent=0 // pred_region
    _
  $region5: #{generator_forward.15} parent=0 // pred_fallthru
    _
  // Predicated region
  $region6: #{generator_forward.15} parent=0 // pred_check
    _
  $region7: #{generator_forward.15} parent=0 // pred_check_branch
    %12 = sbr.rel (0) target = $region9
  $region8: #{generator_forward.15} parent=0 // pred_region
    _
  $region9: #{generator_forward.15} parent=0 // pred_fallthru
    _
  %v14 = vld [vmem:[%s0] sm:$0xf]
  %v15 = vld [vmem:[%s0 + $0x4] sm:$0xf]
  %v16 = vld [vmem:[%s0 + $0x8] sm:$0xf]
  %v17 = vld [vmem:[%s0 + $0xc] sm:$0xf]
  %v18 = vld [vmem:[%s0 + $0x10] sm:$0xf]
  %v19 = vld [vmem:[%s0 + $0x14] sm:$0xf]
  %v20 = vld [vmem:[%s0 + $0x18] sm:$0xf]
  %v21 = vld [vmem:[%s0 + $0x1c] sm:$0xf]
  %v22 = vld [vmem:[%s0 + $0x20] sm:$0xf]
  %v23 = vld [vmem:[%s0 + $0x24] sm:$0xf]
  %v24 = vld [vmem:[%s0 + $0x28] sm:$0xf]
  %v25 = vld [vmem:[%s0 + $0x2c] sm:$0xf]
  %v26 = vld [vmem:[%s0 + $0x30] sm:$0xf]
  %v27 = vld [vmem:[%s0 + $0x34] sm:$0xf]
  %v28 = vld [vmem:[%s0 + $0x38] sm:$0xf]
  %v29 = vld [vmem:[%s0 + $0x3c] sm:$0xf]
  %v30 = vld [vmem:[%s0 + $0x40] sm:$0xf]
  %v31 = vld [vmem:[%s0 + $0x44] sm:$0xf]
  %v32 = vld [vmem:[%s0 + $0x48] sm:$0xf]
  %v33 = vld [vmem:[%s0 + $0x4c] sm:$0xf]
  %v34 = vld [vmem:[%s0 + $0x50] sm:$0xf]
  %v35 = vld [vmem:[%s0 + $0x54] sm:$0xf]
  %v36 = vld [vmem:[%s0 + $0x58] sm:$0xf]
  %v37 = vld [vmem:[%s0 + $0x5c] sm:$0xf]
  %v38 = vld [vmem:[%s0 + $0x60] sm:$0xf]
  %v39 = vld [vmem:[%s0 + $0x64] sm:$0xf]
  %v40 = vld [vmem:[%s0 + $0x68] sm:$0xf]
  %v41 = vld [vmem:[%s0 + $0x6c] sm:$0xf]
  %v42 = vld [vmem:[%s0 + $0x70] sm:$0xf]
  %v43 = vld [vmem:[%s0 + $0x74] sm:$0xf]
  %v44 = vld [vmem:[%s0 + $0x78] sm:$0xf]
  %v45 = vld [vmem:[%s0 + $0x7c] sm:$0xf]
  %v46 = vld [vmem:[%s0 + $0x80] sm:$0xf]
  %v47 = vld [vmem:[%s0 + $0x84] sm:$0xf]
  %v48 = vld [vmem:[%s0 + $0x88] sm:$0xf]
  %v49 = vld [vmem:[%s0 + $0x8c] sm:$0xf]
  %v50 = vld [vmem:[%s0 + $0x90] sm:$0xf]
  %v51 = vld [vmem:[%s0 + $0x94] sm:$0xf]
  %v52 = vld [vmem:[%s0 + $0x98] sm:$0xf]
  %v53 = vld [vmem:[%s0 + $0x9c] sm:$0xf]
  %v54 = vld [vmem:[%s0 + $0xa0] sm:$0xf]
  %v55 = vld [vmem:[%s0 + $0xa4] sm:$0xf]
  %v56 = vld [vmem:[%s0 + $0xa8] sm:$0xf]
  %v57 = vld [vmem:[%s0 + $0xac] sm:$0xf]
  %v58 = vld [vmem:[%s0 + $0xb0] sm:$0xf]
  %v59 = vld [vmem:[%s0 + $0xb4] sm:$0xf]
  %v60 = vld [vmem:[%s0 + $0xb8] sm:$0xf]
  %v61 = vld [vmem:[%s0 + $0xbc] sm:$0xf]
  %v62 = vld [vmem:[%s0 + $0xc0] sm:$0xf]
  %v63 = vld [vmem:[%s0 + $0xc4] sm:$0xf]
  %v64 = vld [vmem:[%s0 + $0xc8] sm:$0xf]
  %v65 = vld [vmem:[%s0 + $0xcc] sm:$0xf]
  %v66 = vld [vmem:[%s0 + $0xd0] sm:$0xf]
  %v67 = vld [vmem:[%s0 + $0xd4] sm:$0xf]
  %v68 = vld [vmem:[%s0 + $0xd8] sm:$0xf]
  %v69 = vld [vmem:[%s0 + $0xdc] sm:$0xf]
  %v70 = vld [vmem:[%s0 + $0xe0] sm:$0xf]
  %v71 = vld [vmem:[%s0 + $0xe4] sm:$0xf]
  %v72 = vld [vmem:[%s0 + $0xe8] sm:$0xf]
  %v73 = vld [vmem:[%s0 + $0xec] sm:$0xf]
  %v74 = vld [vmem:[%s0 + $0xf0] sm:$0xf]
  %v75 = vld [vmem:[%s0 + $0xf4] sm:$0xf]
  %v76 = vld [vmem:[%s0 + $0xf8] sm:$0xf]
  %v77 = vld [vmem:[%s0 + $0xfc] sm:$0xf]
  %v78 = vld [vmem:[%s1] sm:$0xf]
  %v79 = vld [vmem:[%s1 + $0x4] sm:$0xf]
  %v80 = vld [vmem:[%s1 + $0x8] sm:$0xf]
  %v81 = vld [vmem:[%s1 + $0xc] sm:$0xf]
  %v82 = vld [vmem:[%s1 + $0x10] sm:$0xf]
  %v83 = vld [vmem:[%s1 + $0x14] sm:$0xf]
  %v84 = vld [vmem:[%s1 + $0x18] sm:$0xf]
  %v85 = vld [vmem:[%s1 + $0x1c] sm:$0xf]
  %v86 = vld [vmem:[%s1 + $0x20] sm:$0xf]
  %v151 = vunpack.c.l.b16 %v14
  %v152 = vunpack.c.l.b16 %v15
  %v153 = vunpack.c.l.b16 %v16
  %v154 = vunpack.c.l.b16 %v17
  %v155 = vunpack.c.l.b16 %v18
  %v156 = vunpack.c.l.b16 %v19
  %v157 = vunpack.c.l.b16 %v20
  %v158 = vunpack.c.l.b16 %v21
  %v159 = vunpack.c.l.b16 %v22
  %v160 = vunpack.c.l.b16 %v23
  %v161 = vunpack.c.l.b16 %v24
  %v162 = vunpack.c.l.b16 %v25
  %v163 = vunpack.c.l.b16 %v26
  %v164 = vunpack.c.l.b16 %v27
  %v165 = vunpack.c.l.b16 %v28
  %v166 = vunpack.c.l.b16 %v29
  %v167 = vunpack.c.l.b16 %v30
  %v168 = vunpack.c.l.b16 %v31
  %v169 = vunpack.c.l.b16 %v32
  %v170 = vunpack.c.l.b16 %v33
  %v171 = vunpack.c.l.b16 %v34
  %v172 = vunpack.c.l.b16 %v35
  %v173 = vunpack.c.l.b16 %v36
  %v174 = vunpack.c.l.b16 %v37
  %v175 = vunpack.c.l.b16 %v38
  %v176 = vunpack.c.l.b16 %v39
  %v177 = vunpack.c.l.b16 %v40
  %v178 = vunpack.c.l.b16 %v41
  %v179 = vunpack.c.l.b16 %v42
  %v180 = vunpack.c.l.b16 %v43
  %v181 = vunpack.c.l.b16 %v44
  %v182 = vunpack.c.l.b16 %v45
  %v183 = vunpack.c.l.b16 %v46
  %v184 = vunpack.c.l.b16 %v47
  %v185 = vunpack.c.l.b16 %v48
  %v186 = vunpack.c.l.b16 %v49
  %v187 = vunpack.c.l.b16 %v50
  %v188 = vunpack.c.l.b16 %v51
  %v189 = vunpack.c.l.b16 %v52
  %v190 = vunpack.c.l.b16 %v53
  %v191 = vunpack.c.l.b16 %v54
  %v192 = vunpack.c.l.b16 %v55
  %v193 = vunpack.c.l.b16 %v56
  %v194 = vunpack.c.l.b16 %v57
  %v195 = vunpack.c.l.b16 %v58
  %v196 = vunpack.c.l.b16 %v59
  %v197 = vunpack.c.l.b16 %v60
  %v198 = vunpack.c.l.b16 %v61
  %v199 = vunpack.c.l.b16 %v62
  %v200 = vunpack.c.l.b16 %v63
  %v201 = vunpack.c.l.b16 %v64
  %v202 = vunpack.c.l.b16 %v65
  %v203 = vunpack.c.l.b16 %v66
  %v204 = vunpack.c.l.b16 %v67
  %v205 = vunpack.c.l.b16 %v68
  %v206 = vunpack.c.l.b16 %v69
  %v207 = vunpack.c.l.b16 %v70
  %v208 = vunpack.c.l.b16 %v71
  %v209 = vunpack.c.l.b16 %v72
  %v210 = vunpack.c.l.b16 %v73
  %v211 = vunpack.c.l.b16 %v74
  %v212 = vunpack.c.l.b16 %v75
  %v213 = vunpack.c.l.b16 %v76
  %v214 = vunpack.c.l.b16 %v77
  %v215 = vpack.c.b16 %v152, %v151
  %v216 = vpack.c.b16 %v154, %v153
  %v217 = vpack.c.b16 %v156, %v155
  %v218 = vpack.c.b16 %v158, %v157
  %v219 = vpack.c.b16 %v160, %v159
  %v220 = vpack.c.b16 %v162, %v161
  %v221 = vpack.c.b16 %v164, %v163
  %v222 = vpack.c.b16 %v166, %v165
  %v223 = vpack.c.b16 %v168, %v167
  %v224 = vpack.c.b16 %v170, %v169
  %v225 = vpack.c.b16 %v172, %v171
  %v226 = vpack.c.b16 %v174, %v173
  %v227 = vpack.c.b16 %v176, %v175
  %v228 = vpack.c.b16 %v178, %v177
  %v229 = vpack.c.b16 %v180, %v179
  %v230 = vpack.c.b16 %v182, %v181
  %v231 = vpack.c.b16 %v184, %v183
  %v232 = vpack.c.b16 %v186, %v185
  %v233 = vpack.c.b16 %v188, %v187
  %v234 = vpack.c.b16 %v190, %v189
  %v235 = vpack.c.b16 %v192, %v191
  %v236 = vpack.c.b16 %v194, %v193
  %v237 = vpack.c.b16 %v196, %v195
  %v238 = vpack.c.b16 %v198, %v197
  %v239 = vpack.c.b16 %v200, %v199
  %v240 = vpack.c.b16 %v202, %v201
  %v241 = vpack.c.b16 %v204, %v203
  %v242 = vpack.c.b16 %v206, %v205
  %v243 = vpack.c.b16 %v208, %v207
  %v244 = vpack.c.b16 %v210, %v209
  %v245 = vpack.c.b16 %v212, %v211
  %v246 = vpack.c.b16 %v214, %v213
  %v256 = vunpack.c.l.b16 %v78
  %v257 = vunpack.c.l.b16 %v79
  %v258 = vunpack.c.l.b16 %v80
  %v259 = vunpack.c.l.b16 %v81
  %v260 = vunpack.c.l.b16 %v82
  %v261 = vunpack.c.l.b16 %v83
  %v262 = vunpack.c.l.b16 %v84
  %v263 = vunpack.c.l.b16 %v85
  %v264 = vunpack.c.l.b16 %v86
  %v265 = vpack.c.b16 %v257, %v256
  %v266 = vpack.c.b16 %v259, %v258
  %v267 = vpack.c.b16 %v261, %v260
  %v268 = vpack.c.b16 %v263, %v262
  %v269 = vpack.c.b16 %v264, %v264
  %vm274 = vcmask 588800
  %v276 = vsel %vm274, %v215, 0
  %v279 = vsel %vm274, %v216, 0
  %v282 = vsel %vm274, %v217, 0
  %v285 = vsel %vm274, %v218, 0
  %v288 = vsel %vm274, %v219, 0
  %v291 = vsel %vm274, %v220, 0
  %v294 = vsel %vm274, %v221, 0
  %v297 = vsel %vm274, %v222, 0
  %v300 = vsel %vm274, %v223, 0
  %v303 = vsel %vm274, %v224, 0
  %v306 = vsel %vm274, %v225, 0
  %v309 = vsel %vm274, %v226, 0
  %v312 = vsel %vm274, %v227, 0
  %v315 = vsel %vm274, %v228, 0
  %v318 = vsel %vm274, %v229, 0
  %v321 = vsel %vm274, %v230, 0
  %v324 = vsel %vm274, %v231, 0
  %v327 = vsel %vm274, %v232, 0
  %v330 = vsel %vm274, %v233, 0
  %v333 = vsel %vm274, %v234, 0
  %v336 = vsel %vm274, %v235, 0
  %v339 = vsel %vm274, %v236, 0
  %v342 = vsel %vm274, %v237, 0
  %v345 = vsel %vm274, %v238, 0
  %v348 = vsel %vm274, %v239, 0
  %v351 = vsel %vm274, %v240, 0
  %v354 = vsel %vm274, %v241, 0
  %v357 = vsel %vm274, %v242, 0
  %v360 = vsel %vm274, %v243, 0
  %v363 = vsel %vm274, %v244, 0
  %v366 = vsel %vm274, %v245, 0
  %v369 = vsel %vm274, %v246, 0
  %vm371 = vcmask 1043456
  %v373 = vsel %vm371, %v269, 0
  %375 = vmatprep.subr.bf16.mxu0 0
  %376 = vmatpush1.bf16.msra.mxu0 %v265
  %377 = vmatprep.subr.bf16.mxu0 0
  %378 = vmatpush1.bf16.msra.mxu0 %v266
  %379 = vmatprep.subr.bf16.mxu0 0
  %380 = vmatpush1.bf16.msra.mxu0 %v267
  %381 = vmatprep.subr.bf16.mxu0 0
  %382 = vmatpush1.bf16.msra.mxu0 %v268
  %383 = vmatprep.subr.bf16.mxu0 0
  %384 = vmatpush1.bf16.msra.mxu0 %v373
  %385 = vmatprep.subr.bf16.mxu0 0
  %386 = vmatpush1.bf16.msra.mxu0 0
  %387 = vmatprep.subr.bf16.mxu0 0
  %388 = vmatpush1.bf16.msra.mxu0 0
  %389 = vmatprep.subr.bf16.mxu0 0
  %390 = vmatpush1.bf16.msra.mxu0 0
  %391 = vmatprep.subr.bf16.mxu0 0
  %392 = vmatpush1.bf16.msra.mxu0 0
  %393 = vmatprep.subr.bf16.mxu0 0
  %394 = vmatpush1.bf16.msra.mxu0 0
  %395 = vmatprep.subr.bf16.mxu0 0
  %396 = vmatpush1.bf16.msra.mxu0 0
  %397 = vmatprep.subr.bf16.mxu0 0
  %398 = vmatpush1.bf16.msra.mxu0 0
  %399 = vmatprep.subr.bf16.mxu0 0
  %400 = vmatpush1.bf16.msra.mxu0 0
  %401 = vmatprep.subr.bf16.mxu0 0
  %402 = vmatpush1.bf16.msra.mxu0 0
  %403 = vmatprep.subr.bf16.mxu0 0
  %404 = vmatpush1.bf16.msra.mxu0 0
  %405 = vmatprep.subr.bf16.mxu0 0
  %406 = vmatpush1.bf16.msra.mxu0 0
  %407 = vmatprep.mubr.bf16.mxu0 0
  %408 = vmatmul.mubr.bf16.gmra.mrb[0].mxu0 %v276
  %v409 = vpop.f32.mrb[0].mxu0
  %v410 = vadd.f32 0.0, %v409
  %v411 = vpop.f32.mrb[0].mxu0
  %v412 = vpop.f32.mrb[0].mxu0
  %v413 = vadd.f32 0.0, %v412
  %v414 = vpop.f32.mrb[0].mxu0
  %415 = vmatprep.mubr.bf16.mxu0 0
  %416 = vmatmul.mubr.bf16.gmra.mrb[0].mxu0 %v279
  %v417 = vpop.f32.mrb[0].mxu0
  %v418 = vadd.f32 0.0, %v417
  %v419 = vpop.f32.mrb[0].mxu0
  %v420 = vpop.f32.mrb[0].mxu0
  %v421 = vadd.f32 0.0, %v420
  %v422 = vpop.f32.mrb[0].mxu0
  %423 = vmatprep.mubr.bf16.mxu0 0
  %424 = vmatmul.mubr.bf16.gmra.mrb[0].mxu0 %v282
  %v425 = vpop.f32.mrb[0].mxu0
  %v426 = vadd.f32 0.0, %v425
  %v427 = vpop.f32.mrb[0].mxu0
  %v428 = vpop.f32.mrb[0].mxu0
  %v429 = vadd.f32 0.0, %v428
  %v430 = vpop.f32.mrb[0].mxu0
  %431 = vmatprep.mubr.bf16.mxu0 0
  %432 = vmatmul.mubr.bf16.gmra.mrb[0].mxu0 %v285
  %v433 = vpop.f32.mrb[0].mxu0
  %v434 = vadd.f32 0.0, %v433
  %v435 = vpop.f32.mrb[0].mxu0
  %v436 = vpop.f32.mrb[0].mxu0
  %v437 = vadd.f32 0.0, %v436
  %v438 = vpop.f32.mrb[0].mxu0
  %439 = vmatprep.mubr.bf16.mxu0 0
  %440 = vmatmul.mubr.bf16.gmra.mrb[0].mxu0 %v288
  %v441 = vpop.f32.mrb[0].mxu0
  %v442 = vadd.f32 0.0, %v441
  %v443 = vpop.f32.mrb[0].mxu0
  %v444 = vpop.f32.mrb[0].mxu0
  %v445 = vadd.f32 0.0, %v444
  %v446 = vpop.f32.mrb[0].mxu0
  %447 = vmatprep.mubr.bf16.mxu0 0
  %448 = vmatmul.mubr.bf16.gmra.mrb[0].mxu0 %v291
  %v449 = vpop.f32.mrb[0].mxu0
  %v450 = vadd.f32 0.0, %v449
  %v451 = vpop.f32.mrb[0].mxu0
  %v452 = vpop.f32.mrb[0].mxu0
  %v453 = vadd.f32 0.0, %v452
  %v454 = vpop.f32.mrb[0].mxu0
  %455 = vmatprep.mubr.bf16.mxu0 0
  %456 = vmatmul.mubr.bf16.gmra.mrb[0].mxu0 %v294
  %v457 = vpop.f32.mrb[0].mxu0
  %v458 = vadd.f32 0.0, %v457
  %v459 = vpop.f32.mrb[0].mxu0
  %v460 = vpop.f32.mrb[0].mxu0
  %v461 = vadd.f32 0.0, %v460
  %v462 = vpop.f32.mrb[0].mxu0
  %463 = vmatprep.mubr.bf16.mxu0 0
  %464 = vmatmul.mubr.bf16.gmra.mrb[0].mxu0 %v297
  %v465 = vpop.f32.mrb[0].mxu0
  %v466 = vadd.f32 0.0, %v465
  %v467 = vpop.f32.mrb[0].mxu0
  %v468 = vpop.f32.mrb[0].mxu0
  %v469 = vadd.f32 0.0, %v468
  %v470 = vpop.f32.mrb[0].mxu0
  %471 = vmatprep.mubr.bf16.mxu0 0
  %472 = vmatmul.mubr.bf16.gmra.mrb[0].mxu0 %v300
  %v473 = vpop.f32.mrb[0].mxu0
  %v474 = vadd.f32 0.0, %v473
  %v475 = vpop.f32.mrb[0].mxu0
  %v476 = vpop.f32.mrb[0].mxu0
  %v477 = vadd.f32 0.0, %v476
  %v478 = vpop.f32.mrb[0].mxu0
  %479 = vmatprep.mubr.bf16.mxu0 0
  %480 = vmatmul.mubr.bf16.gmra.mrb[0].mxu0 %v303
  %v481 = vpop.f32.mrb[0].mxu0
  %v482 = vadd.f32 0.0, %v481
  %v483 = vpop.f32.mrb[0].mxu0
  %v484 = vpop.f32.mrb[0].mxu0
  %v485 = vadd.f32 0.0, %v484
  %v486 = vpop.f32.mrb[0].mxu0
  %487 = vmatprep.mubr.bf16.mxu0 0
  %488 = vmatmul.mubr.bf16.gmra.mrb[0].mxu0 %v306
  %v489 = vpop.f32.mrb[0].mxu0
  %v490 = vadd.f32 0.0, %v489
  %v491 = vpop.f32.mrb[0].mxu0
  %v492 = vpop.f32.mrb[0].mxu0
  %v493 = vadd.f32 0.0, %v492
  %v494 = vpop.f32.mrb[0].mxu0
  %495 = vmatprep.mubr.bf16.mxu0 0
  %496 = vmatmul.mubr.bf16.gmra.mrb[0].mxu0 %v309
  %v497 = vpop.f32.mrb[0].mxu0
  %v498 = vadd.f32 0.0, %v497
  %v499 = vpop.f32.mrb[0].mxu0
  %v500 = vpop.f32.mrb[0].mxu0
  %v501 = vadd.f32 0.0, %v500
  %v502 = vpop.f32.mrb[0].mxu0
  %503 = vmatprep.mubr.bf16.mxu0 0
  %504 = vmatmul.mubr.bf16.gmra.mrb[0].mxu0 %v312
  %v505 = vpop.f32.mrb[0].mxu0
  %v506 = vadd.f32 0.0, %v505
  %v507 = vpop.f32.mrb[0].mxu0
  %v508 = vpop.f32.mrb[0].mxu0
  %v509 = vadd.f32 0.0, %v508
  %v510 = vpop.f32.mrb[0].mxu0
  %511 = vmatprep.mubr.bf16.mxu0 0
  %512 = vmatmul.mubr.bf16.gmra.mrb[0].mxu0 %v315
  %v513 = vpop.f32.mrb[0].mxu0
  %v514 = vadd.f32 0.0, %v513
  %v515 = vpop.f32.mrb[0].mxu0
  %v516 = vpop.f32.mrb[0].mxu0
  %v517 = vadd.f32 0.0, %v516
  %v518 = vpop.f32.mrb[0].mxu0
  %519 = vmatprep.mubr.bf16.mxu0 0
  %520 = vmatmul.mubr.bf16.gmra.mrb[0].mxu0 %v318
  %v521 = vpop.f32.mrb[0].mxu0
  %v522 = vadd.f32 0.0, %v521
  %v523 = vpop.f32.mrb[0].mxu0
  %v524 = vpop.f32.mrb[0].mxu0
  %v525 = vadd.f32 0.0, %v524
  %v526 = vpop.f32.mrb[0].mxu0
  %527 = vmatprep.mubr.bf16.mxu0 0
  %528 = vmatmul.mubr.bf16.gmra.mrb[0].mxu0 %v321
  %v529 = vpop.f32.mrb[0].mxu0
  %v530 = vadd.f32 0.0, %v529
  %v531 = vpop.f32.mrb[0].mxu0
  %v532 = vpop.f32.mrb[0].mxu0
  %v533 = vadd.f32 0.0, %v532
  %v534 = vpop.f32.mrb[0].mxu0
  %535 = vmatprep.mubr.bf16.mxu0 0
  %536 = vmatmul.mubr.bf16.gmra.mrb[0].mxu0 %v324
  %v537 = vpop.f32.mrb[0].mxu0
  %v538 = vadd.f32 0.0, %v537
  %v539 = vpop.f32.mrb[0].mxu0
  %v540 = vpop.f32.mrb[0].mxu0
  %v541 = vadd.f32 0.0, %v540
  %v542 = vpop.f32.mrb[0].mxu0
  %543 = vmatprep.mubr.bf16.mxu0 0
  %544 = vmatmul.mubr.bf16.gmra.mrb[0].mxu0 %v327
  %v545 = vpop.f32.mrb[0].mxu0
  %v546 = vadd.f32 0.0, %v545
  %v547 = vpop.f32.mrb[0].mxu0
  %v548 = vpop.f32.mrb[0].mxu0
  %v549 = vadd.f32 0.0, %v548
  %v550 = vpop.f32.mrb[0].mxu0
  %551 = vmatprep.mubr.bf16.mxu0 0
  %552 = vmatmul.mubr.bf16.gmra.mrb[0].mxu0 %v330
  %v553 = vpop.f32.mrb[0].mxu0
  %v554 = vadd.f32 0.0, %v553
  %v555 = vpop.f32.mrb[0].mxu0
  %v556 = vpop.f32.mrb[0].mxu0
  %v557 = vadd.f32 0.0, %v556
  %v558 = vpop.f32.mrb[0].mxu0
  %559 = vmatprep.mubr.bf16.mxu0 0
  %560 = vmatmul.mubr.bf16.gmra.mrb[0].mxu0 %v333
  %v561 = vpop.f32.mrb[0].mxu0
  %v562 = vadd.f32 0.0, %v561
  %v563 = vpop.f32.mrb[0].mxu0
  %v564 = vpop.f32.mrb[0].mxu0
  %v565 = vadd.f32 0.0, %v564
  %v566 = vpop.f32.mrb[0].mxu0
  %567 = vmatprep.mubr.bf16.mxu0 0
  %568 = vmatmul.mubr.bf16.gmra.mrb[0].mxu0 %v336
  %v569 = vpop.f32.mrb[0].mxu0
  %v570 = vadd.f32 0.0, %v569
  %v571 = vpop.f32.mrb[0].mxu0
  %v572 = vpop.f32.mrb[0].mxu0
  %v573 = vadd.f32 0.0, %v572
  %v574 = vpop.f32.mrb[0].mxu0
  %575 = vmatprep.mubr.bf16.mxu0 0
  %576 = vmatmul.mubr.bf16.gmra.mrb[0].mxu0 %v339
  %v577 = vpop.f32.mrb[0].mxu0
  %v578 = vadd.f32 0.0, %v577
  %v579 = vpop.f32.mrb[0].mxu0
  %v580 = vpop.f32.mrb[0].mxu0
  %v581 = vadd.f32 0.0, %v580
  %v582 = vpop.f32.mrb[0].mxu0
  %583 = vmatprep.mubr.bf16.mxu0 0
  %584 = vmatmul.mubr.bf16.gmra.mrb[0].mxu0 %v342
  %v585 = vpop.f32.mrb[0].mxu0
  %v586 = vadd.f32 0.0, %v585
  %v587 = vpop.f32.mrb[0].mxu0
  %v588 = vpop.f32.mrb[0].mxu0
  %v589 = vadd.f32 0.0, %v588
  %v590 = vpop.f32.mrb[0].mxu0
  %591 = vmatprep.mubr.bf16.mxu0 0
  %592 = vmatmul.mubr.bf16.gmra.mrb[0].mxu0 %v345
  %v593 = vpop.f32.mrb[0].mxu0
  %v594 = vadd.f32 0.0, %v593
  %v595 = vpop.f32.mrb[0].mxu0
  %v596 = vpop.f32.mrb[0].mxu0
  %v597 = vadd.f32 0.0, %v596
  %v598 = vpop.f32.mrb[0].mxu0
  %599 = vmatprep.mubr.bf16.mxu0 0
  %600 = vmatmul.mubr.bf16.gmra.mrb[0].mxu0 %v348
  %v601 = vpop.f32.mrb[0].mxu0
  %v602 = vadd.f32 0.0, %v601
  %v603 = vpop.f32.mrb[0].mxu0
  %v604 = vpop.f32.mrb[0].mxu0
  %v605 = vadd.f32 0.0, %v604
  %v606 = vpop.f32.mrb[0].mxu0
  %607 = vmatprep.mubr.bf16.mxu0 0
  %608 = vmatmul.mubr.bf16.gmra.mrb[0].mxu0 %v351
  %v609 = vpop.f32.mrb[0].mxu0
  %v610 = vadd.f32 0.0, %v609
  %v611 = vpop.f32.mrb[0].mxu0
  %v612 = vpop.f32.mrb[0].mxu0
  %v613 = vadd.f32 0.0, %v612
  %v614 = vpop.f32.mrb[0].mxu0
  %615 = vmatprep.mubr.bf16.mxu0 0
  %616 = vmatmul.mubr.bf16.gmra.mrb[0].mxu0 %v354
  %v617 = vpop.f32.mrb[0].mxu0
  %v618 = vadd.f32 0.0, %v617
  %v619 = vpop.f32.mrb[0].mxu0
  %v620 = vpop.f32.mrb[0].mxu0
  %v621 = vadd.f32 0.0, %v620
  %v622 = vpop.f32.mrb[0].mxu0
  %623 = vmatprep.mubr.bf16.mxu0 0
  %624 = vmatmul.mubr.bf16.gmra.mrb[0].mxu0 %v357
  %v625 = vpop.f32.mrb[0].mxu0
  %v626 = vadd.f32 0.0, %v625
  %v627 = vpop.f32.mrb[0].mxu0
  %v628 = vpop.f32.mrb[0].mxu0
  %v629 = vadd.f32 0.0, %v628
  %v630 = vpop.f32.mrb[0].mxu0
  %631 = vmatprep.mubr.bf16.mxu0 0
  %632 = vmatmul.mubr.bf16.gmra.mrb[0].mxu0 %v360
  %v633 = vpop.f32.mrb[0].mxu0
  %v634 = vadd.f32 0.0, %v633
  %v635 = vpop.f32.mrb[0].mxu0
  %v636 = vpop.f32.mrb[0].mxu0
  %v637 = vadd.f32 0.0, %v636
  %v638 = vpop.f32.mrb[0].mxu0
  %639 = vmatprep.mubr.bf16.mxu0 0
  %640 = vmatmul.mubr.bf16.gmra.mrb[0].mxu0 %v363
  %v641 = vpop.f32.mrb[0].mxu0
  %v642 = vadd.f32 0.0, %v641
  %v643 = vpop.f32.mrb[0].mxu0
  %v644 = vpop.f32.mrb[0].mxu0
  %v645 = vadd.f32 0.0, %v644
  %v646 = vpop.f32.mrb[0].mxu0
  %647 = vmatprep.mubr.bf16.mxu0 0
  %648 = vmatmul.mubr.bf16.gmra.mrb[0].mxu0 %v366
  %v649 = vpop.f32.mrb[0].mxu0
  %v650 = vadd.f32 0.0, %v649
  %v651 = vpop.f32.mrb[0].mxu0
  %v652 = vpop.f32.mrb[0].mxu0
  %v653 = vadd.f32 0.0, %v652
  %v654 = vpop.f32.mrb[0].mxu0
  %655 = vmatprep.mubr.bf16.mxu0 0
  %656 = vmatmul.mubr.bf16.gmra.mrb[0].mxu0 %v369
  %v657 = vpop.f32.mrb[0].mxu0
  %v658 = vadd.f32 0.0, %v657
  %v659 = vpop.f32.mrb[0].mxu0
  %v660 = vpop.f32.mrb[0].mxu0
  %v661 = vadd.f32 0.0, %v660
  %v662 = vpop.f32.mrb[0].mxu0
  %663 = vdwg.mxu0
  %v664 = vpack.c.bf16 %v413, %v410
  %v665 = vpack.c.bf16 %v421, %v418
  %v666 = vpack.c.bf16 %v429, %v426
  %v667 = vpack.c.bf16 %v437, %v434
  %v668 = vpack.c.bf16 %v445, %v442
  %v669 = vpack.c.bf16 %v453, %v450
  %v670 = vpack.c.bf16 %v461, %v458
  %v671 = vpack.c.bf16 %v469, %v466
  %v672 = vpack.c.bf16 %v477, %v474
  %v673 = vpack.c.bf16 %v485, %v482
  %v674 = vpack.c.bf16 %v493, %v490
  %v675 = vpack.c.bf16 %v501, %v498
  %v676 = vpack.c.bf16 %v509, %v506
  %v677 = vpack.c.bf16 %v517, %v514
  %v678 = vpack.c.bf16 %v525, %v522
  %v679 = vpack.c.bf16 %v533, %v530
  %v680 = vpack.c.bf16 %v541, %v538
  %v681 = vpack.c.bf16 %v549, %v546
  %v682 = vpack.c.bf16 %v557, %v554
  %v683 = vpack.c.bf16 %v565, %v562
  %v684 = vpack.c.bf16 %v573, %v570
  %v685 = vpack.c.bf16 %v581, %v578
  %v686 = vpack.c.bf16 %v589, %v586
  %v687 = vpack.c.bf16 %v597, %v594
  %v688 = vpack.c.bf16 %v605, %v602
  %v689 = vpack.c.bf16 %v613, %v610
  %v690 = vpack.c.bf16 %v621, %v618
  %v691 = vpack.c.bf16 %v629, %v626
  %v692 = vpack.c.bf16 %v637, %v634
  %v693 = vpack.c.bf16 %v645, %v642
  %v694 = vpack.c.bf16 %v653, %v650
  %v695 = vpack.c.bf16 %v661, %v658
  %v728 = vunpack.c.l.b16 %v664
  %v729 = vunpack.c.h.b16 %v664
  %v730 = vunpack.c.l.b16 %v665
  %v731 = vunpack.c.h.b16 %v665
  %v732 = vunpack.c.l.b16 %v666
  %v733 = vunpack.c.h.b16 %v666
  %v734 = vunpack.c.l.b16 %v667
  %v735 = vunpack.c.h.b16 %v667
  %v736 = vunpack.c.l.b16 %v668
  %v737 = vunpack.c.h.b16 %v668
  %v738 = vunpack.c.l.b16 %v669
  %v739 = vunpack.c.h.b16 %v669
  %v740 = vunpack.c.l.b16 %v670
  %v741 = vunpack.c.h.b16 %v670
  %v742 = vunpack.c.l.b16 %v671
  %v743 = vunpack.c.h.b16 %v671
  %v744 = vunpack.c.l.b16 %v672
  %v745 = vunpack.c.h.b16 %v672
  %v746 = vunpack.c.l.b16 %v673
  %v747 = vunpack.c.h.b16 %v673
  %v748 = vunpack.c.l.b16 %v674
  %v749 = vunpack.c.h.b16 %v674
  %v750 = vunpack.c.l.b16 %v675
  %v751 = vunpack.c.h.b16 %v675
  %v752 = vunpack.c.l.b16 %v676
  %v753 = vunpack.c.h.b16 %v676
  %v754 = vunpack.c.l.b16 %v677
  %v755 = vunpack.c.h.b16 %v677
  %v756 = vunpack.c.l.b16 %v678
  %v757 = vunpack.c.h.b16 %v678
  %v758 = vunpack.c.l.b16 %v679
  %v759 = vunpack.c.h.b16 %v679
  %v760 = vunpack.c.l.b16 %v680
  %v761 = vunpack.c.h.b16 %v680
  %v762 = vunpack.c.l.b16 %v681
  %v763 = vunpack.c.h.b16 %v681
  %v764 = vunpack.c.l.b16 %v682
  %v765 = vunpack.c.h.b16 %v682
  %v766 = vunpack.c.l.b16 %v683
  %v767 = vunpack.c.h.b16 %v683
  %v768 = vunpack.c.l.b16 %v684
  %v769 = vunpack.c.h.b16 %v684
  %v770 = vunpack.c.l.b16 %v685
  %v771 = vunpack.c.h.b16 %v685
  %v772 = vunpack.c.l.b16 %v686
  %v773 = vunpack.c.h.b16 %v686
  %v774 = vunpack.c.l.b16 %v687
  %v775 = vunpack.c.h.b16 %v687
  %v776 = vunpack.c.l.b16 %v688
  %v777 = vunpack.c.h.b16 %v688
  %v778 = vunpack.c.l.b16 %v689
  %v779 = vunpack.c.h.b16 %v689
  %v780 = vunpack.c.l.b16 %v690
  %v781 = vunpack.c.h.b16 %v690
  %v782 = vunpack.c.l.b16 %v691
  %v783 = vunpack.c.h.b16 %v691
  %v784 = vunpack.c.l.b16 %v692
  %v785 = vunpack.c.h.b16 %v692
  %v786 = vunpack.c.l.b16 %v693
  %v787 = vunpack.c.h.b16 %v693
  %v788 = vunpack.c.l.b16 %v694
  %v789 = vunpack.c.h.b16 %v694
  %v790 = vunpack.c.l.b16 %v695
  %v791 = vunpack.c.h.b16 %v695
  %v792 = vpack.c.b16 %v728, %v728
  %v793 = vpack.c.b16 %v729, %v729
  %v794 = vpack.c.b16 %v730, %v730
  %v795 = vpack.c.b16 %v731, %v731
  %v796 = vpack.c.b16 %v732, %v732
  %v797 = vpack.c.b16 %v733, %v733
  %v798 = vpack.c.b16 %v734, %v734
  %v799 = vpack.c.b16 %v735, %v735
  %v800 = vpack.c.b16 %v736, %v736
  %v801 = vpack.c.b16 %v737, %v737
  %v802 = vpack.c.b16 %v738, %v738
  %v803 = vpack.c.b16 %v739, %v739
  %v804 = vpack.c.b16 %v740, %v740
  %v805 = vpack.c.b16 %v741, %v741
  %v806 = vpack.c.b16 %v742, %v742
  %v807 = vpack.c.b16 %v743, %v743
  %v808 = vpack.c.b16 %v744, %v744
  %v809 = vpack.c.b16 %v745, %v745
  %v810 = vpack.c.b16 %v746, %v746
  %v811 = vpack.c.b16 %v747, %v747
  %v812 = vpack.c.b16 %v748, %v748
  %v813 = vpack.c.b16 %v749, %v749
  %v814 = vpack.c.b16 %v750, %v750
  %v815 = vpack.c.b16 %v751, %v751
  %v816 = vpack.c.b16 %v752, %v752
  %v817 = vpack.c.b16 %v753, %v753
  %v818 = vpack.c.b16 %v754, %v754
  %v819 = vpack.c.b16 %v755, %v755
  %v820 = vpack.c.b16 %v756, %v756
  %v821 = vpack.c.b16 %v757, %v757
  %v822 = vpack.c.b16 %v758, %v758
  %v823 = vpack.c.b16 %v759, %v759
  %v824 = vpack.c.b16 %v760, %v760
  %v825 = vpack.c.b16 %v761, %v761
  %v826 = vpack.c.b16 %v762, %v762
  %v827 = vpack.c.b16 %v763, %v763
  %v828 = vpack.c.b16 %v764, %v764
  %v829 = vpack.c.b16 %v765, %v765
  %v830 = vpack.c.b16 %v766, %v766
  %v831 = vpack.c.b16 %v767, %v767
  %v832 = vpack.c.b16 %v768, %v768
  %v833 = vpack.c.b16 %v769, %v769
  %v834 = vpack.c.b16 %v770, %v770
  %v835 = vpack.c.b16 %v771, %v771
  %v836 = vpack.c.b16 %v772, %v772
  %v837 = vpack.c.b16 %v773, %v773
  %v838 = vpack.c.b16 %v774, %v774
  %v839 = vpack.c.b16 %v775, %v775
  %v840 = vpack.c.b16 %v776, %v776
  %v841 = vpack.c.b16 %v777, %v777
  %v842 = vpack.c.b16 %v778, %v778
  %v843 = vpack.c.b16 %v779, %v779
  %v844 = vpack.c.b16 %v780, %v780
  %v845 = vpack.c.b16 %v781, %v781
  %v846 = vpack.c.b16 %v782, %v782
  %v847 = vpack.c.b16 %v783, %v783
  %v848 = vpack.c.b16 %v784, %v784
  %v849 = vpack.c.b16 %v785, %v785
  %v850 = vpack.c.b16 %v786, %v786
  %v851 = vpack.c.b16 %v787, %v787
  %v852 = vpack.c.b16 %v788, %v788
  %v853 = vpack.c.b16 %v789, %v789
  %v854 = vpack.c.b16 %v790, %v790
  %v855 = vpack.c.b16 %v791, %v791
  %920 = vst [vmem:[%s2] sm:$0xf] %v792
  %921 = vst [vmem:[%s2 + $0x4] sm:$0xf] %v793
  %922 = vst [vmem:[%s2 + $0x8] sm:$0xf] %v794
  %923 = vst [vmem:[%s2 + $0xc] sm:$0xf] %v795
  %924 = vst [vmem:[%s2 + $0x10] sm:$0xf] %v796
  %925 = vst [vmem:[%s2 + $0x14] sm:$0xf] %v797
  %926 = vst [vmem:[%s2 + $0x18] sm:$0xf] %v798
  %927 = vst [vmem:[%s2 + $0x1c] sm:$0xf] %v799
  %928 = vst [vmem:[%s2 + $0x20] sm:$0xf] %v800
  %929 = vst [vmem:[%s2 + $0x24] sm:$0xf] %v801
  %930 = vst [vmem:[%s2 + $0x28] sm:$0xf] %v802
  %931 = vst [vmem:[%s2 + $0x2c] sm:$0xf] %v803
  %932 = vst [vmem:[%s2 + $0x30] sm:$0xf] %v804
  %933 = vst [vmem:[%s2 + $0x34] sm:$0xf] %v805
  %934 = vst [vmem:[%s2 + $0x38] sm:$0xf] %v806
  %935 = vst [vmem:[%s2 + $0x3c] sm:$0xf] %v807
  %936 = vst [vmem:[%s2 + $0x40] sm:$0xf] %v808
  %937 = vst [vmem:[%s2 + $0x44] sm:$0xf] %v809
  %938 = vst [vmem:[%s2 + $0x48] sm:$0xf] %v810
  %939 = vst [vmem:[%s2 + $0x4c] sm:$0xf] %v811
  %940 = vst [vmem:[%s2 + $0x50] sm:$0xf] %v812
  %941 = vst [vmem:[%s2 + $0x54] sm:$0xf] %v813
  %942 = vst [vmem:[%s2 + $0x58] sm:$0xf] %v814
  %943 = vst [vmem:[%s2 + $0x5c] sm:$0xf] %v815
  %944 = vst [vmem:[%s2 + $0x60] sm:$0xf] %v816
  %945 = vst [vmem:[%s2 + $0x64] sm:$0xf] %v817
  %946 = vst [vmem:[%s2 + $0x68] sm:$0xf] %v818
  %947 = vst [vmem:[%s2 + $0x6c] sm:$0xf] %v819
  %948 = vst [vmem:[%s2 + $0x70] sm:$0xf] %v820
  %949 = vst [vmem:[%s2 + $0x74] sm:$0xf] %v821
  %950 = vst [vmem:[%s2 + $0x78] sm:$0xf] %v822
  %951 = vst [vmem:[%s2 + $0x7c] sm:$0xf] %v823
  %952 = vst [vmem:[%s2 + $0x80] sm:$0xf] %v824
  %953 = vst [vmem:[%s2 + $0x84] sm:$0xf] %v825
  %954 = vst [vmem:[%s2 + $0x88] sm:$0xf] %v826
  %955 = vst [vmem:[%s2 + $0x8c] sm:$0xf] %v827
  %956 = vst [vmem:[%s2 + $0x90] sm:$0xf] %v828
  %957 = vst [vmem:[%s2 + $0x94] sm:$0xf] %v829
  %958 = vst [vmem:[%s2 + $0x98] sm:$0xf] %v830
  %959 = vst [vmem:[%s2 + $0x9c] sm:$0xf] %v831
  %960 = vst [vmem:[%s2 + $0xa0] sm:$0xf] %v832
  %961 = vst [vmem:[%s2 + $0xa4] sm:$0xf] %v833
  %962 = vst [vmem:[%s2 + $0xa8] sm:$0xf] %v834
  %963 = vst [vmem:[%s2 + $0xac] sm:$0xf] %v835
  %964 = vst [vmem:[%s2 + $0xb0] sm:$0xf] %v836
  %965 = vst [vmem:[%s2 + $0xb4] sm:$0xf] %v837
  %966 = vst [vmem:[%s2 + $0xb8] sm:$0xf] %v838
  %967 = vst [vmem:[%s2 + $0xbc] sm:$0xf] %v839
  %968 = vst [vmem:[%s2 + $0xc0] sm:$0xf] %v840
  %969 = vst [vmem:[%s2 + $0xc4] sm:$0xf] %v841
  %970 = vst [vmem:[%s2 + $0xc8] sm:$0xf] %v842
  %971 = vst [vmem:[%s2 + $0xcc] sm:$0xf] %v843
  %972 = vst [vmem:[%s2 + $0xd0] sm:$0xf] %v844
  %973 = vst [vmem:[%s2 + $0xd4] sm:$0xf] %v845
  %974 = vst [vmem:[%s2 + $0xd8] sm:$0xf] %v846
  %975 = vst [vmem:[%s2 + $0xdc] sm:$0xf] %v847
  %976 = vst [vmem:[%s2 + $0xe0] sm:$0xf] %v848
  %977 = vst [vmem:[%s2 + $0xe4] sm:$0xf] %v849
  %978 = vst [vmem:[%s2 + $0xe8] sm:$0xf] %v850
  %979 = vst [vmem:[%s2 + $0xec] sm:$0xf] %v851
  %980 = vst [vmem:[%s2 + $0xf0] sm:$0xf] %v852
  %981 = vst [vmem:[%s2 + $0xf4] sm:$0xf] %v853
  %982 = vst [vmem:[%s2 + $0xf8] sm:$0xf] %v854
  %983 = vst [vmem:[%s2 + $0xfc] sm:$0xf] %v855
  %v984 = vadd.f32 %v410, %v413
  %v985 = vadd.f32 %v984, %v418
  %v986 = vadd.f32 %v985, %v421
  %v987 = vadd.f32 %v986, %v426
  %v988 = vadd.f32 %v987, %v429
  %v989 = vadd.f32 %v988, %v434
  %v990 = vadd.f32 %v989, %v437
  %v991 = vadd.f32 %v990, %v442
  %v992 = vadd.f32 %v991, %v445
  %v993 = vadd.f32 %v992, %v450
  %v994 = vadd.f32 %v993, %v453
  %v995 = vadd.f32 %v994, %v458
  %v996 = vadd.f32 %v995, %v461
  %v997 = vadd.f32 %v996, %v466
  %v998 = vadd.f32 %v997, %v469
  %v999 = vadd.f32 %v998, %v474
  %v1000 = vadd.f32 %v999, %v477
  %v1001 = vadd.f32 %v1000, %v482
  %v1002 = vadd.f32 %v1001, %v485
  %v1003 = vadd.f32 %v1002, %v490
  %v1004 = vadd.f32 %v1003, %v493
  %v1005 = vadd.f32 %v1004, %v498
  %v1006 = vadd.f32 %v1005, %v501
  %v1007 = vadd.f32 %v1006, %v506
  %v1008 = vadd.f32 %v1007, %v509
  %v1009 = vadd.f32 %v1008, %v514
  %v1010 = vadd.f32 %v1009, %v517
  %v1011 = vadd.f32 %v1010, %v522
  %v1012 = vadd.f32 %v1011, %v525
  %v1013 = vadd.f32 %v1012, %v530
  %v1014 = vadd.f32 %v1013, %v533
  %v1015 = vadd.f32 %v1014, %v538
  %v1016 = vadd.f32 %v1015, %v541
  %v1017 = vadd.f32 %v1016, %v546
  %v1018 = vadd.f32 %v1017, %v549
  %v1019 = vadd.f32 %v1018, %v554
  %v1020 = vadd.f32 %v1019, %v557
  %v1021 = vadd.f32 %v1020, %v562
  %v1022 = vadd.f32 %v1021, %v565
  %v1023 = vadd.f32 %v1022, %v570
  %v1024 = vadd.f32 %v1023, %v573
  %v1025 = vadd.f32 %v1024, %v578
  %v1026 = vadd.f32 %v1025, %v581
  %v1027 = vadd.f32 %v1026, %v586
  %v1028 = vadd.f32 %v1027, %v589
  %v1029 = vadd.f32 %v1028, %v594
  %v1030 = vadd.f32 %v1029, %v597
  %v1031 = vadd.f32 %v1030, %v602
  %v1032 = vadd.f32 %v1031, %v605
  %v1033 = vadd.f32 %v1032, %v610
  %v1034 = vadd.f32 %v1033, %v613
  %v1035 = vadd.f32 %v1034, %v618
  %v1036 = vadd.f32 %v1035, %v621
  %v1037 = vadd.f32 %v1036, %v626
  %v1038 = vadd.f32 %v1037, %v629
  %v1039 = vadd.f32 %v1038, %v634
  %v1040 = vadd.f32 %v1039, %v637
  %v1041 = vadd.f32 %v1040, %v642
  %v1042 = vadd.f32 %v1041, %v645
  %v1043 = vadd.f32 %v1042, %v650
  %v1044 = vadd.f32 %v1043, %v653
  %v1045 = vadd.f32 %v1044, %v658
  %v1046 = vadd.f32 %v1045, %v661
  %v1047 = vrot.slane %v1046, 4
  %v1048 = vadd.f32 %v1046, %v1047
  %v1049 = vrot.slane %v1048, 2
  %v1050 = vadd.f32 %v1048, %v1049
  %v1051 = vrot.slane %v1050, 1
  %v1052 = vadd.f32 %v1050, %v1051
  %v1053 = vmul.f32 %v410, %v410
  %v1054 = vmul.f32 %v413, %v413
  %v1055 = vmul.f32 %v418, %v418
  %v1056 = vmul.f32 %v421, %v421
  %v1057 = vmul.f32 %v426, %v426
  %v1058 = vmul.f32 %v429, %v429
  %v1059 = vmul.f32 %v434, %v434
  %v1060 = vmul.f32 %v437, %v437
  %v1061 = vmul.f32 %v442, %v442
  %v1062 = vmul.f32 %v445, %v445
  %v1063 = vmul.f32 %v450, %v450
  %v1064 = vmul.f32 %v453, %v453
  %v1065 = vmul.f32 %v458, %v458
  %v1066 = vmul.f32 %v461, %v461
  %v1067 = vmul.f32 %v466, %v466
  %v1068 = vmul.f32 %v469, %v469
  %v1069 = vmul.f32 %v474, %v474
  %v1070 = vmul.f32 %v477, %v477
  %v1071 = vmul.f32 %v482, %v482
  %v1072 = vmul.f32 %v485, %v485
  %v1073 = vmul.f32 %v490, %v490
  %v1074 = vmul.f32 %v493, %v493
  %v1075 = vmul.f32 %v498, %v498
  %v1076 = vmul.f32 %v501, %v501
  %v1077 = vmul.f32 %v506, %v506
  %v1078 = vmul.f32 %v509, %v509
  %v1079 = vmul.f32 %v514, %v514
  %v1080 = vmul.f32 %v517, %v517
  %v1081 = vmul.f32 %v522, %v522
  %v1082 = vmul.f32 %v525, %v525
  %v1083 = vmul.f32 %v530, %v530
  %v1084 = vmul.f32 %v533, %v533
  %v1085 = vmul.f32 %v538, %v538
  %v1086 = vmul.f32 %v541, %v541
  %v1087 = vmul.f32 %v546, %v546
  %v1088 = vmul.f32 %v549, %v549
  %v1089 = vmul.f32 %v554, %v554
  %v1090 = vmul.f32 %v557, %v557
  %v1091 = vmul.f32 %v562, %v562
  %v1092 = vmul.f32 %v565, %v565
  %v1093 = vmul.f32 %v570, %v570
  %v1094 = vmul.f32 %v573, %v573
  %v1095 = vmul.f32 %v578, %v578
  %v1096 = vmul.f32 %v581, %v581
  %v1097 = vmul.f32 %v586, %v586
  %v1098 = vmul.f32 %v589, %v589
  %v1099 = vmul.f32 %v594, %v594
  %v1100 = vmul.f32 %v597, %v597
  %v1101 = vmul.f32 %v602, %v602
  %v1102 = vmul.f32 %v605, %v605
  %v1103 = vmul.f32 %v610, %v610
  %v1104 = vmul.f32 %v613, %v613
  %v1105 = vmul.f32 %v618, %v618
  %v1106 = vmul.f32 %v621, %v621
  %v1107 = vmul.f32 %v626, %v626
  %v1108 = vmul.f32 %v629, %v629
  %v1109 = vmul.f32 %v634, %v634
  %v1110 = vmul.f32 %v637, %v637
  %v1111 = vmul.f32 %v642, %v642
  %v1112 = vmul.f32 %v645, %v645
  %v1113 = vmul.f32 %v650, %v650
  %v1114 = vmul.f32 %v653, %v653
  %v1115 = vmul.f32 %v658, %v658
  %v1116 = vmul.f32 %v661, %v661
  %v1117 = vadd.f32 %v1053, %v1054
  %v1118 = vadd.f32 %v1117, %v1055
  %v1119 = vadd.f32 %v1118, %v1056
  %v1120 = vadd.f32 %v1119, %v1057
  %v1121 = vadd.f32 %v1120, %v1058
  %v1122 = vadd.f32 %v1121, %v1059
  %v1123 = vadd.f32 %v1122, %v1060
  %v1124 = vadd.f32 %v1123, %v1061
  %v1125 = vadd.f32 %v1124, %v1062
  %v1126 = vadd.f32 %v1125, %v1063
  %v1127 = vadd.f32 %v1126, %v1064
  %v1128 = vadd.f32 %v1127, %v1065
  %v1129 = vadd.f32 %v1128, %v1066
  %v1130 = vadd.f32 %v1129, %v1067
  %v1131 = vadd.f32 %v1130, %v1068
  %v1132 = vadd.f32 %v1131, %v1069
  %v1133 = vadd.f32 %v1132, %v1070
  %v1134 = vadd.f32 %v1133, %v1071
  %v1135 = vadd.f32 %v1134, %v1072
  %v1136 = vadd.f32 %v1135, %v1073
  %v1137 = vadd.f32 %v1136, %v1074
  %v1138 = vadd.f32 %v1137, %v1075
  %v1139 = vadd.f32 %v1138, %v1076
  %v1140 = vadd.f32 %v1139, %v1077
  %v1141 = vadd.f32 %v1140, %v1078
  %v1142 = vadd.f32 %v1141, %v1079
  %v1143 = vadd.f32 %v1142, %v1080
  %v1144 = vadd.f32 %v1143, %v1081
  %v1145 = vadd.f32 %v1144, %v1082
  %v1146 = vadd.f32 %v1145, %v1083
  %v1147 = vadd.f32 %v1146, %v1084
  %v1148 = vadd.f32 %v1147, %v1085
  %v1149 = vadd.f32 %v1148, %v1086
  %v1150 = vadd.f32 %v1149, %v1087
  %v1151 = vadd.f32 %v1150, %v1088
  %v1152 = vadd.f32 %v1151, %v1089
  %v1153 = vadd.f32 %v1152, %v1090
  %v1154 = vadd.f32 %v1153, %v1091
  %v1155 = vadd.f32 %v1154, %v1092
  %v1156 = vadd.f32 %v1155, %v1093
  %v1157 = vadd.f32 %v1156, %v1094
  %v1158 = vadd.f32 %v1157, %v1095
  %v1159 = vadd.f32 %v1158, %v1096
  %v1160 = vadd.f32 %v1159, %v1097
  %v1161 = vadd.f32 %v1160, %v1098
  %v1162 = vadd.f32 %v1161, %v1099
  %v1163 = vadd.f32 %v1162, %v1100
  %v1164 = vadd.f32 %v1163, %v1101
  %v1165 = vadd.f32 %v1164, %v1102
  %v1166 = vadd.f32 %v1165, %v1103
  %v1167 = vadd.f32 %v1166, %v1104
  %v1168 = vadd.f32 %v1167, %v1105
  %v1169 = vadd.f32 %v1168, %v1106
  %v1170 = vadd.f32 %v1169, %v1107
  %v1171 = vadd.f32 %v1170, %v1108
  %v1172 = vadd.f32 %v1171, %v1109
  %v1173 = vadd.f32 %v1172, %v1110
  %v1174 = vadd.f32 %v1173, %v1111
  %v1175 = vadd.f32 %v1174, %v1112
  %v1176 = vadd.f32 %v1175, %v1113
  %v1177 = vadd.f32 %v1176, %v1114
  %v1178 = vadd.f32 %v1177, %v1115
  %v1179 = vadd.f32 %v1178, %v1116
  %v1180 = vrot.slane %v1179, 4
  %v1181 = vadd.f32 %v1179, %v1180
  %v1182 = vrot.slane %v1181, 2
  %v1183 = vadd.f32 %v1181, %v1182
  %v1184 = vrot.slane %v1183, 1
  %v1185 = vadd.f32 %v1183, %v1184
  %vm1186 = vcmask 1040384
  %v1187 = vsel %vm1186, %v1052, %v1185
  %vm1188 = vcmask 1041408
  %v1189 = vsel %vm1188, %v1187, 0.0
  %1190 = vst [vmem:[%s3] sm:$0xff] %v1189
  // Predicated region
  $region10: #{generator_forward.15} parent=0 // pred_check
    _
  $region11: #{generator_forward.15} parent=0 // pred_check_branch
    %1192 = sbr.rel (0) target = $region13
  $region12: #{generator_forward.15} parent=0 // pred_region
    _
  $region13: #{generator_forward.15} parent=0 // pred_fallthru
    _
  // Predicated region
  $region14: #{generator_forward.15} parent=0 // pred_check
    _
  $region15: #{generator_forward.15} parent=0 // pred_check_branch
    %1194 = sbr.rel (0) target = $region17
  $region16: #{generator_forward.15} parent=0 // pred_region
    _
  $region17: #{generator_forward.15} parent=0 // pred_fallthru
    _
  // Predicated region
  $region18: #{generator_forward.15} parent=0 // pred_check
    _
  $region19: #{generator_forward.15} parent=0 // pred_check_branch
    %1196 = sbr.rel (0) target = $region21
  $region20: #{generator_forward.15} parent=0 // pred_region
    _
  $region21: #{generator_forward.15} parent=0 // pred_fallthru
    _
  // Predicated region
  $region22: #{generator_forward.15} parent=0 // pred_check
    _
  $region23: #{generator_forward.15} parent=0 // pred_check_branch
    %1198 = sbr.rel (0) target = $region25
  $region24: #{generator_forward.15} parent=0 // pred_region
    _
  $region25: #{generator_forward.15} parent=0 // pred_fallthru
    _

// kernel: generator_forward.17
$region0: #{generator_forward.17}
  #allocation0 [shape = 'u32[]', space=smem, size = 0x4, offset = 0x4, fixed_abs, tag = 'smem constant byte address 0x4 - core index']
  #allocation1 [shape = 'u32[144,128]{1,0:T(1,128)}', space=vmem, size = 0x12000, scoped, tag = 'internal scratch']
  %s0 = inlined_call_operand.vmem [shape: bf16[2048,36], index: 0, kind: input, shape index: {}]
  %s1 = inlined_call_operand.vmem [shape: bf16[36,128], index: 1, kind: input, shape index: {}]
  %s2 = inlined_call_operand.vmem [shape: bf16[2048,128], index: 2, kind: output, shape index: {}]
  %s3 = sld [smem:[#allocation0]]
  $region41: #{generator_forward.17} parent=0
    _
  %s5 = ssub.s32 1, %s3
  %s6 = scalar_select 0, %s5, %s3
  loop: start=0, step=1, limit=4
  $region2: #{generator_forward.17} parent=0 // loop_pre_header
    _
  $region3: #{generator_forward.17} parent=0 // loop_header
    %s8 = sphi 0, %s12
    %p9 = scmp.ge.s32.totalorder %s8, 4
    %s18 = sphi 0, %s20
    %s21 = sphi 0, %s18
    %s22 = sphi 0, %s21
    %s38 = sphi 0, %s22
    %s42 = sphi 0, %s42
    %s44 = sphi 0, %s42
    %s45 = sphi 0, %s44
    %s59 = sphi 0, %s45
    %s65 = sphi 0, %s67
    %s68 = sphi 0, %s65
    %s69 = sphi 0, %s68
    %s85 = sphi 0, %s69
  $region4: #{generator_forward.17} parent=0 // loop_header_branch
    %11 = sbr.rel (%p9) target = $region8
  $region5: #{generator_forward.17} parent=0 // loop_body
    %s13 = ssub.s32 %s8, 1
    %s14 = ssub.s32 %s8, 2
    %s15 = sadd.s32 %s8, 1
    %s16 = ssub.s32 %s8, %s15
    %p17 = scmp.eq.s32.totalorder %s16, 0
    %s19 = sadd.s32 %s18, 1
    %s20 = scalar_select %p17, %s18, %s19
    %p23 = pneg %p17
    %p24 = scmp.eq.s32.totalorder %s8, 1
    %p25 = por %p23, %p24
    %p26 = scmp.ne.s32.totalorder %s18, %s21
    %p27 = scmp.eq.s32.totalorder %s8, 0
    %p28 = por %p26, %p27
    %p29 = scmp.ne.s32.totalorder %s18, %s21
    %p30 = scmp.eq.s32.totalorder %s13, 1
    %p31 = por %p29, %p30
    %p32 = scmp.ne.s32.totalorder %s21, %s22
    %p33 = scmp.eq.s32.totalorder %s13, 0
    %p34 = por %p32, %p33
    %p35 = scmp.ne.s32.totalorder %s21, %s22
    %p36 = scmp.eq.s32.totalorder %s14, 1
    %p37 = por %p35, %p36
    %p39 = scmp.ne.s32.totalorder %s22, %s38
    %p40 = scmp.eq.s32.totalorder %s14, 0
    %p41 = por %p39, %p40
    %s43 = sadd.s32 %s42, 1
    %p46 = scmp.eq.s32.totalorder %s8, 1
    %p47 = scmp.ne.s32.totalorder %s42, %s44
    %p48 = scmp.eq.s32.totalorder %s8, 0
    %p49 = por %p47, %p48
    %p50 = scmp.ne.s32.totalorder %s42, %s44
    %p51 = scmp.eq.s32.totalorder %s13, 1
    %p52 = por %p50, %p51
    %p53 = scmp.ne.s32.totalorder %s44, %s45
    %p54 = scmp.eq.s32.totalorder %s13, 0
    %p55 = por %p53, %p54
    %p56 = scmp.ne.s32.totalorder %s44, %s45
    %p57 = scmp.eq.s32.totalorder %s14, 1
    %p58 = por %p56, %p57
    %p60 = scmp.ne.s32.totalorder %s45, %s59
    %p61 = scmp.eq.s32.totalorder %s14, 0
    %p62 = por %p60, %p61
    %s63 = ssub.s32 %s8, %s15
    %p64 = scmp.eq.s32.totalorder %s63, 0
    %s66 = sadd.s32 %s65, 1
    %s67 = scalar_select %p64, %s65, %s66
    %p70 = pneg %p64
    %p71 = scmp.eq.s32.totalorder %s8, 1
    %p72 = por %p70, %p71
    %p73 = scmp.ne.s32.totalorder %s65, %s68
    %p74 = scmp.eq.s32.totalorder %s8, 0
    %p75 = por %p73, %p74
    %p76 = scmp.ne.s32.totalorder %s65, %s68
    %p77 = scmp.eq.s32.totalorder %s13, 1
    %p78 = por %p76, %p77
    %p79 = scmp.ne.s32.totalorder %s68, %s69
    %p80 = scmp.eq.s32.totalorder %s13, 0
    %p81 = por %p79, %p80
    %p82 = scmp.ne.s32.totalorder %s68, %s69
    %p83 = scmp.eq.s32.totalorder %s14, 1
    %p84 = por %p82, %p83
    %p86 = scmp.ne.s32.totalorder %s69, %s85
    %p87 = scmp.eq.s32.totalorder %s14, 0
    %p88 = por %p86, %p87
    %p89 = scmp.le.s32.totalorder 1, %s8
    %p90 = scmp.lt.s32.totalorder %s8, 3
    %p91 = pnand %p89, %p90
    %p92 = pneg %p91
    // Predicated region
    $region9: #{generator_forward.17} parent=5 // pred_check
      _
    $region10: #{generator_forward.17} parent=5 // pred_check_branch
      %94 = sbr.rel (%p91) target = $region12
    $region11: #{generator_forward.17} parent=5 // pred_region
      %s95 = ssub.s32 %s8, 1
      // Predicated region
      $region13: #{generator_forward.17} parent=11 // pred_check
        %p96 = pneg %p55
      $region14: #{generator_forward.17} parent=11 // pred_check_branch
        %98 = sbr.rel (%p96) target = $region16
      $region15: #{generator_forward.17} parent=11 // pred_region
        _
      $region16: #{generator_forward.17} parent=11 // pred_fallthru
        _
    $region12: #{generator_forward.17} parent=5 // pred_fallthru
      _
    %p99 = scmp.lt.s32.totalorder %s8, 2
    // Predicated region
    $region17: #{generator_forward.17} parent=5 // pred_check
      %p100 = pneg %p99
    $region18: #{generator_forward.17} parent=5 // pred_check_branch
      %102 = sbr.rel (%p100) target = $region20
    $region19: #{generator_forward.17} parent=5 // pred_region
      // Predicated region
      $region21: #{generator_forward.17} parent=19 // pred_check
        %p103 = pneg %p28
      $region22: #{generator_forward.17} parent=19 // pred_check_branch
        %105 = sbr.rel (%p103) target = $region24
      $region23: #{generator_forward.17} parent=19 // pred_region
        %s106 = smul.u32 128, %s8
        %p107 = scmp.lt.s32.totalorder %s106, 255
        %s108 = scalar_select %p107, %s106, 255
        %s109 = smul.addr %s108, 4
        %s110 = scalar_lea.vmem %s0, %s109
        %s111 = smul.u32 128, %s8
      $region24: #{generator_forward.17} parent=19 // pred_fallthru
        _
    $region20: #{generator_forward.17} parent=5 // pred_fallthru
      _
    %p112 = scmp.le.s32.totalorder 1, %s8
    %p113 = scmp.lt.s32.totalorder %s8, 3
    %p114 = pnand %p112, %p113
    %p115 = pneg %p114
    // Predicated region
    $region25: #{generator_forward.17} parent=5 // pred_check
      _
    $region26: #{generator_forward.17} parent=5 // pred_check_branch
      %117 = sbr.rel (%p114) target = $region28
    $region27: #{generator_forward.17} parent=5 // pred_region
      %s118 = ssub.s32 %s8, 1
      %s119 = smul.u32 128, %s13
      %p120 = scmp.lt.s32.totalorder %s119, 255
      %s121 = scalar_select %p120, %s119, 255
      %s122 = smul.addr %s121, 4
      %s123 = scalar_lea.vmem %s0, %s122
      %p124 = pneg %p34
      %p125 = pneg %p31
      %p126 = pneg %p55
      %p127 = pneg %p52
      %p128 = pneg %p81
      %p129 = pneg %p78
      %s130 = smul.u32 128, %s13
      %p131 = scmp.lt.s32.totalorder %s130, 255
      %s132 = scalar_select %p131, %s130, 255
      %s133 = smul.addr %s132, 4
      %s134 = scalar_lea.vmem %s2, %s133
      %s135 = smul.u32 128, %s13
      %p136 = scmp.lt.s32.totalorder %s135, 255
      %s137 = scalar_select %p136, %s135, 255
      %s138 = smul.addr %s137, 4
      %s139 = scalar_lea.vmem %s0, %s138
      %s140 = smul.u32 128, %s13
      %s141 = smul.u32 128, %s13
      %p142 = scmp.lt.s32.totalorder %s141, 255
      %s143 = scalar_select %p142, %s141, 255
      %s144 = smul.addr %s143, 4
      %s145 = scalar_lea.vmem %s2, %s144
      %s146 = smul.u32 128, %s13
      %v148 = vld [vmem:[%s139] sm:$0xf]
      %v149 = vld [vmem:[%s139 + $0x4] sm:$0xf]
      %v150 = vld [vmem:[%s139 + $0x8] sm:$0xf]
      %v151 = vld [vmem:[%s139 + $0xc] sm:$0xf]
      %v152 = vld [vmem:[%s139 + $0x10] sm:$0xf]
      %v153 = vld [vmem:[%s139 + $0x14] sm:$0xf]
      %v154 = vld [vmem:[%s139 + $0x18] sm:$0xf]
      %v155 = vld [vmem:[%s139 + $0x1c] sm:$0xf]
      %v156 = vld [vmem:[%s139 + $0x20] sm:$0xf]
      %v157 = vld [vmem:[%s139 + $0x24] sm:$0xf]
      %v158 = vld [vmem:[%s139 + $0x28] sm:$0xf]
      %v159 = vld [vmem:[%s139 + $0x2c] sm:$0xf]
      %v160 = vld [vmem:[%s139 + $0x30] sm:$0xf]
      %v161 = vld [vmem:[%s139 + $0x34] sm:$0xf]
      %v162 = vld [vmem:[%s139 + $0x38] sm:$0xf]
      %v163 = vld [vmem:[%s139 + $0x3c] sm:$0xf]
      %v164 = vld [vmem:[%s139 + $0x40] sm:$0xf]
      %v165 = vld [vmem:[%s139 + $0x44] sm:$0xf]
      %v166 = vld [vmem:[%s139 + $0x48] sm:$0xf]
      %v167 = vld [vmem:[%s139 + $0x4c] sm:$0xf]
      %v168 = vld [vmem:[%s139 + $0x50] sm:$0xf]
      %v169 = vld [vmem:[%s139 + $0x54] sm:$0xf]
      %v170 = vld [vmem:[%s139 + $0x58] sm:$0xf]
      %v171 = vld [vmem:[%s139 + $0x5c] sm:$0xf]
      %v172 = vld [vmem:[%s139 + $0x60] sm:$0xf]
      %v173 = vld [vmem:[%s139 + $0x64] sm:$0xf]
      %v174 = vld [vmem:[%s139 + $0x68] sm:$0xf]
      %v175 = vld [vmem:[%s139 + $0x6c] sm:$0xf]
      %v176 = vld [vmem:[%s139 + $0x70] sm:$0xf]
      %v177 = vld [vmem:[%s139 + $0x74] sm:$0xf]
      %v178 = vld [vmem:[%s139 + $0x78] sm:$0xf]
      %v179 = vld [vmem:[%s139 + $0x7c] sm:$0xf]
      %v180 = vld [vmem:[%s139 + $0x80] sm:$0xf]
      %v181 = vld [vmem:[%s139 + $0x84] sm:$0xf]
      %v182 = vld [vmem:[%s139 + $0x88] sm:$0xf]
      %v183 = vld [vmem:[%s139 + $0x8c] sm:$0xf]
      %v184 = vld [vmem:[%s139 + $0x90] sm:$0xf]
      %v185 = vld [vmem:[%s139 + $0x94] sm:$0xf]
      %v186 = vld [vmem:[%s139 + $0x98] sm:$0xf]
      %v187 = vld [vmem:[%s139 + $0x9c] sm:$0xf]
      %v188 = vld [vmem:[%s139 + $0xa0] sm:$0xf]
      %v189 = vld [vmem:[%s139 + $0xa4] sm:$0xf]
      %v190 = vld [vmem:[%s139 + $0xa8] sm:$0xf]
      %v191 = vld [vmem:[%s139 + $0xac] sm:$0xf]
      %v192 = vld [vmem:[%s139 + $0xb0] sm:$0xf]
      %v193 = vld [vmem:[%s139 + $0xb4] sm:$0xf]
      %v194 = vld [vmem:[%s139 + $0xb8] sm:$0xf]
      %v195 = vld [vmem:[%s139 + $0xbc] sm:$0xf]
      %v196 = vld [vmem:[%s139 + $0xc0] sm:$0xf]
      %v197 = vld [vmem:[%s139 + $0xc4] sm:$0xf]
      %v198 = vld [vmem:[%s139 + $0xc8] sm:$0xf]
      %v199 = vld [vmem:[%s139 + $0xcc] sm:$0xf]
      %v200 = vld [vmem:[%s139 + $0xd0] sm:$0xf]
      %v201 = vld [vmem:[%s139 + $0xd4] sm:$0xf]
      %v202 = vld [vmem:[%s139 + $0xd8] sm:$0xf]
      %v203 = vld [vmem:[%s139 + $0xdc] sm:$0xf]
      %v204 = vld [vmem:[%s139 + $0xe0] sm:$0xf]
      %v205 = vld [vmem:[%s139 + $0xe4] sm:$0xf]
      %v206 = vld [vmem:[%s139 + $0xe8] sm:$0xf]
      %v207 = vld [vmem:[%s139 + $0xec] sm:$0xf]
      %v208 = vld [vmem:[%s139 + $0xf0] sm:$0xf]
      %v209 = vld [vmem:[%s139 + $0xf4] sm:$0xf]
      %v210 = vld [vmem:[%s139 + $0xf8] sm:$0xf]
      %v211 = vld [vmem:[%s139 + $0xfc] sm:$0xf]
      %v212 = vld [vmem:[%s139 + $0x100] sm:$0xf]
      %v213 = vld [vmem:[%s139 + $0x104] sm:$0xf]
      %v214 = vld [vmem:[%s139 + $0x108] sm:$0xf]
      %v215 = vld [vmem:[%s139 + $0x10c] sm:$0xf]
      %v216 = vld [vmem:[%s139 + $0x110] sm:$0xf]
      %v217 = vld [vmem:[%s139 + $0x114] sm:$0xf]
      %v218 = vld [vmem:[%s139 + $0x118] sm:$0xf]
      %v219 = vld [vmem:[%s139 + $0x11c] sm:$0xf]
      %v220 = vld [vmem:[%s139 + $0x120] sm:$0xf]
      %v221 = vld [vmem:[%s139 + $0x124] sm:$0xf]
      %v222 = vld [vmem:[%s139 + $0x128] sm:$0xf]
      %v223 = vld [vmem:[%s139 + $0x12c] sm:$0xf]
      %v224 = vld [vmem:[%s139 + $0x130] sm:$0xf]
      %v225 = vld [vmem:[%s139 + $0x134] sm:$0xf]
      %v226 = vld [vmem:[%s139 + $0x138] sm:$0xf]
      %v227 = vld [vmem:[%s139 + $0x13c] sm:$0xf]
      %v228 = vld [vmem:[%s139 + $0x140] sm:$0xf]
      %v229 = vld [vmem:[%s139 + $0x144] sm:$0xf]
      %v230 = vld [vmem:[%s139 + $0x148] sm:$0xf]
      %v231 = vld [vmem:[%s139 + $0x14c] sm:$0xf]
      %v232 = vld [vmem:[%s139 + $0x150] sm:$0xf]
      %v233 = vld [vmem:[%s139 + $0x154] sm:$0xf]
      %v234 = vld [vmem:[%s139 + $0x158] sm:$0xf]
      %v235 = vld [vmem:[%s139 + $0x15c] sm:$0xf]
      %v236 = vld [vmem:[%s139 + $0x160] sm:$0xf]
      %v237 = vld [vmem:[%s139 + $0x164] sm:$0xf]
      %v238 = vld [vmem:[%s139 + $0x168] sm:$0xf]
      %v239 = vld [vmem:[%s139 + $0x16c] sm:$0xf]
      %v240 = vld [vmem:[%s139 + $0x170] sm:$0xf]
      %v241 = vld [vmem:[%s139 + $0x174] sm:$0xf]
      %v242 = vld [vmem:[%s139 + $0x178] sm:$0xf]
      %v243 = vld [vmem:[%s139 + $0x17c] sm:$0xf]
      %v244 = vld [vmem:[%s139 + $0x180] sm:$0xf]
      %v245 = vld [vmem:[%s139 + $0x184] sm:$0xf]
      %v246 = vld [vmem:[%s139 + $0x188] sm:$0xf]
      %v247 = vld [vmem:[%s139 + $0x18c] sm:$0xf]
      %v248 = vld [vmem:[%s139 + $0x190] sm:$0xf]
      %v249 = vld [vmem:[%s139 + $0x194] sm:$0xf]
      %v250 = vld [vmem:[%s139 + $0x198] sm:$0xf]
      %v251 = vld [vmem:[%s139 + $0x19c] sm:$0xf]
      %v252 = vld [vmem:[%s139 + $0x1a0] sm:$0xf]
      %v253 = vld [vmem:[%s139 + $0x1a4] sm:$0xf]
      %v254 = vld [vmem:[%s139 + $0x1a8] sm:$0xf]
      %v255 = vld [vmem:[%s139 + $0x1ac] sm:$0xf]
      %v256 = vld [vmem:[%s139 + $0x1b0] sm:$0xf]
      %v257 = vld [vmem:[%s139 + $0x1b4] sm:$0xf]
      %v258 = vld [vmem:[%s139 + $0x1b8] sm:$0xf]
      %v259 = vld [vmem:[%s139 + $0x1bc] sm:$0xf]
      %v260 = vld [vmem:[%s139 + $0x1c0] sm:$0xf]
      %v261 = vld [vmem:[%s139 + $0x1c4] sm:$0xf]
      %v262 = vld [vmem:[%s139 + $0x1c8] sm:$0xf]
      %v263 = vld [vmem:[%s139 + $0x1cc] sm:$0xf]
      %v264 = vld [vmem:[%s139 + $0x1d0] sm:$0xf]
      %v265 = vld [vmem:[%s139 + $0x1d4] sm:$0xf]
      %v266 = vld [vmem:[%s139 + $0x1d8] sm:$0xf]
      %v267 = vld [vmem:[%s139 + $0x1dc] sm:$0xf]
      %v268 = vld [vmem:[%s139 + $0x1e0] sm:$0xf]
      %v269 = vld [vmem:[%s139 + $0x1e4] sm:$0xf]
      %v270 = vld [vmem:[%s139 + $0x1e8] sm:$0xf]
      %v271 = vld [vmem:[%s139 + $0x1ec] sm:$0xf]
      %v272 = vld [vmem:[%s139 + $0x1f0] sm:$0xf]
      %v273 = vld [vmem:[%s139 + $0x1f4] sm:$0xf]
      %v274 = vld [vmem:[%s139 + $0x1f8] sm:$0xf]
      %v275 = vld [vmem:[%s139 + $0x1fc] sm:$0xf]
      %v276 = vld [vmem:[%s1] sm:$0xf]
      %v277 = vld [vmem:[%s1 + $0x4] sm:$0xf]
      %v278 = vld [vmem:[%s1 + $0x8] sm:$0xf]
      %v279 = vld [vmem:[%s1 + $0xc] sm:$0xf]
      %v280 = vld [vmem:[%s1 + $0x10] sm:$0x3]
      %v409 = vunpack.c.l.b16 %v148
      %v410 = vunpack.c.l.b16 %v149
      %v411 = vunpack.c.l.b16 %v150
      %v412 = vunpack.c.l.b16 %v151
      %v413 = vunpack.c.l.b16 %v152
      %v414 = vunpack.c.l.b16 %v153
      %v415 = vunpack.c.l.b16 %v154
      %v416 = vunpack.c.l.b16 %v155
      %v417 = vunpack.c.l.b16 %v156
      %v418 = vunpack.c.l.b16 %v157
      %v419 = vunpack.c.l.b16 %v158
      %v420 = vunpack.c.l.b16 %v159
      %v421 = vunpack.c.l.b16 %v160
      %v422 = vunpack.c.l.b16 %v161
      %v423 = vunpack.c.l.b16 %v162
      %v424 = vunpack.c.l.b16 %v163
      %v425 = vunpack.c.l.b16 %v164
      %v426 = vunpack.c.l.b16 %v165
      %v427 = vunpack.c.l.b16 %v166
      %v428 = vunpack.c.l.b16 %v167
      %v429 = vunpack.c.l.b16 %v168
      %v430 = vunpack.c.l.b16 %v169
      %v431 = vunpack.c.l.b16 %v170
      %v432 = vunpack.c.l.b16 %v171
      %v433 = vunpack.c.l.b16 %v172
      %v434 = vunpack.c.l.b16 %v173
      %v435 = vunpack.c.l.b16 %v174
      %v436 = vunpack.c.l.b16 %v175
      %v437 = vunpack.c.l.b16 %v176
      %v438 = vunpack.c.l.b16 %v177
      %v439 = vunpack.c.l.b16 %v178
      %v440 = vunpack.c.l.b16 %v179
      %v441 = vunpack.c.l.b16 %v180
      %v442 = vunpack.c.l.b16 %v181
      %v443 = vunpack.c.l.b16 %v182
      %v444 = vunpack.c.l.b16 %v183
      %v445 = vunpack.c.l.b16 %v184
      %v446 = vunpack.c.l.b16 %v185
      %v447 = vunpack.c.l.b16 %v186
      %v448 = vunpack.c.l.b16 %v187
      %v449 = vunpack.c.l.b16 %v188
      %v450 = vunpack.c.l.b16 %v189
      %v451 = vunpack.c.l.b16 %v190
      %v452 = vunpack.c.l.b16 %v191
      %v453 = vunpack.c.l.b16 %v192
      %v454 = vunpack.c.l.b16 %v193
      %v455 = vunpack.c.l.b16 %v194
      %v456 = vunpack.c.l.b16 %v195
      %v457 = vunpack.c.l.b16 %v196
      %v458 = vunpack.c.l.b16 %v197
      %v459 = vunpack.c.l.b16 %v198
      %v460 = vunpack.c.l.b16 %v199
      %v461 = vunpack.c.l.b16 %v200
      %v462 = vunpack.c.l.b16 %v201
      %v463 = vunpack.c.l.b16 %v202
      %v464 = vunpack.c.l.b16 %v203
      %v465 = vunpack.c.l.b16 %v204
      %v466 = vunpack.c.l.b16 %v205
      %v467 = vunpack.c.l.b16 %v206
      %v468 = vunpack.c.l.b16 %v207
      %v469 = vunpack.c.l.b16 %v208
      %v470 = vunpack.c.l.b16 %v209
      %v471 = vunpack.c.l.b16 %v210
      %v472 = vunpack.c.l.b16 %v211
      %v473 = vunpack.c.l.b16 %v212
      %v474 = vunpack.c.l.b16 %v213
      %v475 = vunpack.c.l.b16 %v214
      %v476 = vunpack.c.l.b16 %v215
      %v477 = vunpack.c.l.b16 %v216
      %v478 = vunpack.c.l.b16 %v217
      %v479 = vunpack.c.l.b16 %v218
      %v480 = vunpack.c.l.b16 %v219
      %v481 = vunpack.c.l.b16 %v220
      %v482 = vunpack.c.l.b16 %v221
      %v483 = vunpack.c.l.b16 %v222
      %v484 = vunpack.c.l.b16 %v223
      %v485 = vunpack.c.l.b16 %v224
      %v486 = vunpack.c.l.b16 %v225
      %v487 = vunpack.c.l.b16 %v226
      %v488 = vunpack.c.l.b16 %v227
      %v489 = vunpack.c.l.b16 %v228
      %v490 = vunpack.c.l.b16 %v229
      %v491 = vunpack.c.l.b16 %v230
      %v492 = vunpack.c.l.b16 %v231
      %v493 = vunpack.c.l.b16 %v232
      %v494 = vunpack.c.l.b16 %v233
      %v495 = vunpack.c.l.b16 %v234
      %v496 = vunpack.c.l.b16 %v235
      %v497 = vunpack.c.l.b16 %v236
      %v498 = vunpack.c.l.b16 %v237
      %v499 = vunpack.c.l.b16 %v238
      %v500 = vunpack.c.l.b16 %v239
      %v501 = vunpack.c.l.b16 %v240
      %v502 = vunpack.c.l.b16 %v241
      %v503 = vunpack.c.l.b16 %v242
      %v504 = vunpack.c.l.b16 %v243
      %v505 = vunpack.c.l.b16 %v244
      %v506 = vunpack.c.l.b16 %v245
      %v507 = vunpack.c.l.b16 %v246
      %v508 = vunpack.c.l.b16 %v247
      %v509 = vunpack.c.l.b16 %v248
      %v510 = vunpack.c.l.b16 %v249
      %v511 = vunpack.c.l.b16 %v250
      %v512 = vunpack.c.l.b16 %v251
      %v513 = vunpack.c.l.b16 %v252
      %v514 = vunpack.c.l.b16 %v253
      %v515 = vunpack.c.l.b16 %v254
      %v516 = vunpack.c.l.b16 %v255
      %v517 = vunpack.c.l.b16 %v256
      %v518 = vunpack.c.l.b16 %v257
      %v519 = vunpack.c.l.b16 %v258
      %v520 = vunpack.c.l.b16 %v259
      %v521 = vunpack.c.l.b16 %v260
      %v522 = vunpack.c.l.b16 %v261
      %v523 = vunpack.c.l.b16 %v262
      %v524 = vunpack.c.l.b16 %v263
      %v525 = vunpack.c.l.b16 %v264
      %v526 = vunpack.c.l.b16 %v265
      %v527 = vunpack.c.l.b16 %v266
      %v528 = vunpack.c.l.b16 %v267
      %v529 = vunpack.c.l.b16 %v268
      %v530 = vunpack.c.l.b16 %v269
      %v531 = vunpack.c.l.b16 %v270
      %v532 = vunpack.c.l.b16 %v271
      %v533 = vunpack.c.l.b16 %v272
      %v534 = vunpack.c.l.b16 %v273
      %v535 = vunpack.c.l.b16 %v274
      %v536 = vunpack.c.l.b16 %v275
      %v537 = vpack.c.b16 %v410, %v409
      %v538 = vpack.c.b16 %v412, %v411
      %v539 = vpack.c.b16 %v414, %v413
      %v540 = vpack.c.b16 %v416, %v415
      %v541 = vpack.c.b16 %v418, %v417
      %v542 = vpack.c.b16 %v420, %v419
      %v543 = vpack.c.b16 %v422, %v421
      %v544 = vpack.c.b16 %v424, %v423
      %v545 = vpack.c.b16 %v426, %v425
      %v546 = vpack.c.b16 %v428, %v427
      %v547 = vpack.c.b16 %v430, %v429
      %v548 = vpack.c.b16 %v432, %v431
      %v549 = vpack.c.b16 %v434, %v433
      %v550 = vpack.c.b16 %v436, %v435
      %v551 = vpack.c.b16 %v438, %v437
      %v552 = vpack.c.b16 %v440, %v439
      %v553 = vpack.c.b16 %v442, %v441
      %v554 = vpack.c.b16 %v444, %v443
      %v555 = vpack.c.b16 %v446, %v445
      %v556 = vpack.c.b16 %v448, %v447
      %v557 = vpack.c.b16 %v450, %v449
      %v558 = vpack.c.b16 %v452, %v451
      %v559 = vpack.c.b16 %v454, %v453
      %v560 = vpack.c.b16 %v456, %v455
      %v561 = vpack.c.b16 %v458, %v457
      %v562 = vpack.c.b16 %v460, %v459
      %v563 = vpack.c.b16 %v462, %v461
      %v564 = vpack.c.b16 %v464, %v463
      %v565 = vpack.c.b16 %v466, %v465
      %v566 = vpack.c.b16 %v468, %v467
      %v567 = vpack.c.b16 %v470, %v469
      %v568 = vpack.c.b16 %v472, %v471
      %v569 = vpack.c.b16 %v474, %v473
      %v570 = vpack.c.b16 %v476, %v475
      %v571 = vpack.c.b16 %v478, %v477
      %v572 = vpack.c.b16 %v480, %v479
      %v573 = vpack.c.b16 %v482, %v481
      %v574 = vpack.c.b16 %v484, %v483
      %v575 = vpack.c.b16 %v486, %v485
      %v576 = vpack.c.b16 %v488, %v487
      %v577 = vpack.c.b16 %v490, %v489
      %v578 = vpack.c.b16 %v492, %v491
      %v579 = vpack.c.b16 %v494, %v493
      %v580 = vpack.c.b16 %v496, %v495
      %v581 = vpack.c.b16 %v498, %v497
      %v582 = vpack.c.b16 %v500, %v499
      %v583 = vpack.c.b16 %v502, %v501
      %v584 = vpack.c.b16 %v504, %v503
      %v585 = vpack.c.b16 %v506, %v505
      %v586 = vpack.c.b16 %v508, %v507
      %v587 = vpack.c.b16 %v510, %v509
      %v588 = vpack.c.b16 %v512, %v511
      %v589 = vpack.c.b16 %v514, %v513
      %v590 = vpack.c.b16 %v516, %v515
      %v591 = vpack.c.b16 %v518, %v517
      %v592 = vpack.c.b16 %v520, %v519
      %v593 = vpack.c.b16 %v522, %v521
      %v594 = vpack.c.b16 %v524, %v523
      %v595 = vpack.c.b16 %v526, %v525
      %v596 = vpack.c.b16 %v528, %v527
      %v597 = vpack.c.b16 %v530, %v529
      %v598 = vpack.c.b16 %v532, %v531
      %v599 = vpack.c.b16 %v534, %v533
      %v600 = vpack.c.b16 %v536, %v535
      %v606 = vunpack.c.l.b16 %v276
      %v607 = vunpack.c.l.b16 %v277
      %v608 = vunpack.c.l.b16 %v278
      %v609 = vunpack.c.l.b16 %v279
      %v610 = vunpack.c.l.b16 %v280
      %v611 = vpack.c.b16 %v607, %v606
      %v612 = vpack.c.b16 %v609, %v608
      %v613 = vpack.c.b16 %v610, %v610
      %vm616 = vcmask 293888
      %v618 = vsel %vm616, %v537, 0
      %v621 = vsel %vm616, %v538, 0
      %v624 = vsel %vm616, %v539, 0
      %v627 = vsel %vm616, %v540, 0
      %v630 = vsel %vm616, %v541, 0
      %v633 = vsel %vm616, %v542, 0
      %v636 = vsel %vm616, %v543, 0
      %v639 = vsel %vm616, %v544, 0
      %v642 = vsel %vm616, %v545, 0
      %v645 = vsel %vm616, %v546, 0
      %v648 = vsel %vm616, %v547, 0
      %v651 = vsel %vm616, %v548, 0
      %v654 = vsel %vm616, %v549, 0
      %v657 = vsel %vm616, %v550, 0
      %v660 = vsel %vm616, %v551, 0
      %v663 = vsel %vm616, %v552, 0
      %v666 = vsel %vm616, %v553, 0
      %v669 = vsel %vm616, %v554, 0
      %v672 = vsel %vm616, %v555, 0
      %v675 = vsel %vm616, %v556, 0
      %v678 = vsel %vm616, %v557, 0
      %v681 = vsel %vm616, %v558, 0
      %v684 = vsel %vm616, %v559, 0
      %v687 = vsel %vm616, %v560, 0
      %v690 = vsel %vm616, %v561, 0
      %v693 = vsel %vm616, %v562, 0
      %v696 = vsel %vm616, %v563, 0
      %v699 = vsel %vm616, %v564, 0
      %v702 = vsel %vm616, %v565, 0
      %v705 = vsel %vm616, %v566, 0
      %v708 = vsel %vm616, %v567, 0
      %v711 = vsel %vm616, %v568, 0
      %v714 = vsel %vm616, %v569, 0
      %v717 = vsel %vm616, %v570, 0
      %v720 = vsel %vm616, %v571, 0
      %v723 = vsel %vm616, %v572, 0
      %v726 = vsel %vm616, %v573, 0
      %v729 = vsel %vm616, %v574, 0
      %v732 = vsel %vm616, %v575, 0
      %v735 = vsel %vm616, %v576, 0
      %v738 = vsel %vm616, %v577, 0
      %v741 = vsel %vm616, %v578, 0
      %v744 = vsel %vm616, %v579, 0
      %v747 = vsel %vm616, %v580, 0
      %v750 = vsel %vm616, %v581, 0
      %v753 = vsel %vm616, %v582, 0
      %v756 = vsel %vm616, %v583, 0
      %v759 = vsel %vm616, %v584, 0
      %v762 = vsel %vm616, %v585, 0
      %v765 = vsel %vm616, %v586, 0
      %v768 = vsel %vm616, %v587, 0
      %v771 = vsel %vm616, %v588, 0
      %v774 = vsel %vm616, %v589, 0
      %v777 = vsel %vm616, %v590, 0
      %v780 = vsel %vm616, %v591, 0
      %v783 = vsel %vm616, %v592, 0
      %v786 = vsel %vm616, %v593, 0
      %v789 = vsel %vm616, %v594, 0
      %v792 = vsel %vm616, %v595, 0
      %v795 = vsel %vm616, %v596, 0
      %v798 = vsel %vm616, %v597, 0
      %v801 = vsel %vm616, %v598, 0
      %v804 = vsel %vm616, %v599, 0
      %v807 = vsel %vm616, %v600, 0
      %vm809 = vcmask 1041408
      %v811 = vsel %vm809, %v613, 0
      %813 = vmatprep.subr.bf16.mxu0 0
      %814 = vmatpush1.bf16.msra.mxu0 %v611
      %815 = vmatprep.subr.bf16.mxu0 0
      %816 = vmatpush1.bf16.msra.mxu0 %v612
      %817 = vmatprep.subr.bf16.mxu0 0
      %818 = vmatpush1.bf16.msra.mxu0 %v811
      %819 = vmatprep.subr.bf16.mxu0 0
      %820 = vmatpush1.bf16.msra.mxu0 0
      %821 = vmatprep.subr.bf16.mxu0 0
      %822 = vmatpush1.bf16.msra.mxu0 0
      %823 = vmatprep.subr.bf16.mxu0 0
      %824 = vmatpush1.bf16.msra.mxu0 0
      %825 = vmatprep.subr.bf16.mxu0 0
      %826 = vmatpush1.bf16.msra.mxu0 0
      %827 = vmatprep.subr.bf16.mxu0 0
      %828 = vmatpush1.bf16.msra.mxu0 0
      %829 = vmatprep.subr.bf16.mxu0 0
      %830 = vmatpush1.bf16.msra.mxu0 0
      %831 = vmatprep.subr.bf16.mxu0 0
      %832 = vmatpush1.bf16.msra.mxu0 0
      %833 = vmatprep.subr.bf16.mxu0 0
      %834 = vmatpush1.bf16.msra.mxu0 0
      %835 = vmatprep.subr.bf16.mxu0 0
      %836 = vmatpush1.bf16.msra.mxu0 0
      %837 = vmatprep.subr.bf16.mxu0 0
      %838 = vmatpush1.bf16.msra.mxu0 0
      %839 = vmatprep.subr.bf16.mxu0 0
      %840 = vmatpush1.bf16.msra.mxu0 0
      %841 = vmatprep.subr.bf16.mxu0 0
      %842 = vmatpush1.bf16.msra.mxu0 0
      %843 = vmatprep.subr.bf16.mxu0 0
      %844 = vmatpush1.bf16.msra.mxu0 0
      %845 = vmatprep.mubr.bf16.mxu0 0
      %846 = vmatmul.mubr.bf16.gmra.mrb[0].mxu0 %v618
      %v847 = vpop.f32.mrb[0].mxu0
      %v848 = vadd.f32 0.0, %v847
      %v849 = vpop.f32.mrb[0].mxu0
      %v850 = vpop.f32.mrb[0].mxu0
      %v851 = vadd.f32 0.0, %v850
      %v852 = vpop.f32.mrb[0].mxu0
      %853 = vmatprep.mubr.bf16.mxu0 0
      %854 = vmatmul.mubr.bf16.gmra.mrb[0].mxu0 %v621
      %v855 = vpop.f32.mrb[0].mxu0
      %v856 = vadd.f32 0.0, %v855
      %v857 = vpop.f32.mrb[0].mxu0
      %v858 = vpop.f32.mrb[0].mxu0
      %v859 = vadd.f32 0.0, %v858
      %v860 = vpop.f32.mrb[0].mxu0
      %861 = vmatprep.mubr.bf16.mxu0 0
      %862 = vmatmul.mubr.bf16.gmra.mrb[0].mxu0 %v624
      %v863 = vpop.f32.mrb[0].mxu0
      %v864 = vadd.f32 0.0, %v863
      %v865 = vpop.f32.mrb[0].mxu0
      %v866 = vpop.f32.mrb[0].mxu0
      %v867 = vadd.f32 0.0, %v866
      %v868 = vpop.f32.mrb[0].mxu0
      %869 = vmatprep.mubr.bf16.mxu0 0
      %870 = vmatmul.mubr.bf16.gmra.mrb[0].mxu0 %v627
      %v871 = vpop.f32.mrb[0].mxu0
      %v872 = vadd.f32 0.0, %v871
      %v873 = vpop.f32.mrb[0].mxu0
      %v874 = vpop.f32.mrb[0].mxu0
      %v875 = vadd.f32 0.0, %v874
      %v876 = vpop.f32.mrb[0].mxu0
      %877 = vmatprep.mubr.bf16.mxu0 0
      %878 = vmatmul.mubr.bf16.gmra.mrb[0].mxu0 %v630
      %v879 = vpop.f32.mrb[0].mxu0
      %v880 = vadd.f32 0.0, %v879
      %v881 = vpop.f32.mrb[0].mxu0
      %v882 = vpop.f32.mrb[0].mxu0
      %v883 = vadd.f32 0.0, %v882
      %v884 = vpop.f32.mrb[0].mxu0
      %885 = vmatprep.mubr.bf16.mxu0 0
      %886 = vmatmul.mubr.bf16.gmra.mrb[0].mxu0 %v633
      %v887 = vpop.f32.mrb[0].mxu0
      %v888 = vadd.f32 0.0, %v887
      %v889 = vpop.f32.mrb[0].mxu0
      %v890 = vpop.f32.mrb[0].mxu0
      %v891 = vadd.f32 0.0, %v890
      %v892 = vpop.f32.mrb[0].mxu0
      %893 = vmatprep.mubr.bf16.mxu0 0
      %894 = vmatmul.mubr.bf16.gmra.mrb[0].mxu0 %v636
      %v895 = vpop.f32.mrb[0].mxu0
      %v896 = vadd.f32 0.0, %v895
      %v897 = vpop.f32.mrb[0].mxu0
      %v898 = vpop.f32.mrb[0].mxu0
      %v899 = vadd.f32 0.0, %v898
      %v900 = vpop.f32.mrb[0].mxu0
      %901 = vmatprep.mubr.bf16.mxu0 0
      %902 = vmatmul.mubr.bf16.gmra.mrb[0].mxu0 %v639
      %v903 = vpop.f32.mrb[0].mxu0
      %v904 = vadd.f32 0.0, %v903
      %v905 = vpop.f32.mrb[0].mxu0
      %v906 = vpop.f32.mrb[0].mxu0
      %v907 = vadd.f32 0.0, %v906
      %v908 = vpop.f32.mrb[0].mxu0
      %909 = vmatprep.mubr.bf16.mxu0 0
      %910 = vmatmul.mubr.bf16.gmra.mrb[0].mxu0 %v642
      %v911 = vpop.f32.mrb[0].mxu0
      %v912 = vadd.f32 0.0, %v911
      %v913 = vpop.f32.mrb[0].mxu0
      %v914 = vpop.f32.mrb[0].mxu0
      %v915 = vadd.f32 0.0, %v914
      %v916 = vpop.f32.mrb[0].mxu0
      %917 = vmatprep.mubr.bf16.mxu0 0
      %918 = vmatmul.mubr.bf16.gmra.mrb[0].mxu0 %v645
      %v919 = vpop.f32.mrb[0].mxu0
      %v920 = vadd.f32 0.0, %v919
      %v921 = vpop.f32.mrb[0].mxu0
      %v922 = vpop.f32.mrb[0].mxu0
      %v923 = vadd.f32 0.0, %v922
      %v924 = vpop.f32.mrb[0].mxu0
      %925 = vmatprep.mubr.bf16.mxu0 0
      %926 = vmatmul.mubr.bf16.gmra.mrb[0].mxu0 %v648
      %v927 = vpop.f32.mrb[0].mxu0
      %v928 = vadd.f32 0.0, %v927
      %v929 = vpop.f32.mrb[0].mxu0
      %v930 = vpop.f32.mrb[0].mxu0
      %v931 = vadd.f32 0.0, %v930
      %v932 = vpop.f32.mrb[0].mxu0
      %933 = vmatprep.mubr.bf16.mxu0 0
      %934 = vmatmul.mubr.bf16.gmra.mrb[0].mxu0 %v651
      %v935 = vpop.f32.mrb[0].mxu0
      %v936 = vadd.f32 0.0, %v935
      %v937 = vpop.f32.mrb[0].mxu0
      %v938 = vpop.f32.mrb[0].mxu0
      %v939 = vadd.f32 0.0, %v938
      %v940 = vpop.f32.mrb[0].mxu0
      %941 = vmatprep.mubr.bf16.mxu0 0
      %942 = vmatmul.mubr.bf16.gmra.mrb[0].mxu0 %v654
      %v943 = vpop.f32.mrb[0].mxu0
      %v944 = vadd.f32 0.0, %v943
      %v945 = vpop.f32.mrb[0].mxu0
      %v946 = vpop.f32.mrb[0].mxu0
      %v947 = vadd.f32 0.0, %v946
      %v948 = vpop.f32.mrb[0].mxu0
      %949 = vmatprep.mubr.bf16.mxu0 0
      %950 = vmatmul.mubr.bf16.gmra.mrb[0].mxu0 %v657
      %v951 = vpop.f32.mrb[0].mxu0
      %v952 = vadd.f32 0.0, %v951
      %v953 = vpop.f32.mrb[0].mxu0
      %v954 = vpop.f32.mrb[0].mxu0
      %v955 = vadd.f32 0.0, %v954
      %v956 = vpop.f32.mrb[0].mxu0
      %957 = vmatprep.mubr.bf16.mxu0 0
      %958 = vmatmul.mubr.bf16.gmra.mrb[0].mxu0 %v660
      %v959 = vpop.f32.mrb[0].mxu0
      %v960 = vadd.f32 0.0, %v959
      %v961 = vpop.f32.mrb[0].mxu0
      %v962 = vpop.f32.mrb[0].mxu0
      %v963 = vadd.f32 0.0, %v962
      %v964 = vpop.f32.mrb[0].mxu0
      %965 = vmatprep.mubr.bf16.mxu0 0
      %966 = vmatmul.mubr.bf16.gmra.mrb[0].mxu0 %v663
      %v967 = vpop.f32.mrb[0].mxu0
      %v968 = vadd.f32 0.0, %v967
      %v969 = vpop.f32.mrb[0].mxu0
      %v970 = vpop.f32.mrb[0].mxu0
      %v971 = vadd.f32 0.0, %v970
      %v972 = vpop.f32.mrb[0].mxu0
      %973 = vmatprep.mubr.bf16.mxu0 0
      %974 = vmatmul.mubr.bf16.gmra.mrb[0].mxu0 %v666
      %v975 = vpop.f32.mrb[0].mxu0
      %v976 = vadd.f32 0.0, %v975
      %v977 = vpop.f32.mrb[0].mxu0
      %v978 = vpop.f32.mrb[0].mxu0
      %v979 = vadd.f32 0.0, %v978
      %v980 = vpop.f32.mrb[0].mxu0
      %981 = vmatprep.mubr.bf16.mxu0 0
      %982 = vmatmul.mubr.bf16.gmra.mrb[0].mxu0 %v669
      %v983 = vpop.f32.mrb[0].mxu0
      %v984 = vadd.f32 0.0, %v983
      %v985 = vpop.f32.mrb[0].mxu0
      %v986 = vpop.f32.mrb[0].mxu0
      %v987 = vadd.f32 0.0, %v986
      %v988 = vpop.f32.mrb[0].mxu0
      %989 = vmatprep.mubr.bf16.mxu0 0
      %990 = vmatmul.mubr.bf16.gmra.mrb[0].mxu0 %v672
      %v991 = vpop.f32.mrb[0].mxu0
      %v992 = vadd.f32 0.0, %v991
      %v993 = vpop.f32.mrb[0].mxu0
      %v994 = vpop.f32.mrb[0].mxu0
      %v995 = vadd.f32 0.0, %v994
      %v996 = vpop.f32.mrb[0].mxu0
      %997 = vmatprep.mubr.bf16.mxu0 0
      %998 = vmatmul.mubr.bf16.gmra.mrb[0].mxu0 %v675
      %v999 = vpop.f32.mrb[0].mxu0
      %v1000 = vadd.f32 0.0, %v999
      %v1001 = vpop.f32.mrb[0].mxu0
      %v1002 = vpop.f32.mrb[0].mxu0
      %v1003 = vadd.f32 0.0, %v1002
      %v1004 = vpop.f32.mrb[0].mxu0
      %1005 = vmatprep.mubr.bf16.mxu0 0
      %1006 = vmatmul.mubr.bf16.gmra.mrb[0].mxu0 %v678
      %v1007 = vpop.f32.mrb[0].mxu0
      %v1008 = vadd.f32 0.0, %v1007
      %v1009 = vpop.f32.mrb[0].mxu0
      %v1010 = vpop.f32.mrb[0].mxu0
      %v1011 = vadd.f32 0.0, %v1010
      %v1012 = vpop.f32.mrb[0].mxu0
      %1013 = vmatprep.mubr.bf16.mxu0 0
      %1014 = vmatmul.mubr.bf16.gmra.mrb[0].mxu0 %v681
      %v1015 = vpop.f32.mrb[0].mxu0
      %v1016 = vadd.f32 0.0, %v1015
      %v1017 = vpop.f32.mrb[0].mxu0
      %v1018 = vpop.f32.mrb[0].mxu0
      %v1019 = vadd.f32 0.0, %v1018
      %v1020 = vpop.f32.mrb[0].mxu0
      %1021 = vmatprep.mubr.bf16.mxu0 0
      %1022 = vmatmul.mubr.bf16.gmra.mrb[0].mxu0 %v684
      %v1023 = vpop.f32.mrb[0].mxu0
      %v1024 = vadd.f32 0.0, %v1023
      %v1025 = vpop.f32.mrb[0].mxu0
      %v1026 = vpop.f32.mrb[0].mxu0
      %v1027 = vadd.f32 0.0, %v1026
      %v1028 = vpop.f32.mrb[0].mxu0
      %1029 = vmatprep.mubr.bf16.mxu0 0
      %1030 = vmatmul.mubr.bf16.gmra.mrb[0].mxu0 %v687
      %v1031 = vpop.f32.mrb[0].mxu0
      %v1032 = vadd.f32 0.0, %v1031
      %v1033 = vpop.f32.mrb[0].mxu0
      %v1034 = vpop.f32.mrb[0].mxu0
      %v1035 = vadd.f32 0.0, %v1034
      %v1036 = vpop.f32.mrb[0].mxu0
      %1037 = vmatprep.mubr.bf16.mxu0 0
      %1038 = vmatmul.mubr.bf16.gmra.mrb[0].mxu0 %v690
      %v1039 = vpop.f32.mrb[0].mxu0
      %v1040 = vadd.f32 0.0, %v1039
      %v1041 = vpop.f32.mrb[0].mxu0
      %v1042 = vpop.f32.mrb[0].mxu0
      %v1043 = vadd.f32 0.0, %v1042
      %v1044 = vpop.f32.mrb[0].mxu0
      %1045 = vmatprep.mubr.bf16.mxu0 0
      %1046 = vmatmul.mubr.bf16.gmra.mrb[0].mxu0 %v693
      %v1047 = vpop.f32.mrb[0].mxu0
      %v1048 = vadd.f32 0.0, %v1047
      %v1049 = vpop.f32.mrb[0].mxu0
      %v1050 = vpop.f32.mrb[0].mxu0
      %v1051 = vadd.f32 0.0, %v1050
      %v1052 = vpop.f32.mrb[0].mxu0
      %1053 = vmatprep.mubr.bf16.mxu0 0
      %1054 = vmatmul.mubr.bf16.gmra.mrb[0].mxu0 %v696
      %v1055 = vpop.f32.mrb[0].mxu0
      %v1056 = vadd.f32 0.0, %v1055
      %v1057 = vpop.f32.mrb[0].mxu0
      %v1058 = vpop.f32.mrb[0].mxu0
      %v1059 = vadd.f32 0.0, %v1058
      %v1060 = vpop.f32.mrb[0].mxu0
      %1061 = vmatprep.mubr.bf16.mxu0 0
      %1062 = vmatmul.mubr.bf16.gmra.mrb[0].mxu0 %v699
      %v1063 = vpop.f32.mrb[0].mxu0
      %v1064 = vadd.f32 0.0, %v1063
      %v1065 = vpop.f32.mrb[0].mxu0
      %v1066 = vpop.f32.mrb[0].mxu0
      %v1067 = vadd.f32 0.0, %v1066
      %v1068 = vpop.f32.mrb[0].mxu0
      %1069 = vmatprep.mubr.bf16.mxu0 0
      %1070 = vmatmul.mubr.bf16.gmra.mrb[0].mxu0 %v702
      %v1071 = vpop.f32.mrb[0].mxu0
      %v1072 = vadd.f32 0.0, %v1071
      %v1073 = vpop.f32.mrb[0].mxu0
      %v1074 = vpop.f32.mrb[0].mxu0
      %v1075 = vadd.f32 0.0, %v1074
      %v1076 = vpop.f32.mrb[0].mxu0
      %1077 = vmatprep.mubr.bf16.mxu0 0
      %1078 = vmatmul.mubr.bf16.gmra.mrb[0].mxu0 %v705
      %v1079 = vpop.f32.mrb[0].mxu0
      %v1080 = vadd.f32 0.0, %v1079
      %v1081 = vpop.f32.mrb[0].mxu0
      %v1082 = vpop.f32.mrb[0].mxu0
      %v1083 = vadd.f32 0.0, %v1082
      %v1084 = vpop.f32.mrb[0].mxu0
      %1085 = vmatprep.mubr.bf16.mxu0 0
      %1086 = vmatmul.mubr.bf16.gmra.mrb[0].mxu0 %v708
      %v1087 = vpop.f32.mrb[0].mxu0
      %v1088 = vadd.f32 0.0, %v1087
      %v1089 = vpop.f32.mrb[0].mxu0
      %v1090 = vpop.f32.mrb[0].mxu0
      %v1091 = vadd.f32 0.0, %v1090
      %v1092 = vpop.f32.mrb[0].mxu0
      %1093 = vmatprep.mubr.bf16.mxu0 0
      %1094 = vmatmul.mubr.bf16.gmra.mrb[0].mxu0 %v711
      %v1095 = vpop.f32.mrb[0].mxu0
      %v1096 = vadd.f32 0.0, %v1095
      %v1097 = vpop.f32.mrb[0].mxu0
      %v1098 = vpop.f32.mrb[0].mxu0
      %v1099 = vadd.f32 0.0, %v1098
      %v1100 = vpop.f32.mrb[0].mxu0
      %1101 = vmatprep.mubr.bf16.mxu0 0
      %1102 = vmatmul.mubr.bf16.gmra.mrb[0].mxu0 %v714
      %v1103 = vpop.f32.mrb[0].mxu0
      %v1104 = vadd.f32 0.0, %v1103
      %v1105 = vpop.f32.mrb[0].mxu0
      %v1106 = vpop.f32.mrb[0].mxu0
      %v1107 = vadd.f32 0.0, %v1106
      %v1108 = vpop.f32.mrb[0].mxu0
      %1109 = vmatprep.mubr.bf16.mxu0 0
      %1110 = vmatmul.mubr.bf16.gmra.mrb[0].mxu0 %v717
      %v1111 = vpop.f32.mrb[0].mxu0
      %v1112 = vadd.f32 0.0, %v1111
      %v1113 = vpop.f32.mrb[0].mxu0
      %v1114 = vpop.f32.mrb[0].mxu0
      %v1115 = vadd.f32 0.0, %v1114
      %v1116 = vpop.f32.mrb[0].mxu0
      %1117 = vmatprep.mubr.bf16.mxu0 0
      %1118 = vmatmul.mubr.bf16.gmra.mrb[0].mxu0 %v720
      %v1119 = vpop.f32.mrb[0].mxu0
      %v1120 = vadd.f32 0.0, %v1119
      %v1121 = vpop.f32.mrb[0].mxu0
      %v1122 = vpop.f32.mrb[0].mxu0
      %v1123 = vadd.f32 0.0, %v1122
      %v1124 = vpop.f32.mrb[0].mxu0
      %1125 = vmatprep.mubr.bf16.mxu0 0
      %1126 = vmatmul.mubr.bf16.gmra.mrb[0].mxu0 %v723
      %v1127 = vpop.f32.mrb[0].mxu0
      %v1128 = vadd.f32 0.0, %v1127
      %v1129 = vpop.f32.mrb[0].mxu0
      %v1130 = vpop.f32.mrb[0].mxu0
      %v1131 = vadd.f32 0.0, %v1130
      %v1132 = vpop.f32.mrb[0].mxu0
      %1133 = vmatprep.mubr.bf16.mxu0 0
      %1134 = vmatmul.mubr.bf16.gmra.mrb[0].mxu0 %v726
      %v1135 = vpop.f32.mrb[0].mxu0
      %v1136 = vadd.f32 0.0, %v1135
      %v1137 = vpop.f32.mrb[0].mxu0
      %v1138 = vpop.f32.mrb[0].mxu0
      %v1139 = vadd.f32 0.0, %v1138
      %v1140 = vpop.f32.mrb[0].mxu0
      %1141 = vmatprep.mubr.bf16.mxu0 0
      %1142 = vmatmul.mubr.bf16.gmra.mrb[0].mxu0 %v729
      %v1143 = vpop.f32.mrb[0].mxu0
      %v1144 = vadd.f32 0.0, %v1143
      %v1145 = vpop.f32.mrb[0].mxu0
      %v1146 = vpop.f32.mrb[0].mxu0
      %v1147 = vadd.f32 0.0, %v1146
      %v1148 = vpop.f32.mrb[0].mxu0
      %1149 = vmatprep.mubr.bf16.mxu0 0
      %1150 = vmatmul.mubr.bf16.gmra.mrb[0].mxu0 %v732
      %v1151 = vpop.f32.mrb[0].mxu0
      %v1152 = vadd.f32 0.0, %v1151
      %v1153 = vpop.f32.mrb[0].mxu0
      %v1154 = vpop.f32.mrb[0].mxu0
      %v1155 = vadd.f32 0.0, %v1154
      %v1156 = vpop.f32.mrb[0].mxu0
      %1157 = vmatprep.mubr.bf16.mxu0 0
      %1158 = vmatmul.mubr.bf16.gmra.mrb[0].mxu0 %v735
      %v1159 = vpop.f32.mrb[0].mxu0
      %v1160 = vadd.f32 0.0, %v1159
      %v1161 = vpop.f32.mrb[0].mxu0
      %v1162 = vpop.f32.mrb[0].mxu0
      %v1163 = vadd.f32 0.0, %v1162
      %v1164 = vpop.f32.mrb[0].mxu0
      %1165 = vmatprep.mubr.bf16.mxu0 0
      %1166 = vmatmul.mubr.bf16.gmra.mrb[0].mxu0 %v738
      %v1167 = vpop.f32.mrb[0].mxu0
      %v1168 = vadd.f32 0.0, %v1167
      %v1169 = vpop.f32.mrb[0].mxu0
      %v1170 = vpop.f32.mrb[0].mxu0
      %v1171 = vadd.f32 0.0, %v1170
      %v1172 = vpop.f32.mrb[0].mxu0
      %1173 = vmatprep.mubr.bf16.mxu0 0
      %1174 = vmatmul.mubr.bf16.gmra.mrb[0].mxu0 %v741
      %v1175 = vpop.f32.mrb[0].mxu0
      %v1176 = vadd.f32 0.0, %v1175
      %v1177 = vpop.f32.mrb[0].mxu0
      %v1178 = vpop.f32.mrb[0].mxu0
      %v1179 = vadd.f32 0.0, %v1178
      %v1180 = vpop.f32.mrb[0].mxu0
      %1181 = vmatprep.mubr.bf16.mxu0 0
      %1182 = vmatmul.mubr.bf16.gmra.mrb[0].mxu0 %v744
      %v1183 = vpop.f32.mrb[0].mxu0
      %v1184 = vadd.f32 0.0, %v1183
      %v1185 = vpop.f32.mrb[0].mxu0
      %v1186 = vpop.f32.mrb[0].mxu0
      %v1187 = vadd.f32 0.0, %v1186
      %v1188 = vpop.f32.mrb[0].mxu0
      %1189 = vmatprep.mubr.bf16.mxu0 0
      %1190 = vmatmul.mubr.bf16.gmra.mrb[0].mxu0 %v747
      %v1191 = vpop.f32.mrb[0].mxu0
      %v1192 = vadd.f32 0.0, %v1191
      %v1193 = vpop.f32.mrb[0].mxu0
      %v1194 = vpop.f32.mrb[0].mxu0
      %v1195 = vadd.f32 0.0, %v1194
      %v1196 = vpop.f32.mrb[0].mxu0
      %1197 = vmatprep.mubr.bf16.mxu0 0
      %1198 = vmatmul.mubr.bf16.gmra.mrb[0].mxu0 %v750
      %v1199 = vpop.f32.mrb[0].mxu0
      %v1200 = vadd.f32 0.0, %v1199
      %v1201 = vpop.f32.mrb[0].mxu0
      %v1202 = vpop.f32.mrb[0].mxu0
      %v1203 = vadd.f32 0.0, %v1202
      %v1204 = vpop.f32.mrb[0].mxu0
      %1205 = vmatprep.mubr.bf16.mxu0 0
      %1206 = vmatmul.mubr.bf16.gmra.mrb[0].mxu0 %v753
      %v1207 = vpop.f32.mrb[0].mxu0
      %v1208 = vadd.f32 0.0, %v1207
      %v1209 = vpop.f32.mrb[0].mxu0
      %v1210 = vpop.f32.mrb[0].mxu0
      %v1211 = vadd.f32 0.0, %v1210
      %v1212 = vpop.f32.mrb[0].mxu0
      %1213 = vmatprep.mubr.bf16.mxu0 0
      %1214 = vmatmul.mubr.bf16.gmra.mrb[0].mxu0 %v756
      %v1215 = vpop.f32.mrb[0].mxu0
      %v1216 = vadd.f32 0.0, %v1215
      %v1217 = vpop.f32.mrb[0].mxu0
      %v1218 = vpop.f32.mrb[0].mxu0
      %v1219 = vadd.f32 0.0, %v1218
      %v1220 = vpop.f32.mrb[0].mxu0
      %1221 = vmatprep.mubr.bf16.mxu0 0
      %1222 = vmatmul.mubr.bf16.gmra.mrb[0].mxu0 %v759
      %v1223 = vpop.f32.mrb[0].mxu0
      %v1224 = vadd.f32 0.0, %v1223
      %v1225 = vpop.f32.mrb[0].mxu0
      %v1226 = vpop.f32.mrb[0].mxu0
      %v1227 = vadd.f32 0.0, %v1226
      %v1228 = vpop.f32.mrb[0].mxu0
      %1229 = vmatprep.mubr.bf16.mxu0 0
      %1230 = vmatmul.mubr.bf16.gmra.mrb[0].mxu0 %v762
      %v1231 = vpop.f32.mrb[0].mxu0
      %v1232 = vadd.f32 0.0, %v1231
      %v1233 = vpop.f32.mrb[0].mxu0
      %v1234 = vpop.f32.mrb[0].mxu0
      %v1235 = vadd.f32 0.0, %v1234
      %v1236 = vpop.f32.mrb[0].mxu0
      %1237 = vmatprep.mubr.bf16.mxu0 0
      %1238 = vmatmul.mubr.bf16.gmra.mrb[0].mxu0 %v765
      %v1239 = vpop.f32.mrb[0].mxu0
      %v1240 = vadd.f32 0.0, %v1239
      %v1241 = vpop.f32.mrb[0].mxu0
      %v1242 = vpop.f32.mrb[0].mxu0
      %v1243 = vadd.f32 0.0, %v1242
      %v1244 = vpop.f32.mrb[0].mxu0
      %1245 = vmatprep.mubr.bf16.mxu0 0
      %1246 = vmatmul.mubr.bf16.gmra.mrb[0].mxu0 %v768
      %v1247 = vpop.f32.mrb[0].mxu0
      %v1248 = vadd.f32 0.0, %v1247
      %v1249 = vpop.f32.mrb[0].mxu0
      %v1250 = vpop.f32.mrb[0].mxu0
      %v1251 = vadd.f32 0.0, %v1250
      %v1252 = vpop.f32.mrb[0].mxu0
      %1253 = vmatprep.mubr.bf16.mxu0 0
      %1254 = vmatmul.mubr.bf16.gmra.mrb[0].mxu0 %v771
      %v1255 = vpop.f32.mrb[0].mxu0
      %v1256 = vadd.f32 0.0, %v1255
      %v1257 = vpop.f32.mrb[0].mxu0
      %v1258 = vpop.f32.mrb[0].mxu0
      %v1259 = vadd.f32 0.0, %v1258
      %v1260 = vpop.f32.mrb[0].mxu0
      %1261 = vmatprep.mubr.bf16.mxu0 0
      %1262 = vmatmul.mubr.bf16.gmra.mrb[0].mxu0 %v774
      %v1263 = vpop.f32.mrb[0].mxu0
      %v1264 = vadd.f32 0.0, %v1263
      %v1265 = vpop.f32.mrb[0].mxu0
      %v1266 = vpop.f32.mrb[0].mxu0
      %v1267 = vadd.f32 0.0, %v1266
      %v1268 = vpop.f32.mrb[0].mxu0
      %1269 = vmatprep.mubr.bf16.mxu0 0
      %1270 = vmatmul.mubr.bf16.gmra.mrb[0].mxu0 %v777
      %v1271 = vpop.f32.mrb[0].mxu0
      %v1272 = vadd.f32 0.0, %v1271
      %v1273 = vpop.f32.mrb[0].mxu0
      %v1274 = vpop.f32.mrb[0].mxu0
      %v1275 = vadd.f32 0.0, %v1274
      %v1276 = vpop.f32.mrb[0].mxu0
      %1277 = vmatprep.mubr.bf16.mxu0 0
      %1278 = vmatmul.mubr.bf16.gmra.mrb[0].mxu0 %v780
      %v1279 = vpop.f32.mrb[0].mxu0
      %v1280 = vadd.f32 0.0, %v1279
      %v1281 = vpop.f32.mrb[0].mxu0
      %v1282 = vpop.f32.mrb[0].mxu0
      %v1283 = vadd.f32 0.0, %v1282
      %v1284 = vpop.f32.mrb[0].mxu0
      %1285 = vmatprep.mubr.bf16.mxu0 0
      %1286 = vmatmul.mubr.bf16.gmra.mrb[0].mxu0 %v783
      %v1287 = vpop.f32.mrb[0].mxu0
      %v1288 = vadd.f32 0.0, %v1287
      %v1289 = vpop.f32.mrb[0].mxu0
      %v1290 = vpop.f32.mrb[0].mxu0
      %v1291 = vadd.f32 0.0, %v1290
      %v1292 = vpop.f32.mrb[0].mxu0
      %1293 = vmatprep.mubr.bf16.mxu0 0
      %1294 = vmatmul.mubr.bf16.gmra.mrb[0].mxu0 %v786
      %v1295 = vpop.f32.mrb[0].mxu0
      %v1296 = vadd.f32 0.0, %v1295
      %v1297 = vpop.f32.mrb[0].mxu0
      %v1298 = vpop.f32.mrb[0].mxu0
      %v1299 = vadd.f32 0.0, %v1298
      %v1300 = vpop.f32.mrb[0].mxu0
      %1301 = vmatprep.mubr.bf16.mxu0 0
      %1302 = vmatmul.mubr.bf16.gmra.mrb[0].mxu0 %v789
      %v1303 = vpop.f32.mrb[0].mxu0
      %v1304 = vadd.f32 0.0, %v1303
      %v1305 = vpop.f32.mrb[0].mxu0
      %v1306 = vpop.f32.mrb[0].mxu0
      %v1307 = vadd.f32 0.0, %v1306
      %v1308 = vpop.f32.mrb[0].mxu0
      %1309 = vmatprep.mubr.bf16.mxu0 0
      %1310 = vmatmul.mubr.bf16.gmra.mrb[0].mxu0 %v792
      %v1311 = vpop.f32.mrb[0].mxu0
      %v1312 = vadd.f32 0.0, %v1311
      %v1313 = vpop.f32.mrb[0].mxu0
      %v1314 = vpop.f32.mrb[0].mxu0
      %v1315 = vadd.f32 0.0, %v1314
      %v1316 = vpop.f32.mrb[0].mxu0
      %1317 = vmatprep.mubr.bf16.mxu0 0
      %1318 = vmatmul.mubr.bf16.gmra.mrb[0].mxu0 %v795
      %v1319 = vpop.f32.mrb[0].mxu0
      %v1320 = vadd.f32 0.0, %v1319
      %v1321 = vpop.f32.mrb[0].mxu0
      %v1322 = vpop.f32.mrb[0].mxu0
      %v1323 = vadd.f32 0.0, %v1322
      %v1324 = vpop.f32.mrb[0].mxu0
      %1325 = vmatprep.mubr.bf16.mxu0 0
      %1326 = vmatmul.mubr.bf16.gmra.mrb[0].mxu0 %v798
      %v1327 = vpop.f32.mrb[0].mxu0
      %v1328 = vadd.f32 0.0, %v1327
      %v1329 = vpop.f32.mrb[0].mxu0
      %v1330 = vpop.f32.mrb[0].mxu0
      %v1331 = vadd.f32 0.0, %v1330
      %v1332 = vpop.f32.mrb[0].mxu0
      %1333 = vmatprep.mubr.bf16.mxu0 0
      %1334 = vmatmul.mubr.bf16.gmra.mrb[0].mxu0 %v801
      %v1335 = vpop.f32.mrb[0].mxu0
      %v1336 = vadd.f32 0.0, %v1335
      %v1337 = vpop.f32.mrb[0].mxu0
      %v1338 = vpop.f32.mrb[0].mxu0
      %v1339 = vadd.f32 0.0, %v1338
      %v1340 = vpop.f32.mrb[0].mxu0
      %1341 = vmatprep.mubr.bf16.mxu0 0
      %1342 = vmatmul.mubr.bf16.gmra.mrb[0].mxu0 %v804
      %v1343 = vpop.f32.mrb[0].mxu0
      %v1344 = vadd.f32 0.0, %v1343
      %v1345 = vpop.f32.mrb[0].mxu0
      %v1346 = vpop.f32.mrb[0].mxu0
      %v1347 = vadd.f32 0.0, %v1346
      %v1348 = vpop.f32.mrb[0].mxu0
      %1349 = vmatprep.mubr.bf16.mxu0 0
      %1350 = vmatmul.mubr.bf16.gmra.mrb[0].mxu0 %v807
      %v1351 = vpop.f32.mrb[0].mxu0
      %v1352 = vadd.f32 0.0, %v1351
      %v1353 = vpop.f32.mrb[0].mxu0
      %v1354 = vpop.f32.mrb[0].mxu0
      %v1355 = vadd.f32 0.0, %v1354
      %v1356 = vpop.f32.mrb[0].mxu0
      %1357 = vdwg.mxu0
      %v1358 = vtanh.pop %v848
      %v1359 = vtanh.pop %v851
      %v1360 = vtanh.pop %v856
      %v1361 = vtanh.pop %v859
      %v1362 = vtanh.pop %v864
      %v1363 = vtanh.pop %v867
      %v1364 = vtanh.pop %v872
      %v1365 = vtanh.pop %v875
      %v1366 = vtanh.pop %v880
      %v1367 = vtanh.pop %v883
      %v1368 = vtanh.pop %v888
      %v1369 = vtanh.pop %v891
      %v1370 = vtanh.pop %v896
      %v1371 = vtanh.pop %v899
      %v1372 = vtanh.pop %v904
      %v1373 = vtanh.pop %v907
      %v1374 = vtanh.pop %v912
      %v1375 = vtanh.pop %v915
      %v1376 = vtanh.pop %v920
      %v1377 = vtanh.pop %v923
      %v1378 = vtanh.pop %v928
      %v1379 = vtanh.pop %v931
      %v1380 = vtanh.pop %v936
      %v1381 = vtanh.pop %v939
      %v1382 = vtanh.pop %v944
      %v1383 = vtanh.pop %v947
      %v1384 = vtanh.pop %v952
      %v1385 = vtanh.pop %v955
      %v1386 = vtanh.pop %v960
      %v1387 = vtanh.pop %v963
      %v1388 = vtanh.pop %v968
      %v1389 = vtanh.pop %v971
      %v1390 = vtanh.pop %v976
      %v1391 = vtanh.pop %v979
      %v1392 = vtanh.pop %v984
      %v1393 = vtanh.pop %v987
      %v1394 = vtanh.pop %v992
      %v1395 = vtanh.pop %v995
      %v1396 = vtanh.pop %v1000
      %v1397 = vtanh.pop %v1003
      %v1398 = vtanh.pop %v1008
      %v1399 = vtanh.pop %v1011
      %v1400 = vtanh.pop %v1016
      %v1401 = vtanh.pop %v1019
      %v1402 = vtanh.pop %v1024
      %v1403 = vtanh.pop %v1027
      %v1404 = vtanh.pop %v1032
      %v1405 = vtanh.pop %v1035
      %v1406 = vtanh.pop %v1040
      %v1407 = vtanh.pop %v1043
      %v1408 = vtanh.pop %v1048
      %v1409 = vtanh.pop %v1051
      %v1410 = vtanh.pop %v1056
      %v1411 = vtanh.pop %v1059
      %v1412 = vtanh.pop %v1064
      %v1413 = vtanh.pop %v1067
      %v1414 = vtanh.pop %v1072
      %v1415 = vtanh.pop %v1075
      %v1416 = vtanh.pop %v1080
      %v1417 = vtanh.pop %v1083
      %v1418 = vtanh.pop %v1088
      %v1419 = vtanh.pop %v1091
      %v1420 = vtanh.pop %v1096
      %v1421 = vtanh.pop %v1099
      %v1422 = vtanh.pop %v1104
      %v1423 = vtanh.pop %v1107
      %v1424 = vtanh.pop %v1112
      %v1425 = vtanh.pop %v1115
      %v1426 = vtanh.pop %v1120
      %v1427 = vtanh.pop %v1123
      %v1428 = vtanh.pop %v1128
      %v1429 = vtanh.pop %v1131
      %v1430 = vtanh.pop %v1136
      %v1431 = vtanh.pop %v1139
      %v1432 = vtanh.pop %v1144
      %v1433 = vtanh.pop %v1147
      %v1434 = vtanh.pop %v1152
      %v1435 = vtanh.pop %v1155
      %v1436 = vtanh.pop %v1160
      %v1437 = vtanh.pop %v1163
      %v1438 = vtanh.pop %v1168
      %v1439 = vtanh.pop %v1171
      %v1440 = vtanh.pop %v1176
      %v1441 = vtanh.pop %v1179
      %v1442 = vtanh.pop %v1184
      %v1443 = vtanh.pop %v1187
      %v1444 = vtanh.pop %v1192
      %v1445 = vtanh.pop %v1195
      %v1446 = vtanh.pop %v1200
      %v1447 = vtanh.pop %v1203
      %v1448 = vtanh.pop %v1208
      %v1449 = vtanh.pop %v1211
      %v1450 = vtanh.pop %v1216
      %v1451 = vtanh.pop %v1219
      %v1452 = vtanh.pop %v1224
      %v1453 = vtanh.pop %v1227
      %v1454 = vtanh.pop %v1232
      %v1455 = vtanh.pop %v1235
      %v1456 = vtanh.pop %v1240
      %v1457 = vtanh.pop %v1243
      %v1458 = vtanh.pop %v1248
      %v1459 = vtanh.pop %v1251
      %v1460 = vtanh.pop %v1256
      %v1461 = vtanh.pop %v1259
      %v1462 = vtanh.pop %v1264
      %v1463 = vtanh.pop %v1267
      %v1464 = vtanh.pop %v1272
      %v1465 = vtanh.pop %v1275
      %v1466 = vtanh.pop %v1280
      %v1467 = vtanh.pop %v1283
      %v1468 = vtanh.pop %v1288
      %v1469 = vtanh.pop %v1291
      %v1470 = vtanh.pop %v1296
      %v1471 = vtanh.pop %v1299
      %v1472 = vtanh.pop %v1304
      %v1473 = vtanh.pop %v1307
      %v1474 = vtanh.pop %v1312
      %v1475 = vtanh.pop %v1315
      %v1476 = vtanh.pop %v1320
      %v1477 = vtanh.pop %v1323
      %v1478 = vtanh.pop %v1328
      %v1479 = vtanh.pop %v1331
      %v1480 = vtanh.pop %v1336
      %v1481 = vtanh.pop %v1339
      %v1482 = vtanh.pop %v1344
      %v1483 = vtanh.pop %v1347
      %v1484 = vtanh.pop %v1352
      %v1485 = vtanh.pop %v1355
      %v1486 = vpack.c.bf16 %v1359, %v1358
      %v1487 = vpack.c.bf16 %v1361, %v1360
      %v1488 = vpack.c.bf16 %v1363, %v1362
      %v1489 = vpack.c.bf16 %v1365, %v1364
      %v1490 = vpack.c.bf16 %v1367, %v1366
      %v1491 = vpack.c.bf16 %v1369, %v1368
      %v1492 = vpack.c.bf16 %v1371, %v1370
      %v1493 = vpack.c.bf16 %v1373, %v1372
      %v1494 = vpack.c.bf16 %v1375, %v1374
      %v1495 = vpack.c.bf16 %v1377, %v1376
      %v1496 = vpack.c.bf16 %v1379, %v1378
      %v1497 = vpack.c.bf16 %v1381, %v1380
      %v1498 = vpack.c.bf16 %v1383, %v1382
      %v1499 = vpack.c.bf16 %v1385, %v1384
      %v1500 = vpack.c.bf16 %v1387, %v1386
      %v1501 = vpack.c.bf16 %v1389, %v1388
      %v1502 = vpack.c.bf16 %v1391, %v1390
      %v1503 = vpack.c.bf16 %v1393, %v1392
      %v1504 = vpack.c.bf16 %v1395, %v1394
      %v1505 = vpack.c.bf16 %v1397, %v1396
      %v1506 = vpack.c.bf16 %v1399, %v1398
      %v1507 = vpack.c.bf16 %v1401, %v1400
      %v1508 = vpack.c.bf16 %v1403, %v1402
      %v1509 = vpack.c.bf16 %v1405, %v1404
      %v1510 = vpack.c.bf16 %v1407, %v1406
      %v1511 = vpack.c.bf16 %v1409, %v1408
      %v1512 = vpack.c.bf16 %v1411, %v1410
      %v1513 = vpack.c.bf16 %v1413, %v1412
      %v1514 = vpack.c.bf16 %v1415, %v1414
      %v1515 = vpack.c.bf16 %v1417, %v1416
      %v1516 = vpack.c.bf16 %v1419, %v1418
      %v1517 = vpack.c.bf16 %v1421, %v1420
      %v1518 = vpack.c.bf16 %v1423, %v1422
      %v1519 = vpack.c.bf16 %v1425, %v1424
      %v1520 = vpack.c.bf16 %v1427, %v1426
      %v1521 = vpack.c.bf16 %v1429, %v1428
      %v1522 = vpack.c.bf16 %v1431, %v1430
      %v1523 = vpack.c.bf16 %v1433, %v1432
      %v1524 = vpack.c.bf16 %v1435, %v1434
      %v1525 = vpack.c.bf16 %v1437, %v1436
      %v1526 = vpack.c.bf16 %v1439, %v1438
      %v1527 = vpack.c.bf16 %v1441, %v1440
      %v1528 = vpack.c.bf16 %v1443, %v1442
      %v1529 = vpack.c.bf16 %v1445, %v1444
      %v1530 = vpack.c.bf16 %v1447, %v1446
      %v1531 = vpack.c.bf16 %v1449, %v1448
      %v1532 = vpack.c.bf16 %v1451, %v1450
      %v1533 = vpack.c.bf16 %v1453, %v1452
      %v1534 = vpack.c.bf16 %v1455, %v1454
      %v1535 = vpack.c.bf16 %v1457, %v1456
      %v1536 = vpack.c.bf16 %v1459, %v1458
      %v1537 = vpack.c.bf16 %v1461, %v1460
      %v1538 = vpack.c.bf16 %v1463, %v1462
      %v1539 = vpack.c.bf16 %v1465, %v1464
      %v1540 = vpack.c.bf16 %v1467, %v1466
      %v1541 = vpack.c.bf16 %v1469, %v1468
      %v1542 = vpack.c.bf16 %v1471, %v1470
      %v1543 = vpack.c.bf16 %v1473, %v1472
      %v1544 = vpack.c.bf16 %v1475, %v1474
      %v1545 = vpack.c.bf16 %v1477, %v1476
      %v1546 = vpack.c.bf16 %v1479, %v1478
      %v1547 = vpack.c.bf16 %v1481, %v1480
      %v1548 = vpack.c.bf16 %v1483, %v1482
      %v1549 = vpack.c.bf16 %v1485, %v1484
      %v1614 = vunpack.c.l.b16 %v1486
      %v1615 = vunpack.c.h.b16 %v1486
      %v1616 = vunpack.c.l.b16 %v1487
      %v1617 = vunpack.c.h.b16 %v1487
      %v1618 = vunpack.c.l.b16 %v1488
      %v1619 = vunpack.c.h.b16 %v1488
      %v1620 = vunpack.c.l.b16 %v1489
      %v1621 = vunpack.c.h.b16 %v1489
      %v1622 = vunpack.c.l.b16 %v1490
      %v1623 = vunpack.c.h.b16 %v1490
      %v1624 = vunpack.c.l.b16 %v1491
      %v1625 = vunpack.c.h.b16 %v1491
      %v1626 = vunpack.c.l.b16 %v1492
      %v1627 = vunpack.c.h.b16 %v1492
      %v1628 = vunpack.c.l.b16 %v1493
      %v1629 = vunpack.c.h.b16 %v1493
      %v1630 = vunpack.c.l.b16 %v1494
      %v1631 = vunpack.c.h.b16 %v1494
      %v1632 = vunpack.c.l.b16 %v1495
      %v1633 = vunpack.c.h.b16 %v1495
      %v1634 = vunpack.c.l.b16 %v1496
      %v1635 = vunpack.c.h.b16 %v1496
      %v1636 = vunpack.c.l.b16 %v1497
      %v1637 = vunpack.c.h.b16 %v1497
      %v1638 = vunpack.c.l.b16 %v1498
      %v1639 = vunpack.c.h.b16 %v1498
      %v1640 = vunpack.c.l.b16 %v1499
      %v1641 = vunpack.c.h.b16 %v1499
      %v1642 = vunpack.c.l.b16 %v1500
      %v1643 = vunpack.c.h.b16 %v1500
      %v1644 = vunpack.c.l.b16 %v1501
      %v1645 = vunpack.c.h.b16 %v1501
      %v1646 = vunpack.c.l.b16 %v1502
      %v1647 = vunpack.c.h.b16 %v1502
      %v1648 = vunpack.c.l.b16 %v1503
      %v1649 = vunpack.c.h.b16 %v1503
      %v1650 = vunpack.c.l.b16 %v1504
      %v1651 = vunpack.c.h.b16 %v1504
      %v1652 = vunpack.c.l.b16 %v1505
      %v1653 = vunpack.c.h.b16 %v1505
      %v1654 = vunpack.c.l.b16 %v1506
      %v1655 = vunpack.c.h.b16 %v1506
      %v1656 = vunpack.c.l.b16 %v1507
      %v1657 = vunpack.c.h.b16 %v1507
      %v1658 = vunpack.c.l.b16 %v1508
      %v1659 = vunpack.c.h.b16 %v1508
      %v1660 = vunpack.c.l.b16 %v1509
      %v1661 = vunpack.c.h.b16 %v1509
      %v1662 = vunpack.c.l.b16 %v1510
      %v1663 = vunpack.c.h.b16 %v1510
      %v1664 = vunpack.c.l.b16 %v1511
      %v1665 = vunpack.c.h.b16 %v1511
      %v1666 = vunpack.c.l.b16 %v1512
      %v1667 = vunpack.c.h.b16 %v1512
      %v1668 = vunpack.c.l.b16 %v1513
      %v1669 = vunpack.c.h.b16 %v1513
      %v1670 = vunpack.c.l.b16 %v1514
      %v1671 = vunpack.c.h.b16 %v1514
      %v1672 = vunpack.c.l.b16 %v1515
      %v1673 = vunpack.c.h.b16 %v1515
      %v1674 = vunpack.c.l.b16 %v1516
      %v1675 = vunpack.c.h.b16 %v1516
      %v1676 = vunpack.c.l.b16 %v1517
      %v1677 = vunpack.c.h.b16 %v1517
      %v1678 = vunpack.c.l.b16 %v1518
      %v1679 = vunpack.c.h.b16 %v1518
      %v1680 = vunpack.c.l.b16 %v1519
      %v1681 = vunpack.c.h.b16 %v1519
      %v1682 = vunpack.c.l.b16 %v1520
      %v1683 = vunpack.c.h.b16 %v1520
      %v1684 = vunpack.c.l.b16 %v1521
      %v1685 = vunpack.c.h.b16 %v1521
      %v1686 = vunpack.c.l.b16 %v1522
      %v1687 = vunpack.c.h.b16 %v1522
      %v1688 = vunpack.c.l.b16 %v1523
      %v1689 = vunpack.c.h.b16 %v1523
      %v1690 = vunpack.c.l.b16 %v1524
      %v1691 = vunpack.c.h.b16 %v1524
      %v1692 = vunpack.c.l.b16 %v1525
      %v1693 = vunpack.c.h.b16 %v1525
      %v1694 = vunpack.c.l.b16 %v1526
      %v1695 = vunpack.c.h.b16 %v1526
      %v1696 = vunpack.c.l.b16 %v1527
      %v1697 = vunpack.c.h.b16 %v1527
      %v1698 = vunpack.c.l.b16 %v1528
      %v1699 = vunpack.c.h.b16 %v1528
      %v1700 = vunpack.c.l.b16 %v1529
      %v1701 = vunpack.c.h.b16 %v1529
      %v1702 = vunpack.c.l.b16 %v1530
      %v1703 = vunpack.c.h.b16 %v1530
      %v1704 = vunpack.c.l.b16 %v1531
      %v1705 = vunpack.c.h.b16 %v1531
      %v1706 = vunpack.c.l.b16 %v1532
      %v1707 = vunpack.c.h.b16 %v1532
      %v1708 = vunpack.c.l.b16 %v1533
      %v1709 = vunpack.c.h.b16 %v1533
      %v1710 = vunpack.c.l.b16 %v1534
      %v1711 = vunpack.c.h.b16 %v1534
      %v1712 = vunpack.c.l.b16 %v1535
      %v1713 = vunpack.c.h.b16 %v1535
      %v1714 = vunpack.c.l.b16 %v1536
      %v1715 = vunpack.c.h.b16 %v1536
      %v1716 = vunpack.c.l.b16 %v1537
      %v1717 = vunpack.c.h.b16 %v1537
      %v1718 = vunpack.c.l.b16 %v1538
      %v1719 = vunpack.c.h.b16 %v1538
      %v1720 = vunpack.c.l.b16 %v1539
      %v1721 = vunpack.c.h.b16 %v1539
      %v1722 = vunpack.c.l.b16 %v1540
      %v1723 = vunpack.c.h.b16 %v1540
      %v1724 = vunpack.c.l.b16 %v1541
      %v1725 = vunpack.c.h.b16 %v1541
      %v1726 = vunpack.c.l.b16 %v1542
      %v1727 = vunpack.c.h.b16 %v1542
      %v1728 = vunpack.c.l.b16 %v1543
      %v1729 = vunpack.c.h.b16 %v1543
      %v1730 = vunpack.c.l.b16 %v1544
      %v1731 = vunpack.c.h.b16 %v1544
      %v1732 = vunpack.c.l.b16 %v1545
      %v1733 = vunpack.c.h.b16 %v1545
      %v1734 = vunpack.c.l.b16 %v1546
      %v1735 = vunpack.c.h.b16 %v1546
      %v1736 = vunpack.c.l.b16 %v1547
      %v1737 = vunpack.c.h.b16 %v1547
      %v1738 = vunpack.c.l.b16 %v1548
      %v1739 = vunpack.c.h.b16 %v1548
      %v1740 = vunpack.c.l.b16 %v1549
      %v1741 = vunpack.c.h.b16 %v1549
      %v1742 = vpack.c.b16 %v1614, %v1614
      %v1743 = vpack.c.b16 %v1615, %v1615
      %v1744 = vpack.c.b16 %v1616, %v1616
      %v1745 = vpack.c.b16 %v1617, %v1617
      %v1746 = vpack.c.b16 %v1618, %v1618
      %v1747 = vpack.c.b16 %v1619, %v1619
      %v1748 = vpack.c.b16 %v1620, %v1620
      %v1749 = vpack.c.b16 %v1621, %v1621
      %v1750 = vpack.c.b16 %v1622, %v1622
      %v1751 = vpack.c.b16 %v1623, %v1623
      %v1752 = vpack.c.b16 %v1624, %v1624
      %v1753 = vpack.c.b16 %v1625, %v1625
      %v1754 = vpack.c.b16 %v1626, %v1626
      %v1755 = vpack.c.b16 %v1627, %v1627
      %v1756 = vpack.c.b16 %v1628, %v1628
      %v1757 = vpack.c.b16 %v1629, %v1629
      %v1758 = vpack.c.b16 %v1630, %v1630
      %v1759 = vpack.c.b16 %v1631, %v1631
      %v1760 = vpack.c.b16 %v1632, %v1632
      %v1761 = vpack.c.b16 %v1633, %v1633
      %v1762 = vpack.c.b16 %v1634, %v1634
      %v1763 = vpack.c.b16 %v1635, %v1635
      %v1764 = vpack.c.b16 %v1636, %v1636
      %v1765 = vpack.c.b16 %v1637, %v1637
      %v1766 = vpack.c.b16 %v1638, %v1638
      %v1767 = vpack.c.b16 %v1639, %v1639
      %v1768 = vpack.c.b16 %v1640, %v1640
      %v1769 = vpack.c.b16 %v1641, %v1641
      %v1770 = vpack.c.b16 %v1642, %v1642
      %v1771 = vpack.c.b16 %v1643, %v1643
      %v1772 = vpack.c.b16 %v1644, %v1644
      %v1773 = vpack.c.b16 %v1645, %v1645
      %v1774 = vpack.c.b16 %v1646, %v1646
      %v1775 = vpack.c.b16 %v1647, %v1647
      %v1776 = vpack.c.b16 %v1648, %v1648
      %v1777 = vpack.c.b16 %v1649, %v1649
      %v1778 = vpack.c.b16 %v1650, %v1650
      %v1779 = vpack.c.b16 %v1651, %v1651
      %v1780 = vpack.c.b16 %v1652, %v1652
      %v1781 = vpack.c.b16 %v1653, %v1653
      %v1782 = vpack.c.b16 %v1654, %v1654
      %v1783 = vpack.c.b16 %v1655, %v1655
      %v1784 = vpack.c.b16 %v1656, %v1656
      %v1785 = vpack.c.b16 %v1657, %v1657
      %v1786 = vpack.c.b16 %v1658, %v1658
      %v1787 = vpack.c.b16 %v1659, %v1659
      %v1788 = vpack.c.b16 %v1660, %v1660
      %v1789 = vpack.c.b16 %v1661, %v1661
      %v1790 = vpack.c.b16 %v1662, %v1662
      %v1791 = vpack.c.b16 %v1663, %v1663
      %v1792 = vpack.c.b16 %v1664, %v1664
      %v1793 = vpack.c.b16 %v1665, %v1665
      %v1794 = vpack.c.b16 %v1666, %v1666
      %v1795 = vpack.c.b16 %v1667, %v1667
      %v1796 = vpack.c.b16 %v1668, %v1668
      %v1797 = vpack.c.b16 %v1669, %v1669
      %v1798 = vpack.c.b16 %v1670, %v1670
      %v1799 = vpack.c.b16 %v1671, %v1671
      %v1800 = vpack.c.b16 %v1672, %v1672
      %v1801 = vpack.c.b16 %v1673, %v1673
      %v1802 = vpack.c.b16 %v1674, %v1674
      %v1803 = vpack.c.b16 %v1675, %v1675
      %v1804 = vpack.c.b16 %v1676, %v1676
      %v1805 = vpack.c.b16 %v1677, %v1677
      %v1806 = vpack.c.b16 %v1678, %v1678
      %v1807 = vpack.c.b16 %v1679, %v1679
      %v1808 = vpack.c.b16 %v1680, %v1680
      %v1809 = vpack.c.b16 %v1681, %v1681
      %v1810 = vpack.c.b16 %v1682, %v1682
      %v1811 = vpack.c.b16 %v1683, %v1683
      %v1812 = vpack.c.b16 %v1684, %v1684
      %v1813 = vpack.c.b16 %v1685, %v1685
      %v1814 = vpack.c.b16 %v1686, %v1686
      %v1815 = vpack.c.b16 %v1687, %v1687
      %v1816 = vpack.c.b16 %v1688, %v1688
      %v1817 = vpack.c.b16 %v1689, %v1689
      %v1818 = vpack.c.b16 %v1690, %v1690
      %v1819 = vpack.c.b16 %v1691, %v1691
      %v1820 = vpack.c.b16 %v1692, %v1692
      %v1821 = vpack.c.b16 %v1693, %v1693
      %v1822 = vpack.c.b16 %v1694, %v1694
      %v1823 = vpack.c.b16 %v1695, %v1695
      %v1824 = vpack.c.b16 %v1696, %v1696
      %v1825 = vpack.c.b16 %v1697, %v1697
      %v1826 = vpack.c.b16 %v1698, %v1698
      %v1827 = vpack.c.b16 %v1699, %v1699
      %v1828 = vpack.c.b16 %v1700, %v1700
      %v1829 = vpack.c.b16 %v1701, %v1701
      %v1830 = vpack.c.b16 %v1702, %v1702
      %v1831 = vpack.c.b16 %v1703, %v1703
      %v1832 = vpack.c.b16 %v1704, %v1704
      %v1833 = vpack.c.b16 %v1705, %v1705
      %v1834 = vpack.c.b16 %v1706, %v1706
      %v1835 = vpack.c.b16 %v1707, %v1707
      %v1836 = vpack.c.b16 %v1708, %v1708
      %v1837 = vpack.c.b16 %v1709, %v1709
      %v1838 = vpack.c.b16 %v1710, %v1710
      %v1839 = vpack.c.b16 %v1711, %v1711
      %v1840 = vpack.c.b16 %v1712, %v1712
      %v1841 = vpack.c.b16 %v1713, %v1713
      %v1842 = vpack.c.b16 %v1714, %v1714
      %v1843 = vpack.c.b16 %v1715, %v1715
      %v1844 = vpack.c.b16 %v1716, %v1716
      %v1845 = vpack.c.b16 %v1717, %v1717
      %v1846 = vpack.c.b16 %v1718, %v1718
      %v1847 = vpack.c.b16 %v1719, %v1719
      %v1848 = vpack.c.b16 %v1720, %v1720
      %v1849 = vpack.c.b16 %v1721, %v1721
      %v1850 = vpack.c.b16 %v1722, %v1722
      %v1851 = vpack.c.b16 %v1723, %v1723
      %v1852 = vpack.c.b16 %v1724, %v1724
      %v1853 = vpack.c.b16 %v1725, %v1725
      %v1854 = vpack.c.b16 %v1726, %v1726
      %v1855 = vpack.c.b16 %v1727, %v1727
      %v1856 = vpack.c.b16 %v1728, %v1728
      %v1857 = vpack.c.b16 %v1729, %v1729
      %v1858 = vpack.c.b16 %v1730, %v1730
      %v1859 = vpack.c.b16 %v1731, %v1731
      %v1860 = vpack.c.b16 %v1732, %v1732
      %v1861 = vpack.c.b16 %v1733, %v1733
      %v1862 = vpack.c.b16 %v1734, %v1734
      %v1863 = vpack.c.b16 %v1735, %v1735
      %v1864 = vpack.c.b16 %v1736, %v1736
      %v1865 = vpack.c.b16 %v1737, %v1737
      %v1866 = vpack.c.b16 %v1738, %v1738
      %v1867 = vpack.c.b16 %v1739, %v1739
      %v1868 = vpack.c.b16 %v1740, %v1740
      %v1869 = vpack.c.b16 %v1741, %v1741
      %1998 = vst [vmem:[%s145] sm:$0xf] %v1742
      %1999 = vst [vmem:[%s145 + $0x4] sm:$0xf] %v1743
      %2000 = vst [vmem:[%s145 + $0x8] sm:$0xf] %v1744
      %2001 = vst [vmem:[%s145 + $0xc] sm:$0xf] %v1745
      %2002 = vst [vmem:[%s145 + $0x10] sm:$0xf] %v1746
      %2003 = vst [vmem:[%s145 + $0x14] sm:$0xf] %v1747
      %2004 = vst [vmem:[%s145 + $0x18] sm:$0xf] %v1748
      %2005 = vst [vmem:[%s145 + $0x1c] sm:$0xf] %v1749
      %2006 = vst [vmem:[%s145 + $0x20] sm:$0xf] %v1750
      %2007 = vst [vmem:[%s145 + $0x24] sm:$0xf] %v1751
      %2008 = vst [vmem:[%s145 + $0x28] sm:$0xf] %v1752
      %2009 = vst [vmem:[%s145 + $0x2c] sm:$0xf] %v1753
      %2010 = vst [vmem:[%s145 + $0x30] sm:$0xf] %v1754
      %2011 = vst [vmem:[%s145 + $0x34] sm:$0xf] %v1755
      %2012 = vst [vmem:[%s145 + $0x38] sm:$0xf] %v1756
      %2013 = vst [vmem:[%s145 + $0x3c] sm:$0xf] %v1757
      %2014 = vst [vmem:[%s145 + $0x40] sm:$0xf] %v1758
      %2015 = vst [vmem:[%s145 + $0x44] sm:$0xf] %v1759
      %2016 = vst [vmem:[%s145 + $0x48] sm:$0xf] %v1760
      %2017 = vst [vmem:[%s145 + $0x4c] sm:$0xf] %v1761
      %2018 = vst [vmem:[%s145 + $0x50] sm:$0xf] %v1762
      %2019 = vst [vmem:[%s145 + $0x54] sm:$0xf] %v1763
      %2020 = vst [vmem:[%s145 + $0x58] sm:$0xf] %v1764
      %2021 = vst [vmem:[%s145 + $0x5c] sm:$0xf] %v1765
      %2022 = vst [vmem:[%s145 + $0x60] sm:$0xf] %v1766
      %2023 = vst [vmem:[%s145 + $0x64] sm:$0xf] %v1767
      %2024 = vst [vmem:[%s145 + $0x68] sm:$0xf] %v1768
      %2025 = vst [vmem:[%s145 + $0x6c] sm:$0xf] %v1769
      %2026 = vst [vmem:[%s145 + $0x70] sm:$0xf] %v1770
      %2027 = vst [vmem:[%s145 + $0x74] sm:$0xf] %v1771
      %2028 = vst [vmem:[%s145 + $0x78] sm:$0xf] %v1772
      %2029 = vst [vmem:[%s145 + $0x7c] sm:$0xf] %v1773
      %2030 = vst [vmem:[%s145 + $0x80] sm:$0xf] %v1774
      %2031 = vst [vmem:[%s145 + $0x84] sm:$0xf] %v1775
      %2032 = vst [vmem:[%s145 + $0x88] sm:$0xf] %v1776
      %2033 = vst [vmem:[%s145 + $0x8c] sm:$0xf] %v1777
      %2034 = vst [vmem:[%s145 + $0x90] sm:$0xf] %v1778
      %2035 = vst [vmem:[%s145 + $0x94] sm:$0xf] %v1779
      %2036 = vst [vmem:[%s145 + $0x98] sm:$0xf] %v1780
      %2037 = vst [vmem:[%s145 + $0x9c] sm:$0xf] %v1781
      %2038 = vst [vmem:[%s145 + $0xa0] sm:$0xf] %v1782
      %2039 = vst [vmem:[%s145 + $0xa4] sm:$0xf] %v1783
      %2040 = vst [vmem:[%s145 + $0xa8] sm:$0xf] %v1784
      %2041 = vst [vmem:[%s145 + $0xac] sm:$0xf] %v1785
      %2042 = vst [vmem:[%s145 + $0xb0] sm:$0xf] %v1786
      %2043 = vst [vmem:[%s145 + $0xb4] sm:$0xf] %v1787
      %2044 = vst [vmem:[%s145 + $0xb8] sm:$0xf] %v1788
      %2045 = vst [vmem:[%s145 + $0xbc] sm:$0xf] %v1789
      %2046 = vst [vmem:[%s145 + $0xc0] sm:$0xf] %v1790
      %2047 = vst [vmem:[%s145 + $0xc4] sm:$0xf] %v1791
      %2048 = vst [vmem:[%s145 + $0xc8] sm:$0xf] %v1792
      %2049 = vst [vmem:[%s145 + $0xcc] sm:$0xf] %v1793
      %2050 = vst [vmem:[%s145 + $0xd0] sm:$0xf] %v1794
      %2051 = vst [vmem:[%s145 + $0xd4] sm:$0xf] %v1795
      %2052 = vst [vmem:[%s145 + $0xd8] sm:$0xf] %v1796
      %2053 = vst [vmem:[%s145 + $0xdc] sm:$0xf] %v1797
      %2054 = vst [vmem:[%s145 + $0xe0] sm:$0xf] %v1798
      %2055 = vst [vmem:[%s145 + $0xe4] sm:$0xf] %v1799
      %2056 = vst [vmem:[%s145 + $0xe8] sm:$0xf] %v1800
      %2057 = vst [vmem:[%s145 + $0xec] sm:$0xf] %v1801
      %2058 = vst [vmem:[%s145 + $0xf0] sm:$0xf] %v1802
      %2059 = vst [vmem:[%s145 + $0xf4] sm:$0xf] %v1803
      %2060 = vst [vmem:[%s145 + $0xf8] sm:$0xf] %v1804
      %2061 = vst [vmem:[%s145 + $0xfc] sm:$0xf] %v1805
      %2062 = vst [vmem:[%s145 + $0x100] sm:$0xf] %v1806
      %2063 = vst [vmem:[%s145 + $0x104] sm:$0xf] %v1807
      %2064 = vst [vmem:[%s145 + $0x108] sm:$0xf] %v1808
      %2065 = vst [vmem:[%s145 + $0x10c] sm:$0xf] %v1809
      %2066 = vst [vmem:[%s145 + $0x110] sm:$0xf] %v1810
      %2067 = vst [vmem:[%s145 + $0x114] sm:$0xf] %v1811
      %2068 = vst [vmem:[%s145 + $0x118] sm:$0xf] %v1812
      %2069 = vst [vmem:[%s145 + $0x11c] sm:$0xf] %v1813
      %2070 = vst [vmem:[%s145 + $0x120] sm:$0xf] %v1814
      %2071 = vst [vmem:[%s145 + $0x124] sm:$0xf] %v1815
      %2072 = vst [vmem:[%s145 + $0x128] sm:$0xf] %v1816
      %2073 = vst [vmem:[%s145 + $0x12c] sm:$0xf] %v1817
      %2074 = vst [vmem:[%s145 + $0x130] sm:$0xf] %v1818
      %2075 = vst [vmem:[%s145 + $0x134] sm:$0xf] %v1819
      %2076 = vst [vmem:[%s145 + $0x138] sm:$0xf] %v1820
      %2077 = vst [vmem:[%s145 + $0x13c] sm:$0xf] %v1821
      %2078 = vst [vmem:[%s145 + $0x140] sm:$0xf] %v1822
      %2079 = vst [vmem:[%s145 + $0x144] sm:$0xf] %v1823
      %2080 = vst [vmem:[%s145 + $0x148] sm:$0xf] %v1824
      %2081 = vst [vmem:[%s145 + $0x14c] sm:$0xf] %v1825
      %2082 = vst [vmem:[%s145 + $0x150] sm:$0xf] %v1826
      %2083 = vst [vmem:[%s145 + $0x154] sm:$0xf] %v1827
      %2084 = vst [vmem:[%s145 + $0x158] sm:$0xf] %v1828
      %2085 = vst [vmem:[%s145 + $0x15c] sm:$0xf] %v1829
      %2086 = vst [vmem:[%s145 + $0x160] sm:$0xf] %v1830
      %2087 = vst [vmem:[%s145 + $0x164] sm:$0xf] %v1831
      %2088 = vst [vmem:[%s145 + $0x168] sm:$0xf] %v1832
      %2089 = vst [vmem:[%s145 + $0x16c] sm:$0xf] %v1833
      %2090 = vst [vmem:[%s145 + $0x170] sm:$0xf] %v1834
      %2091 = vst [vmem:[%s145 + $0x174] sm:$0xf] %v1835
      %2092 = vst [vmem:[%s145 + $0x178] sm:$0xf] %v1836
      %2093 = vst [vmem:[%s145 + $0x17c] sm:$0xf] %v1837
      %2094 = vst [vmem:[%s145 + $0x180] sm:$0xf] %v1838
      %2095 = vst [vmem:[%s145 + $0x184] sm:$0xf] %v1839
      %2096 = vst [vmem:[%s145 + $0x188] sm:$0xf] %v1840
      %2097 = vst [vmem:[%s145 + $0x18c] sm:$0xf] %v1841
      %2098 = vst [vmem:[%s145 + $0x190] sm:$0xf] %v1842
      %2099 = vst [vmem:[%s145 + $0x194] sm:$0xf] %v1843
      %2100 = vst [vmem:[%s145 + $0x198] sm:$0xf] %v1844
      %2101 = vst [vmem:[%s145 + $0x19c] sm:$0xf] %v1845
      %2102 = vst [vmem:[%s145 + $0x1a0] sm:$0xf] %v1846
      %2103 = vst [vmem:[%s145 + $0x1a4] sm:$0xf] %v1847
      %2104 = vst [vmem:[%s145 + $0x1a8] sm:$0xf] %v1848
      %2105 = vst [vmem:[%s145 + $0x1ac] sm:$0xf] %v1849
      %2106 = vst [vmem:[%s145 + $0x1b0] sm:$0xf] %v1850
      %2107 = vst [vmem:[%s145 + $0x1b4] sm:$0xf] %v1851
      %2108 = vst [vmem:[%s145 + $0x1b8] sm:$0xf] %v1852
      %2109 = vst [vmem:[%s145 + $0x1bc] sm:$0xf] %v1853
      %2110 = vst [vmem:[%s145 + $0x1c0] sm:$0xf] %v1854
      %2111 = vst [vmem:[%s145 + $0x1c4] sm:$0xf] %v1855
      %2112 = vst [vmem:[%s145 + $0x1c8] sm:$0xf] %v1856
      %2113 = vst [vmem:[%s145 + $0x1cc] sm:$0xf] %v1857
      %2114 = vst [vmem:[%s145 + $0x1d0] sm:$0xf] %v1858
      %2115 = vst [vmem:[%s145 + $0x1d4] sm:$0xf] %v1859
      %2116 = vst [vmem:[%s145 + $0x1d8] sm:$0xf] %v1860
      %2117 = vst [vmem:[%s145 + $0x1dc] sm:$0xf] %v1861
      %2118 = vst [vmem:[%s145 + $0x1e0] sm:$0xf] %v1862
      %2119 = vst [vmem:[%s145 + $0x1e4] sm:$0xf] %v1863
      %2120 = vst [vmem:[%s145 + $0x1e8] sm:$0xf] %v1864
      %2121 = vst [vmem:[%s145 + $0x1ec] sm:$0xf] %v1865
      %2122 = vst [vmem:[%s145 + $0x1f0] sm:$0xf] %v1866
      %2123 = vst [vmem:[%s145 + $0x1f4] sm:$0xf] %v1867
      %2124 = vst [vmem:[%s145 + $0x1f8] sm:$0xf] %v1868
      %2125 = vst [vmem:[%s145 + $0x1fc] sm:$0xf] %v1869
      %s2126 = smul.u32 128, %s13
      %p2127 = scmp.lt.s32.totalorder %s2126, 255
      %s2128 = scalar_select %p2127, %s2126, 255
      %s2129 = smul.addr %s2128, 4
      %s2130 = scalar_lea.vmem %s2, %s2129
      // Predicated region
      $region29: #{generator_forward.17} parent=27 // pred_check
        %p2131 = pneg %p78
      $region30: #{generator_forward.17} parent=27 // pred_check_branch
        %2133 = sbr.rel (%p2131) target = $region32
      $region31: #{generator_forward.17} parent=27 // pred_region
        %s2134 = smul.u32 128, %s13
      $region32: #{generator_forward.17} parent=27 // pred_fallthru
        _
    $region28: #{generator_forward.17} parent=5 // pred_fallthru
      _
    %p2135 = scmp.le.s32.totalorder 2, %s8
    // Predicated region
    $region33: #{generator_forward.17} parent=5 // pred_check
      %p2136 = pneg %p2135
    $region34: #{generator_forward.17} parent=5 // pred_check_branch
      %2138 = sbr.rel (%p2136) target = $region36
    $region35: #{generator_forward.17} parent=5 // pred_region
      %s2139 = ssub.s32 %s8, 2
      // Predicated region
      $region37: #{generator_forward.17} parent=35 // pred_check
        %p2140 = pneg %p84
      $region38: #{generator_forward.17} parent=35 // pred_check_branch
        %2142 = sbr.rel (%p2140) target = $region40
      $region39: #{generator_forward.17} parent=35 // pred_region
        %s2143 = smul.u32 128, %s14
        %p2144 = scmp.lt.s32.totalorder %s2143, 255
        %s2145 = scalar_select %p2144, %s2143, 255
        %s2146 = smul.addr %s2145, 4
        %s2147 = scalar_lea.vmem %s2, %s2146
      $region40: #{generator_forward.17} parent=35 // pred_fallthru
        _
    $region36: #{generator_forward.17} parent=5 // pred_fallthru
      _
  $region6: #{generator_forward.17} parent=0 // loop_footer
    %s12 = sadd.s32 1, %s8
  $region7: #{generator_forward.17} parent=0 // loop_footer_branch
    %7 = sbr.rel target = $region3
  $region8: #{generator_forward.17} parent=0 // loop_exit
    _

</llo_original>
